<compile_context>
chip_gen: v7x
topology: tpu7x:2x2x1
jax: 0.10.0
libtpu: 0.0.40
codegen_flags: <defaults>
</compile_context>

<pallas_src>
import jax
import jax.numpy as jnp
from jax.experimental import pallas as pl
from jax.experimental.pallas import tpu as pltpu


def _round_up(v, m):
    return (v + m - 1) // m * m


def _tile_bytes(rows, cols, itemsize):
    """(8,128)-padded VMEM tile footprint in bytes."""
    return _round_up(rows, 8) * _round_up(cols, 128) * itemsize


# --------------------------------------------------------------------------
# Wrapper + kernel
# --------------------------------------------------------------------------
def attention_forward(x_nchw, wf, bf, wg, bg, wh, bh, wv, bv, gamma):
    """x_nchw: (B, C, H, W); conv weights are (out_ch, in_ch) matrices."""
    B, C, H, W = x_nchw.shape
    assert C % 8 == 0 and H % 2 == 0 and W % 2 == 0
    N, N4 = H * W, (H * W) // 4
    H2, W2 = H // 2, W // 2
    C8, C2 = C // 8, C // 2
    CG = C8 + C2                       # width of the fused (g|h) conv output
    assert N % 128 == 0 and W2 % 8 == 0, \
        "kernel assumes H*W % 128 == 0 and (W//2) % 8 == 0"

    # Query tile: multiple of 256 rows when possible (128 fallback); a large M
    # tile amortizes the K=C8-only MXU passes of the logits matmul.
    if N % 512 == 0 and N > 512:
        TQ = 512
    elif N % 256 == 0:
        TQ = 256
    else:
        TQ = 128
    NQ = N // TQ

    # Channels-first, flat spatial dim: free reshape, no transpose.
    x_cn = x_nchw.reshape(B, C, N).astype(jnp.float32)

    # 1x1-conv weights as (C_in, C_out) for channels-last matmuls; bf16 operands.
    w_f = wf.T.astype(jnp.bfloat16)                                      # (C, C8)
    b_f = bf.reshape(1, C8).astype(jnp.float32)
    w_gh = jnp.concatenate([wg.T, wh.T], axis=1).astype(jnp.bfloat16)    # (C, CG)
    b_gh = jnp.concatenate([bg, bh]).reshape(1, CG).astype(jnp.float32)
    w_v = wv.T.astype(jnp.bfloat16)                                      # (C2, C)
    b_v = bv.reshape(1, C).astype(jnp.float32)
    gamma_s = gamma.reshape(1).astype(jnp.float32)                       # SMEM scalar

    def kernel(x_ref, wf_ref, bf_ref, wgh_ref, bgh_ref, wv_ref, bv_ref,
               gamma_ref, o_ref, g_scr, h_scr):
        q = pl.program_id(1)

        # ---- once per batch element: pooled g / h -> persistent bf16 scratch
        @pl.when(q == 0)
        def _():
            xt_full = jnp.transpose(x_ref[...])                        # (N, C) f32
            gh = jnp.dot(xt_full.astype(jnp.bfloat16), wgh_ref[...],
                         preferred_element_type=jnp.float32) + bgh_ref[...]  # (N, CG)
            # 2x2 max pool; rows are spatial (h, w) row-major, so adjacent rows
            # form the even/odd-w pair.  No scratch round-trip.
            wpool = jnp.max(gh.reshape(N // 2, 2, CG), axis=1)          # (H*W2, CG)
            pooled = jnp.max(wpool.reshape(H2, 2, W2, CG), axis=1).reshape(N4, CG)
            g_scr[...] = jnp.transpose(pooled[:, :C8]).astype(jnp.bfloat16)  # (C8, N4)
            h_scr[...] = pooled[:, C8:].astype(jnp.bfloat16)                 # (N4, C2)

        # ---- per query tile --------------------------------------------------
        qs = pl.multiple_of(q * TQ, TQ)
        x_q = x_ref[:, pl.ds(qs, TQ)]                                   # (C, TQ) f32
        xt_q = jnp.transpose(x_q).astype(jnp.bfloat16)                  # (TQ, C) bf16
        f = (jnp.dot(xt_q, wf_ref[...], preferred_element_type=jnp.float32)
             + bf_ref[...]).astype(jnp.bfloat16)                        # (TQ, C8) bf16

        # bf16 x bf16 -> f32 logits; N4 on the lane axis.
        logits = jnp.dot(f, g_scr[...],
                         preferred_element_type=jnp.float32)            # (TQ, N4) f32

        # Max-stabilized softmax; denominator reciprocal runs on the EUP.
        m = jnp.max(logits, axis=-1, keepdims=True)
        p = jnp.exp(logits - m)
        attn = (p * pl.reciprocal(jnp.sum(p, axis=-1, keepdims=True),
                                  approx=True)).astype(jnp.bfloat16)    # (TQ, N4)

        attn_h = jnp.dot(attn, h_scr[...],
                         preferred_element_type=jnp.float32)            # (TQ, C2) f32
        v = jnp.dot(attn_h.astype(jnp.bfloat16), wv_ref[...],
                    preferred_element_type=jnp.float32) + bv_ref[...]   # (TQ, C) f32

        # Residual in f32; channels-first store is lane-dense over TQ.
        o_ref[...] = gamma_ref[0] * jnp.transpose(v) + x_q              # (C, TQ)

    # Explicit scoped-VMEM budget (v7x default is 32 MiB of 64 MiB physical).
    vmem_est = (
        2 * _tile_bytes(C, N, 4)             # x block (double-buffered)
        + 2 * _tile_bytes(C, TQ, 4)          # out block (double-buffered)
        + 2 * (_tile_bytes(C, C8, 2) + _tile_bytes(1, C8, 4)
               + _tile_bytes(C, CG, 2) + _tile_bytes(1, CG, 4)
               + _tile_bytes(C2, C, 2) + _tile_bytes(1, C, 4))
        + _tile_bytes(C8, N4, 2) + _tile_bytes(N4, C2, 2)               # g/h scratch
        + _tile_bytes(N, CG, 4) + _tile_bytes(N, C, 4)                  # q==0 temps
        + 4 * _tile_bytes(TQ, N4, 4) + 3 * _tile_bytes(TQ, C, 4)        # logits/attn/v
    )
    vmem_limit = int(min(max(2 * vmem_est, 32 << 20), 64 << 20))

    out_cn = pl.pallas_call(
        kernel,
        out_shape=jax.ShapeDtypeStruct((B, C, N), jnp.float32),
        grid=(B, NQ),
        in_specs=[
            pl.BlockSpec((pl.Squeezed(), C, N), lambda b, q: (b, 0, 0)),   # x
            pl.BlockSpec((C, C8), lambda b, q: (0, 0)),                    # Wf
            pl.BlockSpec((1, C8), lambda b, q: (0, 0)),                    # bf
            pl.BlockSpec((C, CG), lambda b, q: (0, 0)),                    # Wg|Wh
            pl.BlockSpec((1, CG), lambda b, q: (0, 0)),                    # bg|bh
            pl.BlockSpec((C2, C), lambda b, q: (0, 0)),                    # Wv
            pl.BlockSpec((1, C), lambda b, q: (0, 0)),                     # bv
            pl.BlockSpec(memory_space=pltpu.MemorySpace.SMEM),             # gamma
        ],
        out_specs=pl.BlockSpec((pl.Squeezed(), C, TQ), lambda b, q: (b, 0, q)),
        scratch_shapes=[pltpu.VMEM((C8, N4), jnp.bfloat16),
                        pltpu.VMEM((N4, C2), jnp.bfloat16)],
        compiler_params=pltpu.CompilerParams(
            dimension_semantics=("parallel", "arbitrary"),
            vmem_limit_bytes=vmem_limit),
    )(x_cn, w_f, b_f, w_gh, b_gh, w_v, b_v, gamma_s)

    return out_cn.reshape(B, C, H, W)


# --------------------------------------------------------------------------
# Parameter setup helpers
# --------------------------------------------------------------------------
def spectral_normalize(w, iters=50):
    # torch.nn.utils.spectral_norm divides the weight by its top singular value.
    u = jnp.ones((w.shape[0],), jnp.float32)
    v = jnp.ones((w.shape[1],), jnp.float32)
    for _ in range(iters):
        v = w.T @ u
        v = v / (jnp.linalg.norm(v) + 1e-12)
        u = w @ v
        u = u / (jnp.linalg.norm(u) + 1e-12)
    sigma = u @ (w @ v)
    return w / sigma


def _reference(x, wf, bf, wg, bg, wh, bh, wv, bv, gamma):
    """Pure-JAX (f32) reference reproducing the PyTorch forward (NCHW)."""
    B, C, H, W = x.shape

    def conv1x1(t, w, b):
        return jnp.einsum('oc,bchw->bohw', w, t) + b[None, :, None, None]

    def mp(t):
        b_, c_, h_, w_ = t.shape
        return jnp.max(t.reshape(b_, c_, h_ // 2, 2, w_ // 2, 2), axis=(3, 5))

    f = conv1x1(x, wf, bf).reshape(B, C // 8, H * W)
    g = mp(conv1x1(x, wg, bg)).reshape(B, C // 8, H * W // 4)
    attn = jax.nn.softmax(jnp.einsum('bcn,bcm->bnm', f, g), axis=-1)
    h = mp(conv1x1(x, wh, bh)).reshape(B, C // 2, H * W // 4)
    attn_g = jnp.einsum('bcm,bnm->bcn', h, attn).reshape(B, C // 2, H, W)
    v = conv1x1(attn_g, wv, bv)
    return gamma.reshape(1, 1, 1, 1) * v + x


# --------------------------------------------------------------------------
# Main
# --------------------------------------------------------------------------
if __name__ == "__main__":
    B, C, H, W = 2, 32, 16, 16            # in_ch = 32 -> mid_ch1 = 4, mid_ch2 = 16
    C8, C2 = C // 8, C // 2

    key = jax.random.PRNGKey(0)
    kx, k1, k2, k3, k4, kb1, kb2, kb3, kb4 = jax.random.split(key, 9)
    x = jax.random.normal(kx, (B, C, H, W), jnp.float32)

    def conv_init(kw, kb, out_ch, in_ch):
        bound = 1.0 / (in_ch ** 0.5)
        w = jax.random.uniform(kw, (out_ch, in_ch), jnp.float32, -bound, bound)
        b = jax.random.uniform(kb, (out_ch,), jnp.float32, -bound, bound)
        return w, b

    wf, bf = conv_init(k1, kb1, C8, C)    # nn.Conv2d(C, C//8, 1)
    wg, bg = conv_init(k2, kb2, C8, C)    # nn.Conv2d(C, C//8, 1)
    wh, bh = conv_init(k3, kb3, C2, C)    # nn.Conv2d(C, C//2, 1)
    wv, bv = conv_init(k4, kb4, C, C2)    # nn.Conv2d(C//2, C, 1)
    wf, wg, wh, wv = (spectral_normalize(w) for w in (wf, wg, wh, wv))
    gamma = jnp.zeros((1,), jnp.float32)  # nn.Parameter(torch.zeros(1))

    # module-faithful forward (gamma == 0  =>  output == input exactly)
    out = jax.block_until_ready(
        attention_forward(x, wf, bf, wg, bg, wh, bh, wv, bv, gamma))
    assert out.shape == x.shape and out.dtype == x.dtype
    assert jnp.allclose(out, x, atol=1e-6, rtol=0.0)

    # numerical check against the pure-f32 reference with nonzero gamma so the
    # attention branch contributes (tolerance accounts for bf16 MXU operands
    # in every matmul, including the logits matmul, and the approx reciprocal).
    gamma_chk = jnp.full((1,), 0.5, jnp.float32)
    out_chk = jax.block_until_ready(
        attention_forward(x, wf, bf, wg, bg, wh, bh, wv, bv, gamma_chk))
    ref_chk = _reference(x, wf, bf, wg, bg, wh, bh, wv, bv, gamma_chk)
    assert jnp.allclose(out_chk, ref_chk, atol=3e-2, rtol=3e-2), (
        float(jnp.max(jnp.abs(out_chk - ref_chk))))

    print("KERNEL_OK")
</pallas_src>

<mosaic_0001>
module attributes {stable_mosaic.version = 11 : i64} {
  func.func @kernel(%arg0: i32, %arg1: i32, %arg2: memref<1x32x256xf32, #tpu.memory_space<vmem>>, %arg3: memref<32x4xbf16, #tpu.memory_space<vmem>>, %arg4: memref<1x4xf32, #tpu.memory_space<vmem>>, %arg5: memref<32x20xbf16, #tpu.memory_space<vmem>>, %arg6: memref<1x20xf32, #tpu.memory_space<vmem>>, %arg7: memref<16x32xbf16, #tpu.memory_space<vmem>>, %arg8: memref<1x32xf32, #tpu.memory_space<vmem>>, %arg9: memref<1xf32, #tpu.memory_space<smem>>, %arg10: memref<1x32x256xf32, #tpu.memory_space<vmem>>, %arg11: memref<4x64xbf16, #tpu.memory_space<vmem>>, %arg12: memref<64x16xbf16, #tpu.memory_space<vmem>>) attributes {dimension_semantics = [#tpu.dimension_semantics<parallel>, #tpu.dimension_semantics<arbitrary>], iteration_bounds = array<i64: 2, 1>, scalar_prefetch = 0 : i64, scratch_operands = 2 : i64, tpu.core_type = #tpu.core_type<tc>, window_params = [{transform_indices = @transform_0, window_bounds = array<i64: 1, 32, 256>}, {pipeline_mode = #tpu.pipeline_mode<synchronous>, transform_indices = @transform_1, window_bounds = array<i64: 32, 4>}, {pipeline_mode = #tpu.pipeline_mode<synchronous>, transform_indices = @transform_2, window_bounds = array<i64: 1, 4>}, {pipeline_mode = #tpu.pipeline_mode<synchronous>, transform_indices = @transform_3, window_bounds = array<i64: 32, 20>}, {pipeline_mode = #tpu.pipeline_mode<synchronous>, transform_indices = @transform_4, window_bounds = array<i64: 1, 20>}, {pipeline_mode = #tpu.pipeline_mode<synchronous>, transform_indices = @transform_5, window_bounds = array<i64: 16, 32>}, {pipeline_mode = #tpu.pipeline_mode<synchronous>, transform_indices = @transform_6, window_bounds = array<i64: 1, 32>}, {transform_indices = @transform_7, window_bounds = array<i64: 1>}, {transform_indices = @transform_8, window_bounds = array<i64: 1, 32, 256>}]} {
    %c0_i32 = arith.constant 0 : i32
    %0 = arith.cmpi eq, %arg1, %c0_i32 : i32
    %1 = arith.extui %0 : i1 to i32
    %c0_i32_0 = arith.constant 0 : i32
    %2 = arith.cmpi ne, %1, %c0_i32_0 : i32
    scf.if %2 {
      %c0_23 = arith.constant 0 : index
      %c0_24 = arith.constant 0 : index
      %c0_25 = arith.constant 0 : index
      %45 = vector.load %arg2[%c0_23, %c0_24, %c0_25] : memref<1x32x256xf32, #tpu.memory_space<vmem>>, vector<1x32x256xf32>
      %46 = vector.shape_cast %45 : vector<1x32x256xf32> to vector<32x256xf32>
      %47 = tpu.transpose %46, [1, 0] : vector<32x256xf32> -> vector<256x32xf32>
      %48 = arith.truncf %47 : vector<256x32xf32> to vector<256x32xbf16>
      %c0_26 = arith.constant 0 : index
      %c0_27 = arith.constant 0 : index
      %49 = vector.load %arg5[%c0_26, %c0_27] : memref<32x20xbf16, #tpu.memory_space<vmem>>, vector<32x20xbf16>
      %cst_28 = arith.constant dense<0.000000e+00> : vector<256x20xf32>
      %50 = tpu.matmul %48, %49, %cst_28 {dimension_numbers = #tpu.dot_dimension_numbers<[1], [0], [0], [1], [0, 0, 1, 1], [], []>} : vector<256x32xbf16>, vector<32x20xbf16>, vector<256x20xf32> -> vector<256x20xf32>
      %c0_29 = arith.constant 0 : index
      %c0_30 = arith.constant 0 : index
      %51 = vector.load %arg6[%c0_29, %c0_30] : memref<1x20xf32, #tpu.memory_space<vmem>>, vector<1x20xf32>
      %52 = vector.broadcast %51 : vector<1x20xf32> to vector<256x20xf32>
      %53 = arith.addf %50, %52 : vector<256x20xf32>
      %54 = vector.shape_cast %53 : vector<256x20xf32> to vector<128x2x20xf32>
      %cst_31 = arith.constant dense<0xFF800000> : vector<128x20xf32>
      %55 = vector.multi_reduction <maximumf>, %54, %cst_31 [1] : vector<128x2x20xf32> to vector<128x20xf32>
      %56 = vector.shape_cast %55 : vector<128x20xf32> to vector<8x2x8x20xf32>
      %cst_32 = arith.constant dense<0xFF800000> : vector<8x8x20xf32>
      %57 = vector.multi_reduction <maximumf>, %56, %cst_32 [1] : vector<8x2x8x20xf32> to vector<8x8x20xf32>
      %58 = vector.shape_cast %57 : vector<8x8x20xf32> to vector<64x20xf32>
      %59 = vector.extract_strided_slice %58 {offsets = [0, 0], sizes = [64, 4], strides = [1, 1]} : vector<64x20xf32> to vector<64x4xf32>
      %60 = tpu.transpose %59, [1, 0] : vector<64x4xf32> -> vector<4x64xf32>
      %61 = arith.truncf %60 : vector<4x64xf32> to vector<4x64xbf16>
      %c0_33 = arith.constant 0 : index
      %c0_34 = arith.constant 0 : index
      %62 = vector.load %arg11[%c0_33, %c0_34] : memref<4x64xbf16, #tpu.memory_space<vmem>>, vector<4x64xbf16>
      tpu.vector_store %arg11[%c0_33, %c0_34], %61 {strides = array<i32>} : memref<4x64xbf16, #tpu.memory_space<vmem>>, vector<4x64xbf16>,
      %63 = vector.extract_strided_slice %58 {offsets = [0, 4], sizes = [64, 16], strides = [1, 1]} : vector<64x20xf32> to vector<64x16xf32>
      %64 = arith.truncf %63 : vector<64x16xf32> to vector<64x16xbf16>
      %c0_35 = arith.constant 0 : index
      %c0_36 = arith.constant 0 : index
      %65 = vector.load %arg12[%c0_35, %c0_36] : memref<64x16xbf16, #tpu.memory_space<vmem>>, vector<64x16xbf16>
      tpu.vector_store %arg12[%c0_35, %c0_36], %64 {strides = array<i32>} : memref<64x16xbf16, #tpu.memory_space<vmem>>, vector<64x16xbf16>,
    } else {
    }
    %c256_i32 = arith.constant 256 : i32
    %3 = arith.muli %arg1, %c256_i32 : i32
    %4 = tpu.assume_multiple %3, 256 : i32
    %c0 = arith.constant 0 : index
    %c0_1 = arith.constant 0 : index
    %5 = arith.index_cast %4 : i32 to index
    %6 = vector.load %arg2[%c0, %c0_1, %5] : memref<1x32x256xf32, #tpu.memory_space<vmem>>, vector<1x32x256xf32>
    %7 = vector.shape_cast %6 : vector<1x32x256xf32> to vector<32x256xf32>
    %8 = tpu.transpose %7, [1, 0] : vector<32x256xf32> -> vector<256x32xf32>
    %9 = arith.truncf %8 : vector<256x32xf32> to vector<256x32xbf16>
    %c0_2 = arith.constant 0 : index
    %c0_3 = arith.constant 0 : index
    %10 = vector.load %arg3[%c0_2, %c0_3] : memref<32x4xbf16, #tpu.memory_space<vmem>>, vector<32x4xbf16>
    %cst = arith.constant dense<0.000000e+00> : vector<256x4xf32>
    %11 = tpu.matmul %9, %10, %cst {dimension_numbers = #tpu.dot_dimension_numbers<[1], [0], [0], [1], [0, 0, 1, 1], [], []>} : vector<256x32xbf16>, vector<32x4xbf16>, vector<256x4xf32> -> vector<256x4xf32>
    %c0_4 = arith.constant 0 : index
    %c0_5 = arith.constant 0 : index
    %12 = vector.load %arg4[%c0_4, %c0_5] : memref<1x4xf32, #tpu.memory_space<vmem>>, vector<1x4xf32>
    %13 = vector.broadcast %12 : vector<1x4xf32> to vector<256x4xf32>
    %14 = arith.addf %11, %13 : vector<256x4xf32>
    %15 = arith.truncf %14 : vector<256x4xf32> to vector<256x4xbf16>
    %c0_6 = arith.constant 0 : index
    %c0_7 = arith.constant 0 : index
    %16 = vector.load %arg11[%c0_6, %c0_7] : memref<4x64xbf16, #tpu.memory_space<vmem>>, vector<4x64xbf16>
    %cst_8 = arith.constant dense<0.000000e+00> : vector<256x64xf32>
    %17 = tpu.matmul %15, %16, %cst_8 {dimension_numbers = #tpu.dot_dimension_numbers<[1], [0], [0], [1], [0, 0, 1, 1], [], []>} : vector<256x4xbf16>, vector<4x64xbf16>, vector<256x64xf32> -> vector<256x64xf32>
    %cst_9 = arith.constant dense<0xFF800000> : vector<256xf32>
    %18 = vector.multi_reduction <maximumf>, %17, %cst_9 [1] : vector<256x64xf32> to vector<256xf32>
    %19 = vector.shape_cast %18 : vector<256xf32> to vector<256x1xf32>
    %20 = vector.broadcast %19 : vector<256x1xf32> to vector<256x64xf32>
    %21 = arith.subf %17, %20 : vector<256x64xf32>
    %22 = math.exp %21 : vector<256x64xf32>
    %cst_10 = arith.constant dense<0.000000e+00> : vector<256xf32>
    %23 = vector.multi_reduction <add>, %22, %cst_10 [1] : vector<256x64xf32> to vector<256xf32>
    %24 = vector.shape_cast %23 : vector<256xf32> to vector<256x1xf32>
    %25 = tpu.reciprocal %24 {approx = true} : vector<256x1xf32> -> vector<256x1xf32>
    %26 = vector.broadcast %25 : vector<256x1xf32> to vector<256x64xf32>
    %27 = arith.mulf %22, %26 : vector<256x64xf32>
    %28 = arith.truncf %27 : vector<256x64xf32> to vector<256x64xbf16>
    %c0_11 = arith.constant 0 : index
    %c0_12 = arith.constant 0 : index
    %29 = vector.load %arg12[%c0_11, %c0_12] : memref<64x16xbf16, #tpu.memory_space<vmem>>, vector<64x16xbf16>
    %cst_13 = arith.constant dense<0.000000e+00> : vector<256x16xf32>
    %30 = tpu.matmul %28, %29, %cst_13 {dimension_numbers = #tpu.dot_dimension_numbers<[1], [0], [0], [1], [0, 0, 1, 1], [], []>} : vector<256x64xbf16>, vector<64x16xbf16>, vector<256x16xf32> -> vector<256x16xf32>
    %31 = arith.truncf %30 : vector<256x16xf32> to vector<256x16xbf16>
    %c0_14 = arith.constant 0 : index
    %c0_15 = arith.constant 0 : index
    %32 = vector.load %arg7[%c0_14, %c0_15] : memref<16x32xbf16, #tpu.memory_space<vmem>>, vector<16x32xbf16>
    %cst_16 = arith.constant dense<0.000000e+00> : vector<256x32xf32>
    %33 = tpu.matmul %31, %32, %cst_16 {dimension_numbers = #tpu.dot_dimension_numbers<[1], [0], [0], [1], [0, 0, 1, 1], [], []>} : vector<256x16xbf16>, vector<16x32xbf16>, vector<256x32xf32> -> vector<256x32xf32>
    %c0_17 = arith.constant 0 : index
    %c0_18 = arith.constant 0 : index
    %34 = vector.load %arg8[%c0_17, %c0_18] : memref<1x32xf32, #tpu.memory_space<vmem>>, vector<1x32xf32>
    %35 = vector.broadcast %34 : vector<1x32xf32> to vector<256x32xf32>
    %36 = arith.addf %33, %35 : vector<256x32xf32>
    %c0_19 = arith.constant 0 : index
    %37 = memref.load %arg9[%c0_19] : memref<1xf32, #tpu.memory_space<smem>>
    %38 = tpu.transpose %36, [1, 0] : vector<256x32xf32> -> vector<32x256xf32>
    %39 = vector.broadcast %37 : f32 to vector<32x256xf32>
    %40 = arith.mulf %39, %38 : vector<32x256xf32>
    %41 = arith.addf %40, %7 : vector<32x256xf32>
    %c0_20 = arith.constant 0 : index
    %c0_21 = arith.constant 0 : index
    %c0_22 = arith.constant 0 : index
    %42 = vector.load %arg10[%c0_20, %c0_21, %c0_22] : memref<1x32x256xf32, #tpu.memory_space<vmem>>, vector<1x32x256xf32>
    %43 = vector.shape_cast %42 : vector<1x32x256xf32> to vector<32x256xf32>
    %44 = vector.shape_cast %41 : vector<32x256xf32> to vector<1x32x256xf32>
    tpu.vector_store %arg10[%c0_20, %c0_21, %c0_22], %44 {strides = array<i32>} : memref<1x32x256xf32, #tpu.memory_space<vmem>>, vector<1x32x256xf32>,
    return
  }
  func.func @transform_0(%arg0: i32, %arg1: i32) -> (i32, i32, i32) {
    %c0_i32 = arith.constant 0 : i32
    %c0_i32_0 = arith.constant 0 : i32
    %c0_i32_1 = arith.constant 0 : i32
    return %arg0, %c0_i32, %c0_i32_0 : i32, i32, i32
  }
  func.func @transform_1(%arg0: i32, %arg1: i32) -> (i32, i32) {
    %c0_i32 = arith.constant 0 : i32
    %c0_i32_0 = arith.constant 0 : i32
    %c0_i32_1 = arith.constant 0 : i32
    return %c0_i32, %c0_i32_0 : i32, i32
  }
  func.func @transform_2(%arg0: i32, %arg1: i32) -> (i32, i32) {
    %c0_i32 = arith.constant 0 : i32
    %c0_i32_0 = arith.constant 0 : i32
    %c0_i32_1 = arith.constant 0 : i32
    return %c0_i32, %c0_i32_0 : i32, i32
  }
  func.func @transform_3(%arg0: i32, %arg1: i32) -> (i32, i32) {
    %c0_i32 = arith.constant 0 : i32
    %c0_i32_0 = arith.constant 0 : i32
    %c0_i32_1 = arith.constant 0 : i32
    return %c0_i32, %c0_i32_0 : i32, i32
  }
  func.func @transform_4(%arg0: i32, %arg1: i32) -> (i32, i32) {
    %c0_i32 = arith.constant 0 : i32
    %c0_i32_0 = arith.constant 0 : i32
    %c0_i32_1 = arith.constant 0 : i32
    return %c0_i32, %c0_i32_0 : i32, i32
  }
  func.func @transform_5(%arg0: i32, %arg1: i32) -> (i32, i32) {
    %c0_i32 = arith.constant 0 : i32
    %c0_i32_0 = arith.constant 0 : i32
    %c0_i32_1 = arith.constant 0 : i32
    return %c0_i32, %c0_i32_0 : i32, i32
  }
  func.func @transform_6(%arg0: i32, %arg1: i32) -> (i32, i32) {
    %c0_i32 = arith.constant 0 : i32
    %c0_i32_0 = arith.constant 0 : i32
    %c0_i32_1 = arith.constant 0 : i32
    return %c0_i32, %c0_i32_0 : i32, i32
  }
  func.func @transform_7(%arg0: i32, %arg1: i32) -> i32 {
    %c0_i32 = arith.constant 0 : i32
    %c0_i32_0 = arith.constant 0 : i32
    return %c0_i32 : i32
  }
  func.func @transform_8(%arg0: i32, %arg1: i32) -> (i32, i32, i32) {
    %c0_i32 = arith.constant 0 : i32
    %c0_i32_0 = arith.constant 0 : i32
    return %arg0, %c0_i32, %arg1 : i32, i32, i32
  }
}

</mosaic_0001>

<llo_original>
// kernel: tpu_custom_call.1
$region0: #{tpu_custom_call.1}
  #allocation0 [shape = 'u32[]', space=smem, size = 0x4, offset = 0x4, fixed_abs, tag = 'smem constant byte address 0x4 - core index']
  #allocation1 [shape = 'u32[144,128]{1,0:T(1,128)}', space=vmem, size = 0x12000, scoped, tag = 'internal scratch']
  #allocation2 [shape = 'bf16[4,64]{1,0:T(4,128)(2,1)}', space=vmem, size = 0x400, scoped, tag = 'scratch operand']
  #allocation3 [shape = 'bf16[64,16]{1,0:T(16,128)(2,1)}', space=vmem, size = 0x4000, scoped, tag = 'scratch operand']
  #allocation4 [shape = 'f32[1]{0:T(128)S(6)}', space=smem, size = 0x200, scoped, tag = 'scoped memory for tpu_custom_call.1']
  %s0 = inlined_call_operand.hbm [shape: f32[2,32,256], index: 0, kind: input, shape index: {}]
  %s1 = inlined_call_operand.vmem [shape: bf16[32,4], index: 1, kind: input, shape index: {}]
  %s2 = inlined_call_operand.vmem [shape: f32[1,4], index: 2, kind: input, shape index: {}]
  %s3 = inlined_call_operand.vmem [shape: bf16[32,20], index: 3, kind: input, shape index: {}]
  %s4 = inlined_call_operand.vmem [shape: f32[1,20], index: 4, kind: input, shape index: {}]
  %s5 = inlined_call_operand.vmem [shape: bf16[16,32], index: 5, kind: input, shape index: {}]
  %s6 = inlined_call_operand.vmem [shape: f32[1,32], index: 6, kind: input, shape index: {}]
  %s7 = inlined_call_operand.<no memory space> [shape: f32[1], index: 7, kind: input, shape index: {}]
  %s8 = inlined_call_operand.hbm [shape: f32[2,32,256], index: 8, kind: output, shape index: {}]
  %s9 = sld [smem:[#allocation0]]
  $region73: #{tpu_custom_call.1} parent=0
    _
  %s11 = ssub.s32 1, %s9
  %s12 = scalar_select 0, %s11, %s9
  %13 = sst [smem:[#allocation4]] %s7
  $region1: #{tpu_custom_call.1} parent=0
    #allocation5 [shape = 'u8[65536]{0}', space=vmem, size = 0x10000, scoped, tag = 'input window, operand 0']
    #allocation6 [shape = 's32[2]{0}', space=sflag, size = 0x8, scoped, tag = 'scoped memory for tpu_custom_call.1']
    #allocation7 [shape = 's32[2]{0}', space=sflag, size = 0x8, scoped, tag = 'scoped memory for tpu_custom_call.1']
    #allocation8 [shape = 'u8[65536]{0}', space=vmem, size = 0x10000, scoped, tag = 'output window, operand 0']
    %14 = vsyncpa [#allocation6], 0
    %s15 = scalar_lea.sflag [#allocation6], 1
    %16 = vsyncpa %s15, 0
    %17 = vsyncpa [#allocation7], 0
    %s18 = scalar_lea.sflag [#allocation7], 1
    %19 = vsyncpa %s18, 0
    loop: start=0, step=1, limit=4
    $region2: #{tpu_custom_call.1} parent=1 // loop_pre_header
      _
    $region3: #{tpu_custom_call.1} parent=1 // loop_header
      %s21 = sphi 0, %s25
      %p22 = scmp.ge.s32.totalorder %s21, 4
      %s28 = sphi 0, %s40
      %s29 = sphi 0, %s36
      %s30 = sphi 0, %s28
      %s31 = sphi 0, %s29
      %s32 = sphi 0, %s30
      %s33 = sphi 0, %s31
      %s43 = sphi 0, %s45
      %s46 = sphi 0, %s43
      %s47 = sphi 0, %s46
      %s63 = sphi 0, %s47
      %s67 = sphi 0, %s67
      %s69 = sphi 0, %s67
      %s70 = sphi 0, %s69
      %s84 = sphi 0, %s70
      %s88 = sphi 0, %s88
      %s90 = sphi 0, %s88
      %s91 = sphi 0, %s90
      %s105 = sphi 0, %s91
      %s109 = sphi 0, %s109
      %s111 = sphi 0, %s109
      %s112 = sphi 0, %s111
      %s126 = sphi 0, %s112
      %s130 = sphi 0, %s130
      %s132 = sphi 0, %s130
      %s133 = sphi 0, %s132
      %s147 = sphi 0, %s133
      %s151 = sphi 0, %s151
      %s153 = sphi 0, %s151
      %s154 = sphi 0, %s153
      %s168 = sphi 0, %s154
      %s172 = sphi 0, %s172
      %s174 = sphi 0, %s172
      %s175 = sphi 0, %s174
      %s189 = sphi 0, %s175
      %s193 = sphi 0, %s193
      %s195 = sphi 0, %s193
      %s196 = sphi 0, %s195
      %s210 = sphi 0, %s196
      %s218 = sphi 0, %s220
      %s221 = sphi 0, %s218
      %s222 = sphi 0, %s221
      %s238 = sphi 0, %s222
    $region4: #{tpu_custom_call.1} parent=1 // loop_header_branch
      %24 = sbr.rel (%p22) target = $region8
    $region5: #{tpu_custom_call.1} parent=1 // loop_body
      %s26 = ssub.s32 %s21, 1
      %s27 = ssub.s32 %s21, 2
      %s34 = sadd.s32 1, %s29
      %p35 = scmp.ge.s32.totalorder %s34, 1
      %s36 = scalar_select %p35, 0, %s34
      %s37 = sadd.s32 1, %s28
      %s38 = scalar_select %p35, %s37, %s28
      %p39 = scmp.ge.s32.totalorder %s38, 2
      %s40 = scalar_select %p39, 0, %s38
      %s41 = ssub.s32 %s28, %s40
      %p42 = scmp.eq.s32.totalorder %s41, 0
      %s44 = sadd.s32 %s43, 1
      %s45 = scalar_select %p42, %s43, %s44
      %p48 = pneg %p42
      %p49 = scmp.eq.s32.totalorder %s21, 1
      %p50 = por %p48, %p49
      %p51 = scmp.ne.s32.totalorder %s43, %s46
      %p52 = scmp.eq.s32.totalorder %s21, 0
      %p53 = por %p51, %p52
      %p54 = scmp.ne.s32.totalorder %s43, %s46
      %p55 = scmp.eq.s32.totalorder %s26, 1
      %p56 = por %p54, %p55
      %p57 = scmp.ne.s32.totalorder %s46, %s47
      %p58 = scmp.eq.s32.totalorder %s26, 0
      %p59 = por %p57, %p58
      %p60 = scmp.ne.s32.totalorder %s46, %s47
      %p61 = scmp.eq.s32.totalorder %s27, 1
      %p62 = por %p60, %p61
      %p64 = scmp.ne.s32.totalorder %s47, %s63
      %p65 = scmp.eq.s32.totalorder %s27, 0
      %p66 = por %p64, %p65
      %s68 = sadd.s32 %s67, 1
      %p71 = scmp.eq.s32.totalorder %s21, 1
      %p72 = scmp.ne.s32.totalorder %s67, %s69
      %p73 = scmp.eq.s32.totalorder %s21, 0
      %p74 = por %p72, %p73
      %p75 = scmp.ne.s32.totalorder %s67, %s69
      %p76 = scmp.eq.s32.totalorder %s26, 1
      %p77 = por %p75, %p76
      %p78 = scmp.ne.s32.totalorder %s69, %s70
      %p79 = scmp.eq.s32.totalorder %s26, 0
      %p80 = por %p78, %p79
      %p81 = scmp.ne.s32.totalorder %s69, %s70
      %p82 = scmp.eq.s32.totalorder %s27, 1
      %p83 = por %p81, %p82
      %p85 = scmp.ne.s32.totalorder %s70, %s84
      %p86 = scmp.eq.s32.totalorder %s27, 0
      %p87 = por %p85, %p86
      %s89 = sadd.s32 %s88, 1
      %p92 = scmp.eq.s32.totalorder %s21, 1
      %p93 = scmp.ne.s32.totalorder %s88, %s90
      %p94 = scmp.eq.s32.totalorder %s21, 0
      %p95 = por %p93, %p94
      %p96 = scmp.ne.s32.totalorder %s88, %s90
      %p97 = scmp.eq.s32.totalorder %s26, 1
      %p98 = por %p96, %p97
      %p99 = scmp.ne.s32.totalorder %s90, %s91
      %p100 = scmp.eq.s32.totalorder %s26, 0
      %p101 = por %p99, %p100
      %p102 = scmp.ne.s32.totalorder %s90, %s91
      %p103 = scmp.eq.s32.totalorder %s27, 1
      %p104 = por %p102, %p103
      %p106 = scmp.ne.s32.totalorder %s91, %s105
      %p107 = scmp.eq.s32.totalorder %s27, 0
      %p108 = por %p106, %p107
      %s110 = sadd.s32 %s109, 1
      %p113 = scmp.eq.s32.totalorder %s21, 1
      %p114 = scmp.ne.s32.totalorder %s109, %s111
      %p115 = scmp.eq.s32.totalorder %s21, 0
      %p116 = por %p114, %p115
      %p117 = scmp.ne.s32.totalorder %s109, %s111
      %p118 = scmp.eq.s32.totalorder %s26, 1
      %p119 = por %p117, %p118
      %p120 = scmp.ne.s32.totalorder %s111, %s112
      %p121 = scmp.eq.s32.totalorder %s26, 0
      %p122 = por %p120, %p121
      %p123 = scmp.ne.s32.totalorder %s111, %s112
      %p124 = scmp.eq.s32.totalorder %s27, 1
      %p125 = por %p123, %p124
      %p127 = scmp.ne.s32.totalorder %s112, %s126
      %p128 = scmp.eq.s32.totalorder %s27, 0
      %p129 = por %p127, %p128
      %s131 = sadd.s32 %s130, 1
      %p134 = scmp.eq.s32.totalorder %s21, 1
      %p135 = scmp.ne.s32.totalorder %s130, %s132
      %p136 = scmp.eq.s32.totalorder %s21, 0
      %p137 = por %p135, %p136
      %p138 = scmp.ne.s32.totalorder %s130, %s132
      %p139 = scmp.eq.s32.totalorder %s26, 1
      %p140 = por %p138, %p139
      %p141 = scmp.ne.s32.totalorder %s132, %s133
      %p142 = scmp.eq.s32.totalorder %s26, 0
      %p143 = por %p141, %p142
      %p144 = scmp.ne.s32.totalorder %s132, %s133
      %p145 = scmp.eq.s32.totalorder %s27, 1
      %p146 = por %p144, %p145
      %p148 = scmp.ne.s32.totalorder %s133, %s147
      %p149 = scmp.eq.s32.totalorder %s27, 0
      %p150 = por %p148, %p149
      %s152 = sadd.s32 %s151, 1
      %p155 = scmp.eq.s32.totalorder %s21, 1
      %p156 = scmp.ne.s32.totalorder %s151, %s153
      %p157 = scmp.eq.s32.totalorder %s21, 0
      %p158 = por %p156, %p157
      %p159 = scmp.ne.s32.totalorder %s151, %s153
      %p160 = scmp.eq.s32.totalorder %s26, 1
      %p161 = por %p159, %p160
      %p162 = scmp.ne.s32.totalorder %s153, %s154
      %p163 = scmp.eq.s32.totalorder %s26, 0
      %p164 = por %p162, %p163
      %p165 = scmp.ne.s32.totalorder %s153, %s154
      %p166 = scmp.eq.s32.totalorder %s27, 1
      %p167 = por %p165, %p166
      %p169 = scmp.ne.s32.totalorder %s154, %s168
      %p170 = scmp.eq.s32.totalorder %s27, 0
      %p171 = por %p169, %p170
      %s173 = sadd.s32 %s172, 1
      %p176 = scmp.eq.s32.totalorder %s21, 1
      %p177 = scmp.ne.s32.totalorder %s172, %s174
      %p178 = scmp.eq.s32.totalorder %s21, 0
      %p179 = por %p177, %p178
      %p180 = scmp.ne.s32.totalorder %s172, %s174
      %p181 = scmp.eq.s32.totalorder %s26, 1
      %p182 = por %p180, %p181
      %p183 = scmp.ne.s32.totalorder %s174, %s175
      %p184 = scmp.eq.s32.totalorder %s26, 0
      %p185 = por %p183, %p184
      %p186 = scmp.ne.s32.totalorder %s174, %s175
      %p187 = scmp.eq.s32.totalorder %s27, 1
      %p188 = por %p186, %p187
      %p190 = scmp.ne.s32.totalorder %s175, %s189
      %p191 = scmp.eq.s32.totalorder %s27, 0
      %p192 = por %p190, %p191
      %s194 = sadd.s32 %s193, 1
      %p197 = scmp.eq.s32.totalorder %s21, 1
      %p198 = scmp.ne.s32.totalorder %s193, %s195
      %p199 = scmp.eq.s32.totalorder %s21, 0
      %p200 = por %p198, %p199
      %p201 = scmp.ne.s32.totalorder %s193, %s195
      %p202 = scmp.eq.s32.totalorder %s26, 1
      %p203 = por %p201, %p202
      %p204 = scmp.ne.s32.totalorder %s195, %s196
      %p205 = scmp.eq.s32.totalorder %s26, 0
      %p206 = por %p204, %p205
      %p207 = scmp.ne.s32.totalorder %s195, %s196
      %p208 = scmp.eq.s32.totalorder %s27, 1
      %p209 = por %p207, %p208
      %p211 = scmp.ne.s32.totalorder %s196, %s210
      %p212 = scmp.eq.s32.totalorder %s27, 0
      %p213 = por %p211, %p212
      %s214 = ssub.s32 %s28, %s40
      %s215 = ssub.s32 %s29, %s36
      %s216 = sor.u32 %s214, %s215
      %p217 = scmp.eq.s32.totalorder %s216, 0
      %s219 = sadd.s32 %s218, 1
      %s220 = scalar_select %p217, %s218, %s219
      %p223 = pneg %p217
      %p224 = scmp.eq.s32.totalorder %s21, 1
      %p225 = por %p223, %p224
      %p226 = scmp.ne.s32.totalorder %s218, %s221
      %p227 = scmp.eq.s32.totalorder %s21, 0
      %p228 = por %p226, %p227
      %p229 = scmp.ne.s32.totalorder %s218, %s221
      %p230 = scmp.eq.s32.totalorder %s26, 1
      %p231 = por %p229, %p230
      %p232 = scmp.ne.s32.totalorder %s221, %s222
      %p233 = scmp.eq.s32.totalorder %s26, 0
      %p234 = por %p232, %p233
      %p235 = scmp.ne.s32.totalorder %s221, %s222
      %p236 = scmp.eq.s32.totalorder %s27, 1
      %p237 = por %p235, %p236
      %p239 = scmp.ne.s32.totalorder %s222, %s238
      %p240 = scmp.eq.s32.totalorder %s27, 0
      %p241 = por %p239, %p240
      %p242 = scmp.le.s32.totalorder 1, %s21
      %p243 = scmp.lt.s32.totalorder %s21, 3
      %p244 = pnand %p242, %p243
      %p245 = pneg %p244
      // Predicated region
      $region9: #{tpu_custom_call.1} parent=5 // pred_check
        _
      $region10: #{tpu_custom_call.1} parent=5 // pred_check_branch
        %247 = sbr.rel (%p244) target = $region12
      $region11: #{tpu_custom_call.1} parent=5 // pred_region
        %s248 = ssub.s32 %s21, 1
        // Predicated region
        $region13: #{tpu_custom_call.1} parent=11 // pred_check
          %p249 = pneg %p80
        $region14: #{tpu_custom_call.1} parent=11 // pred_check_branch
          %251 = sbr.rel (%p249) target = $region16
        $region15: #{tpu_custom_call.1} parent=11 // pred_region
          _
        $region16: #{tpu_custom_call.1} parent=11 // pred_fallthru
          _
        // Predicated region
        $region17: #{tpu_custom_call.1} parent=11 // pred_check
          %p252 = pneg %p101
        $region18: #{tpu_custom_call.1} parent=11 // pred_check_branch
          %254 = sbr.rel (%p252) target = $region20
        $region19: #{tpu_custom_call.1} parent=11 // pred_region
          _
        $region20: #{tpu_custom_call.1} parent=11 // pred_fallthru
          _
        // Predicated region
        $region21: #{tpu_custom_call.1} parent=11 // pred_check
          %p255 = pneg %p122
        $region22: #{tpu_custom_call.1} parent=11 // pred_check_branch
          %257 = sbr.rel (%p255) target = $region24
        $region23: #{tpu_custom_call.1} parent=11 // pred_region
          _
        $region24: #{tpu_custom_call.1} parent=11 // pred_fallthru
          _
        // Predicated region
        $region25: #{tpu_custom_call.1} parent=11 // pred_check
          %p258 = pneg %p143
        $region26: #{tpu_custom_call.1} parent=11 // pred_check_branch
          %260 = sbr.rel (%p258) target = $region28
        $region27: #{tpu_custom_call.1} parent=11 // pred_region
          _
        $region28: #{tpu_custom_call.1} parent=11 // pred_fallthru
          _
        // Predicated region
        $region29: #{tpu_custom_call.1} parent=11 // pred_check
          %p261 = pneg %p164
        $region30: #{tpu_custom_call.1} parent=11 // pred_check_branch
          %263 = sbr.rel (%p261) target = $region32
        $region31: #{tpu_custom_call.1} parent=11 // pred_region
          _
        $region32: #{tpu_custom_call.1} parent=11 // pred_fallthru
          _
        // Predicated region
        $region33: #{tpu_custom_call.1} parent=11 // pred_check
          %p264 = pneg %p185
        $region34: #{tpu_custom_call.1} parent=11 // pred_check_branch
          %266 = sbr.rel (%p264) target = $region36
        $region35: #{tpu_custom_call.1} parent=11 // pred_region
          _
        $region36: #{tpu_custom_call.1} parent=11 // pred_fallthru
          _
        // Predicated region
        $region37: #{tpu_custom_call.1} parent=11 // pred_check
          %p267 = pneg %p206
        $region38: #{tpu_custom_call.1} parent=11 // pred_check_branch
          %269 = sbr.rel (%p267) target = $region40
        $region39: #{tpu_custom_call.1} parent=11 // pred_region
          _
        $region40: #{tpu_custom_call.1} parent=11 // pred_fallthru
          _
      $region12: #{tpu_custom_call.1} parent=5 // pred_fallthru
        _
      %p270 = scmp.lt.s32.totalorder %s21, 2
      // Predicated region
      $region41: #{tpu_custom_call.1} parent=5 // pred_check
        %p271 = pneg %p270
      $region42: #{tpu_custom_call.1} parent=5 // pred_check_branch
        %273 = sbr.rel (%p271) target = $region44
      $region43: #{tpu_custom_call.1} parent=5 // pred_region
        // Predicated region
        $region45: #{tpu_custom_call.1} parent=43 // pred_check
          %p274 = pneg %p53
        $region46: #{tpu_custom_call.1} parent=43 // pred_check_branch
          %276 = sbr.rel (%p274) target = $region48
        $region47: #{tpu_custom_call.1} parent=43 // pred_region
          %s277 = sand.u32 %s43, 1
          %s278 = scalar_lea.sflag [#allocation6], %s277
          %s279 = sand.u32 %s43, 1
          %s280 = smul.addr %s279, 64
          %s281 = scalar_lea.vmem [#allocation5], %s280
          %s283 = ssub.s32 1024, 1024
          %284 = vsyncadd %s278, %s283
          %s285 = smul.addr %s28, 8
          %s286 = smul.addr %s285, 128
          %s287 = scalar_lea.hbm %s0, %s286
          %s288 = sshll.u32 %s281, 4
          %s289 = int_to_ptr.vmem [resolvable:$true] %s288
          %294 = dma.hbm_to_vmem [thread:$0]  %s287, 1024, %s289, %s278, 256, 256, 16
        $region48: #{tpu_custom_call.1} parent=43 // pred_fallthru
          _
      $region44: #{tpu_custom_call.1} parent=5 // pred_fallthru
        _
      %p295 = scmp.le.s32.totalorder 1, %s21
      %p296 = scmp.lt.s32.totalorder %s21, 3
      %p297 = pnand %p295, %p296
      %p298 = pneg %p297
      // Predicated region
      $region49: #{tpu_custom_call.1} parent=5 // pred_check
        _
      $region50: #{tpu_custom_call.1} parent=5 // pred_check_branch
        %300 = sbr.rel (%p297) target = $region52
      $region51: #{tpu_custom_call.1} parent=5 // pred_region
        %s301 = ssub.s32 %s21, 1
        %s302 = sand.u32 %s46, 1
        %s303 = scalar_lea.sflag [#allocation6], %s302
        %s304 = sand.u32 %s46, 1
        %s305 = smul.addr %s304, 64
        %s306 = scalar_lea.vmem [#allocation5], %s305
        // Predicated region
        $region53: #{tpu_custom_call.1} parent=51 // pred_check
          %p307 = pneg %p59
        $region54: #{tpu_custom_call.1} parent=51 // pred_check_branch
          %309 = sbr.rel (%p307) target = $region56
        $region55: #{tpu_custom_call.1} parent=51 // pred_region
          %310 = dma.done %s303, 1024
        $region56: #{tpu_custom_call.1} parent=51 // pred_fallthru
          _
        %s311 = sand.u32 %s46, 1
        %s312 = scalar_lea.sflag [#allocation6], %s311
        %s313 = sand.u32 %s46, 1
        %s314 = smul.addr %s313, 64
        %s315 = scalar_lea.vmem [#allocation5], %s314
        %p316 = pneg %p59
        %p317 = pneg %p56
        %p318 = pneg %p80
        %p319 = pneg %p77
        %p320 = pneg %p101
        %p321 = pneg %p98
        %p322 = pneg %p122
        %p323 = pneg %p119
        %p324 = pneg %p143
        %p325 = pneg %p140
        %p326 = pneg %p164
        %p327 = pneg %p161
        %p328 = pneg %p185
        %p329 = pneg %p182
        %p330 = pneg %p206
        %p331 = pneg %p203
        %p332 = pneg %p234
        %p333 = pneg %p231
        %s334 = sand.u32 %s221, 1
        %s335 = scalar_lea.sflag [#allocation7], %s334
        %s336 = sand.u32 %s221, 1
        %s337 = smul.addr %s336, 64
        %s338 = scalar_lea.vmem [#allocation8], %s337
        %s339 = smul.u32 2, %s31
        %p341 = scmp.eq.s32.totalorder %s31, 0
        // Predicated region
        $region57: #{tpu_custom_call.1} parent=51 // pred_check
          %p342 = pneg %p341
        $region58: #{tpu_custom_call.1} parent=51 // pred_check_branch
          %344 = sbr.rel (%p342) target = $region60
        $region59: #{tpu_custom_call.1} parent=51 // pred_region
          %v345 = vld [vmem:[%s306] sm:$0xff]
          %v346 = vld [vmem:[%s306 + $0x8] sm:$0xff]
          %v347 = vld [vmem:[%s306 + $0x10] sm:$0xff]
          %v348 = vld [vmem:[%s306 + $0x18] sm:$0xff]
          %v349 = vld [vmem:[%s306 + $0x20] sm:$0xff]
          %v350 = vld [vmem:[%s306 + $0x28] sm:$0xff]
          %v351 = vld [vmem:[%s306 + $0x30] sm:$0xff]
          %v352 = vld [vmem:[%s306 + $0x38] sm:$0xff]
          %353 = vxpose.xlu0.b32.start [1/16] %v345, 128
          %354 = vxpose.xlu0.b32.cont [2/16] %v347, 128
          %355 = vxpose.xlu0.b32.cont [3/16] %v349, 128
          %356 = vxpose.xlu0.b32.cont [4/16] %v351, 128
          %357 = vxpose.xlu0.b32.cont [5/16] 0.0, 128
          %358 = vxpose.xlu0.b32.cont [6/16] 0.0, 128
          %359 = vxpose.xlu0.b32.cont [7/16] 0.0, 128
          %360 = vxpose.xlu0.b32.cont [8/16] 0.0, 128
          %361 = vxpose.xlu0.b32.cont [9/16] 0.0, 128
          %362 = vxpose.xlu0.b32.cont [10/16] 0.0, 128
          %363 = vxpose.xlu0.b32.cont [11/16] 0.0, 128
          %364 = vxpose.xlu0.b32.cont [12/16] 0.0, 128
          %365 = vxpose.xlu0.b32.cont [13/16] 0.0, 128
          %366 = vxpose.xlu0.b32.cont [14/16] 0.0, 128
          %367 = vxpose.xlu0.b32.cont [15/16] 0.0, 128
          %368 = vxpose.xlu0.b32.end [16/16] 0.0, 128
          %v369 = vpop.trf.xlu0
          %v370 = vpop.trf.xlu0
          %v371 = vpop.trf.xlu0
          %v372 = vpop.trf.xlu0
          %v373 = vpop.trf.xlu0
          %v374 = vpop.trf.xlu0
          %v375 = vpop.trf.xlu0
          %v376 = vpop.trf.xlu0
          %v377 = vpop.trf.xlu0
          %v378 = vpop.trf.xlu0
          %v379 = vpop.trf.xlu0
          %v380 = vpop.trf.xlu0
          %v381 = vpop.trf.xlu0
          %v382 = vpop.trf.xlu0
          %v383 = vpop.trf.xlu0
          %v384 = vpop.trf.xlu0
          %385 = vxpose.xlu0.b32.start [1/16] %v346, 128
          %386 = vxpose.xlu0.b32.cont [2/16] %v348, 128
          %387 = vxpose.xlu0.b32.cont [3/16] %v350, 128
          %388 = vxpose.xlu0.b32.cont [4/16] %v352, 128
          %389 = vxpose.xlu0.b32.cont [5/16] 0.0, 128
          %390 = vxpose.xlu0.b32.cont [6/16] 0.0, 128
          %391 = vxpose.xlu0.b32.cont [7/16] 0.0, 128
          %392 = vxpose.xlu0.b32.cont [8/16] 0.0, 128
          %393 = vxpose.xlu0.b32.cont [9/16] 0.0, 128
          %394 = vxpose.xlu0.b32.cont [10/16] 0.0, 128
          %395 = vxpose.xlu0.b32.cont [11/16] 0.0, 128
          %396 = vxpose.xlu0.b32.cont [12/16] 0.0, 128
          %397 = vxpose.xlu0.b32.cont [13/16] 0.0, 128
          %398 = vxpose.xlu0.b32.cont [14/16] 0.0, 128
          %399 = vxpose.xlu0.b32.cont [15/16] 0.0, 128
          %400 = vxpose.xlu0.b32.end [16/16] 0.0, 128
          %v401 = vpop.trf.xlu0
          %v402 = vpop.trf.xlu0
          %v403 = vpop.trf.xlu0
          %v404 = vpop.trf.xlu0
          %v405 = vpop.trf.xlu0
          %v406 = vpop.trf.xlu0
          %v407 = vpop.trf.xlu0
          %v408 = vpop.trf.xlu0
          %v409 = vpop.trf.xlu0
          %v410 = vpop.trf.xlu0
          %v411 = vpop.trf.xlu0
          %v412 = vpop.trf.xlu0
          %v413 = vpop.trf.xlu0
          %v414 = vpop.trf.xlu0
          %v415 = vpop.trf.xlu0
          %v416 = vpop.trf.xlu0
          %v417 = vpack.c.bf16 %v370, %v369
          %v418 = vpack.c.bf16 %v372, %v371
          %v419 = vpack.c.bf16 %v374, %v373
          %v420 = vpack.c.bf16 %v376, %v375
          %v421 = vpack.c.bf16 %v378, %v377
          %v422 = vpack.c.bf16 %v380, %v379
          %v423 = vpack.c.bf16 %v382, %v381
          %v424 = vpack.c.bf16 %v384, %v383
          %v425 = vpack.c.bf16 %v402, %v401
          %v426 = vpack.c.bf16 %v404, %v403
          %v427 = vpack.c.bf16 %v406, %v405
          %v428 = vpack.c.bf16 %v408, %v407
          %v429 = vpack.c.bf16 %v410, %v409
          %v430 = vpack.c.bf16 %v412, %v411
          %v431 = vpack.c.bf16 %v414, %v413
          %v432 = vpack.c.bf16 %v416, %v415
          %v433 = vld [vmem:[%s3] sm:$0xf]
          %v434 = vld [vmem:[%s3 + $0x4] sm:$0xf]
          %v435 = vld [vmem:[%s3 + $0x8] sm:$0xf]
          %v436 = vld [vmem:[%s3 + $0xc] sm:$0xf]
          %v437 = vld [vmem:[%s4] sm:$0x1]
          %v439 = vlaneseq
          %v440 = vshrl.u32 %v439, 7
          %v441 = vsub.s32 0, %v440
          %v442 = vrot.slane %v437, %v441
          %v448 = vunpack.c.l.b16 %v433
          %v449 = vunpack.c.l.b16 %v434
          %v450 = vunpack.c.l.b16 %v435
          %v451 = vunpack.c.l.b16 %v436
          %v452 = vpack.c.b16 %v449, %v448
          %v453 = vpack.c.b16 %v451, %v450
          %vm456 = vcmask 261120
          %v458 = vsel %vm456, %v417, 0
          %v461 = vsel %vm456, %v418, 0
          %v464 = vsel %vm456, %v419, 0
          %v467 = vsel %vm456, %v420, 0
          %v470 = vsel %vm456, %v421, 0
          %v473 = vsel %vm456, %v422, 0
          %v476 = vsel %vm456, %v423, 0
          %v479 = vsel %vm456, %v424, 0
          %v482 = vsel %vm456, %v425, 0
          %v485 = vsel %vm456, %v426, 0
          %v488 = vsel %vm456, %v427, 0
          %v491 = vsel %vm456, %v428, 0
          %v494 = vsel %vm456, %v429, 0
          %v497 = vsel %vm456, %v430, 0
          %v500 = vsel %vm456, %v431, 0
          %v503 = vsel %vm456, %v432, 0
          %505 = vmatprep.subr.bf16.mxu0 0
          %506 = vmatpush1.bf16.msra.mxu0 %v452
          %507 = vmatprep.subr.bf16.mxu0 0
          %508 = vmatpush1.bf16.msra.mxu0 %v453
          %509 = vmatprep.subr.bf16.mxu0 0
          %510 = vmatpush1.bf16.msra.mxu0 0
          %511 = vmatprep.subr.bf16.mxu0 0
          %512 = vmatpush1.bf16.msra.mxu0 0
          %513 = vmatprep.subr.bf16.mxu0 0
          %514 = vmatpush1.bf16.msra.mxu0 0
          %515 = vmatprep.subr.bf16.mxu0 0
          %516 = vmatpush1.bf16.msra.mxu0 0
          %517 = vmatprep.subr.bf16.mxu0 0
          %518 = vmatpush1.bf16.msra.mxu0 0
          %519 = vmatprep.subr.bf16.mxu0 0
          %520 = vmatpush1.bf16.msra.mxu0 0
          %521 = vmatprep.subr.bf16.mxu0 0
          %522 = vmatpush1.bf16.msra.mxu0 0
          %523 = vmatprep.subr.bf16.mxu0 0
          %524 = vmatpush1.bf16.msra.mxu0 0
          %525 = vmatprep.subr.bf16.mxu0 0
          %526 = vmatpush1.bf16.msra.mxu0 0
          %527 = vmatprep.subr.bf16.mxu0 0
          %528 = vmatpush1.bf16.msra.mxu0 0
          %529 = vmatprep.subr.bf16.mxu0 0
          %530 = vmatpush1.bf16.msra.mxu0 0
          %531 = vmatprep.subr.bf16.mxu0 0
          %532 = vmatpush1.bf16.msra.mxu0 0
          %533 = vmatprep.subr.bf16.mxu0 0
          %534 = vmatpush1.bf16.msra.mxu0 0
          %535 = vmatprep.subr.bf16.mxu0 0
          %536 = vmatpush1.bf16.msra.mxu0 0
          %537 = vmatprep.mubr.bf16.mxu0 0
          %538 = vmatmul.mubr.bf16.gmra.mrb[0].mxu0 %v458
          %v539 = vpop.f32.mrb[0].mxu0
          %v540 = vadd.f32 %v442, %v539
          %v541 = vpop.f32.mrb[0].mxu0
          %v542 = vpop.f32.mrb[0].mxu0
          %v543 = vadd.f32 %v442, %v542
          %v544 = vpop.f32.mrb[0].mxu0
          %545 = vmatprep.mubr.bf16.mxu0 0
          %546 = vmatmul.mubr.bf16.gmra.mrb[0].mxu0 %v461
          %v547 = vpop.f32.mrb[0].mxu0
          %v548 = vadd.f32 %v442, %v547
          %v549 = vpop.f32.mrb[0].mxu0
          %v550 = vpop.f32.mrb[0].mxu0
          %v551 = vadd.f32 %v442, %v550
          %v552 = vpop.f32.mrb[0].mxu0
          %553 = vmatprep.mubr.bf16.mxu0 0
          %554 = vmatmul.mubr.bf16.gmra.mrb[0].mxu0 %v464
          %v555 = vpop.f32.mrb[0].mxu0
          %v556 = vadd.f32 %v442, %v555
          %v557 = vpop.f32.mrb[0].mxu0
          %v558 = vpop.f32.mrb[0].mxu0
          %v559 = vadd.f32 %v442, %v558
          %v560 = vpop.f32.mrb[0].mxu0
          %561 = vmatprep.mubr.bf16.mxu0 0
          %562 = vmatmul.mubr.bf16.gmra.mrb[0].mxu0 %v467
          %v563 = vpop.f32.mrb[0].mxu0
          %v564 = vadd.f32 %v442, %v563
          %v565 = vpop.f32.mrb[0].mxu0
          %v566 = vpop.f32.mrb[0].mxu0
          %v567 = vadd.f32 %v442, %v566
          %v568 = vpop.f32.mrb[0].mxu0
          %569 = vmatprep.mubr.bf16.mxu0 0
          %570 = vmatmul.mubr.bf16.gmra.mrb[0].mxu0 %v470
          %v571 = vpop.f32.mrb[0].mxu0
          %v572 = vadd.f32 %v442, %v571
          %v573 = vpop.f32.mrb[0].mxu0
          %v574 = vpop.f32.mrb[0].mxu0
          %v575 = vadd.f32 %v442, %v574
          %v576 = vpop.f32.mrb[0].mxu0
          %577 = vmatprep.mubr.bf16.mxu0 0
          %578 = vmatmul.mubr.bf16.gmra.mrb[0].mxu0 %v473
          %v579 = vpop.f32.mrb[0].mxu0
          %v580 = vadd.f32 %v442, %v579
          %v581 = vpop.f32.mrb[0].mxu0
          %v582 = vpop.f32.mrb[0].mxu0
          %v583 = vadd.f32 %v442, %v582
          %v584 = vpop.f32.mrb[0].mxu0
          %585 = vmatprep.mubr.bf16.mxu0 0
          %586 = vmatmul.mubr.bf16.gmra.mrb[0].mxu0 %v476
          %v587 = vpop.f32.mrb[0].mxu0
          %v588 = vadd.f32 %v442, %v587
          %v589 = vpop.f32.mrb[0].mxu0
          %v590 = vpop.f32.mrb[0].mxu0
          %v591 = vadd.f32 %v442, %v590
          %v592 = vpop.f32.mrb[0].mxu0
          %593 = vmatprep.mubr.bf16.mxu0 0
          %594 = vmatmul.mubr.bf16.gmra.mrb[0].mxu0 %v479
          %v595 = vpop.f32.mrb[0].mxu0
          %v596 = vadd.f32 %v442, %v595
          %v597 = vpop.f32.mrb[0].mxu0
          %v598 = vpop.f32.mrb[0].mxu0
          %v599 = vadd.f32 %v442, %v598
          %v600 = vpop.f32.mrb[0].mxu0
          %601 = vmatprep.mubr.bf16.mxu0 0
          %602 = vmatmul.mubr.bf16.gmra.mrb[0].mxu0 %v482
          %v603 = vpop.f32.mrb[0].mxu0
          %v604 = vadd.f32 %v442, %v603
          %v605 = vpop.f32.mrb[0].mxu0
          %v606 = vpop.f32.mrb[0].mxu0
          %v607 = vadd.f32 %v442, %v606
          %v608 = vpop.f32.mrb[0].mxu0
          %609 = vmatprep.mubr.bf16.mxu0 0
          %610 = vmatmul.mubr.bf16.gmra.mrb[0].mxu0 %v485
          %v611 = vpop.f32.mrb[0].mxu0
          %v612 = vadd.f32 %v442, %v611
          %v613 = vpop.f32.mrb[0].mxu0
          %v614 = vpop.f32.mrb[0].mxu0
          %v615 = vadd.f32 %v442, %v614
          %v616 = vpop.f32.mrb[0].mxu0
          %617 = vmatprep.mubr.bf16.mxu0 0
          %618 = vmatmul.mubr.bf16.gmra.mrb[0].mxu0 %v488
          %v619 = vpop.f32.mrb[0].mxu0
          %v620 = vadd.f32 %v442, %v619
          %v621 = vpop.f32.mrb[0].mxu0
          %v622 = vpop.f32.mrb[0].mxu0
          %v623 = vadd.f32 %v442, %v622
          %v624 = vpop.f32.mrb[0].mxu0
          %625 = vmatprep.mubr.bf16.mxu0 0
          %626 = vmatmul.mubr.bf16.gmra.mrb[0].mxu0 %v491
          %v627 = vpop.f32.mrb[0].mxu0
          %v628 = vadd.f32 %v442, %v627
          %v629 = vpop.f32.mrb[0].mxu0
          %v630 = vpop.f32.mrb[0].mxu0
          %v631 = vadd.f32 %v442, %v630
          %v632 = vpop.f32.mrb[0].mxu0
          %633 = vmatprep.mubr.bf16.mxu0 0
          %634 = vmatmul.mubr.bf16.gmra.mrb[0].mxu0 %v494
          %v635 = vpop.f32.mrb[0].mxu0
          %v636 = vadd.f32 %v442, %v635
          %v637 = vpop.f32.mrb[0].mxu0
          %v638 = vpop.f32.mrb[0].mxu0
          %v639 = vadd.f32 %v442, %v638
          %v640 = vpop.f32.mrb[0].mxu0
          %641 = vmatprep.mubr.bf16.mxu0 0
          %642 = vmatmul.mubr.bf16.gmra.mrb[0].mxu0 %v497
          %v643 = vpop.f32.mrb[0].mxu0
          %v644 = vadd.f32 %v442, %v643
          %v645 = vpop.f32.mrb[0].mxu0
          %v646 = vpop.f32.mrb[0].mxu0
          %v647 = vadd.f32 %v442, %v646
          %v648 = vpop.f32.mrb[0].mxu0
          %649 = vmatprep.mubr.bf16.mxu0 0
          %650 = vmatmul.mubr.bf16.gmra.mrb[0].mxu0 %v500
          %v651 = vpop.f32.mrb[0].mxu0
          %v652 = vadd.f32 %v442, %v651
          %v653 = vpop.f32.mrb[0].mxu0
          %v654 = vpop.f32.mrb[0].mxu0
          %v655 = vadd.f32 %v442, %v654
          %v656 = vpop.f32.mrb[0].mxu0
          %657 = vmatprep.mubr.bf16.mxu0 0
          %658 = vmatmul.mubr.bf16.gmra.mrb[0].mxu0 %v503
          %v659 = vpop.f32.mrb[0].mxu0
          %v660 = vadd.f32 %v442, %v659
          %v661 = vpop.f32.mrb[0].mxu0
          %v662 = vpop.f32.mrb[0].mxu0
          %v663 = vadd.f32 %v442, %v662
          %v664 = vpop.f32.mrb[0].mxu0
          %665 = vdwg.mxu0
          %v698 = vcombine.high %v540, %v540
          %v700 = vunpack.c.l.s4 1983009808
          %v701 = vunpack.c.0.s8 %v700
          %v702 = vlaneseq
          %v703 = vshrl.u32 %v702, 7
          %v704 = vsub.s32 %v701, %v703
          %v705 = vrot.slane %v540, %v704
          %v707 = vunpack.c.l.s4 1983009808
          %v708 = vunpack.c.0.s8 %v707
          %v709 = vlaneseq
          %v710 = vshrl.u32 %v709, 7
          %v711 = vsub.s32 %v708, %v710
          %v712 = vrot.slane %v698, %v711
          %v713 = vcombine.high %v705, %v705
          %v714 = vcombine.high %v712, %v712
          %v715 = vcombine.high %v543, %v543
          %v717 = vunpack.c.l.s4 1983009808
          %v718 = vunpack.c.0.s8 %v717
          %v719 = vlaneseq
          %v720 = vshrl.u32 %v719, 7
          %v721 = vsub.s32 %v718, %v720
          %v722 = vrot.slane %v543, %v721
          %v724 = vunpack.c.l.s4 1983009808
          %v725 = vunpack.c.0.s8 %v724
          %v726 = vlaneseq
          %v727 = vshrl.u32 %v726, 7
          %v728 = vsub.s32 %v725, %v727
          %v729 = vrot.slane %v715, %v728
          %v730 = vcombine.high %v722, %v722
          %v731 = vcombine.high %v729, %v729
          %v732 = vcombine.high %v548, %v548
          %v734 = vunpack.c.l.s4 1983009808
          %v735 = vunpack.c.0.s8 %v734
          %v736 = vlaneseq
          %v737 = vshrl.u32 %v736, 7
          %v738 = vsub.s32 %v735, %v737
          %v739 = vrot.slane %v548, %v738
          %v741 = vunpack.c.l.s4 1983009808
          %v742 = vunpack.c.0.s8 %v741
          %v743 = vlaneseq
          %v744 = vshrl.u32 %v743, 7
          %v745 = vsub.s32 %v742, %v744
          %v746 = vrot.slane %v732, %v745
          %v747 = vcombine.high %v739, %v739
          %v748 = vcombine.high %v746, %v746
          %v749 = vcombine.high %v551, %v551
          %v751 = vunpack.c.l.s4 1983009808
          %v752 = vunpack.c.0.s8 %v751
          %v753 = vlaneseq
          %v754 = vshrl.u32 %v753, 7
          %v755 = vsub.s32 %v752, %v754
          %v756 = vrot.slane %v551, %v755
          %v758 = vunpack.c.l.s4 1983009808
          %v759 = vunpack.c.0.s8 %v758
          %v760 = vlaneseq
          %v761 = vshrl.u32 %v760, 7
          %v762 = vsub.s32 %v759, %v761
          %v763 = vrot.slane %v749, %v762
          %v764 = vcombine.high %v756, %v756
          %v765 = vcombine.high %v763, %v763
          %v766 = vcombine.high %v556, %v556
          %v768 = vunpack.c.l.s4 1983009808
          %v769 = vunpack.c.0.s8 %v768
          %v770 = vlaneseq
          %v771 = vshrl.u32 %v770, 7
          %v772 = vsub.s32 %v769, %v771
          %v773 = vrot.slane %v556, %v772
          %v775 = vunpack.c.l.s4 1983009808
          %v776 = vunpack.c.0.s8 %v775
          %v777 = vlaneseq
          %v778 = vshrl.u32 %v777, 7
          %v779 = vsub.s32 %v776, %v778
          %v780 = vrot.slane %v766, %v779
          %v781 = vcombine.high %v773, %v773
          %v782 = vcombine.high %v780, %v780
          %v783 = vcombine.high %v559, %v559
          %v785 = vunpack.c.l.s4 1983009808
          %v786 = vunpack.c.0.s8 %v785
          %v787 = vlaneseq
          %v788 = vshrl.u32 %v787, 7
          %v789 = vsub.s32 %v786, %v788
          %v790 = vrot.slane %v559, %v789
          %v792 = vunpack.c.l.s4 1983009808
          %v793 = vunpack.c.0.s8 %v792
          %v794 = vlaneseq
          %v795 = vshrl.u32 %v794, 7
          %v796 = vsub.s32 %v793, %v795
          %v797 = vrot.slane %v783, %v796
          %v798 = vcombine.high %v790, %v790
          %v799 = vcombine.high %v797, %v797
          %v800 = vcombine.high %v564, %v564
          %v802 = vunpack.c.l.s4 1983009808
          %v803 = vunpack.c.0.s8 %v802
          %v804 = vlaneseq
          %v805 = vshrl.u32 %v804, 7
          %v806 = vsub.s32 %v803, %v805
          %v807 = vrot.slane %v564, %v806
          %v809 = vunpack.c.l.s4 1983009808
          %v810 = vunpack.c.0.s8 %v809
          %v811 = vlaneseq
          %v812 = vshrl.u32 %v811, 7
          %v813 = vsub.s32 %v810, %v812
          %v814 = vrot.slane %v800, %v813
          %v815 = vcombine.high %v807, %v807
          %v816 = vcombine.high %v814, %v814
          %v817 = vcombine.high %v567, %v567
          %v819 = vunpack.c.l.s4 1983009808
          %v820 = vunpack.c.0.s8 %v819
          %v821 = vlaneseq
          %v822 = vshrl.u32 %v821, 7
          %v823 = vsub.s32 %v820, %v822
          %v824 = vrot.slane %v567, %v823
          %v826 = vunpack.c.l.s4 1983009808
          %v827 = vunpack.c.0.s8 %v826
          %v828 = vlaneseq
          %v829 = vshrl.u32 %v828, 7
          %v830 = vsub.s32 %v827, %v829
          %v831 = vrot.slane %v817, %v830
          %v832 = vcombine.high %v824, %v824
          %v833 = vcombine.high %v831, %v831
          %v834 = vcombine.high %v572, %v572
          %v836 = vunpack.c.l.s4 1983009808
          %v837 = vunpack.c.0.s8 %v836
          %v838 = vlaneseq
          %v839 = vshrl.u32 %v838, 7
          %v840 = vsub.s32 %v837, %v839
          %v841 = vrot.slane %v572, %v840
          %v843 = vunpack.c.l.s4 1983009808
          %v844 = vunpack.c.0.s8 %v843
          %v845 = vlaneseq
          %v846 = vshrl.u32 %v845, 7
          %v847 = vsub.s32 %v844, %v846
          %v848 = vrot.slane %v834, %v847
          %v849 = vcombine.high %v841, %v841
          %v850 = vcombine.high %v848, %v848
          %v851 = vcombine.high %v575, %v575
          %v853 = vunpack.c.l.s4 1983009808
          %v854 = vunpack.c.0.s8 %v853
          %v855 = vlaneseq
          %v856 = vshrl.u32 %v855, 7
          %v857 = vsub.s32 %v854, %v856
          %v858 = vrot.slane %v575, %v857
          %v860 = vunpack.c.l.s4 1983009808
          %v861 = vunpack.c.0.s8 %v860
          %v862 = vlaneseq
          %v863 = vshrl.u32 %v862, 7
          %v864 = vsub.s32 %v861, %v863
          %v865 = vrot.slane %v851, %v864
          %v866 = vcombine.high %v858, %v858
          %v867 = vcombine.high %v865, %v865
          %v868 = vcombine.high %v580, %v580
          %v870 = vunpack.c.l.s4 1983009808
          %v871 = vunpack.c.0.s8 %v870
          %v872 = vlaneseq
          %v873 = vshrl.u32 %v872, 7
          %v874 = vsub.s32 %v871, %v873
          %v875 = vrot.slane %v580, %v874
          %v877 = vunpack.c.l.s4 1983009808
          %v878 = vunpack.c.0.s8 %v877
          %v879 = vlaneseq
          %v880 = vshrl.u32 %v879, 7
          %v881 = vsub.s32 %v878, %v880
          %v882 = vrot.slane %v868, %v881
          %v883 = vcombine.high %v875, %v875
          %v884 = vcombine.high %v882, %v882
          %v885 = vcombine.high %v583, %v583
          %v887 = vunpack.c.l.s4 1983009808
          %v888 = vunpack.c.0.s8 %v887
          %v889 = vlaneseq
          %v890 = vshrl.u32 %v889, 7
          %v891 = vsub.s32 %v888, %v890
          %v892 = vrot.slane %v583, %v891
          %v894 = vunpack.c.l.s4 1983009808
          %v895 = vunpack.c.0.s8 %v894
          %v896 = vlaneseq
          %v897 = vshrl.u32 %v896, 7
          %v898 = vsub.s32 %v895, %v897
          %v899 = vrot.slane %v885, %v898
          %v900 = vcombine.high %v892, %v892
          %v901 = vcombine.high %v899, %v899
          %v902 = vcombine.high %v588, %v588
          %v904 = vunpack.c.l.s4 1983009808
          %v905 = vunpack.c.0.s8 %v904
          %v906 = vlaneseq
          %v907 = vshrl.u32 %v906, 7
          %v908 = vsub.s32 %v905, %v907
          %v909 = vrot.slane %v588, %v908
          %v911 = vunpack.c.l.s4 1983009808
          %v912 = vunpack.c.0.s8 %v911
          %v913 = vlaneseq
          %v914 = vshrl.u32 %v913, 7
          %v915 = vsub.s32 %v912, %v914
          %v916 = vrot.slane %v902, %v915
          %v917 = vcombine.high %v909, %v909
          %v918 = vcombine.high %v916, %v916
          %v919 = vcombine.high %v591, %v591
          %v921 = vunpack.c.l.s4 1983009808
          %v922 = vunpack.c.0.s8 %v921
          %v923 = vlaneseq
          %v924 = vshrl.u32 %v923, 7
          %v925 = vsub.s32 %v922, %v924
          %v926 = vrot.slane %v591, %v925
          %v928 = vunpack.c.l.s4 1983009808
          %v929 = vunpack.c.0.s8 %v928
          %v930 = vlaneseq
          %v931 = vshrl.u32 %v930, 7
          %v932 = vsub.s32 %v929, %v931
          %v933 = vrot.slane %v919, %v932
          %v934 = vcombine.high %v926, %v926
          %v935 = vcombine.high %v933, %v933
          %v936 = vcombine.high %v596, %v596
          %v938 = vunpack.c.l.s4 1983009808
          %v939 = vunpack.c.0.s8 %v938
          %v940 = vlaneseq
          %v941 = vshrl.u32 %v940, 7
          %v942 = vsub.s32 %v939, %v941
          %v943 = vrot.slane %v596, %v942
          %v945 = vunpack.c.l.s4 1983009808
          %v946 = vunpack.c.0.s8 %v945
          %v947 = vlaneseq
          %v948 = vshrl.u32 %v947, 7
          %v949 = vsub.s32 %v946, %v948
          %v950 = vrot.slane %v936, %v949
          %v951 = vcombine.high %v943, %v943
          %v952 = vcombine.high %v950, %v950
          %v953 = vcombine.high %v599, %v599
          %v955 = vunpack.c.l.s4 1983009808
          %v956 = vunpack.c.0.s8 %v955
          %v957 = vlaneseq
          %v958 = vshrl.u32 %v957, 7
          %v959 = vsub.s32 %v956, %v958
          %v960 = vrot.slane %v599, %v959
          %v962 = vunpack.c.l.s4 1983009808
          %v963 = vunpack.c.0.s8 %v962
          %v964 = vlaneseq
          %v965 = vshrl.u32 %v964, 7
          %v966 = vsub.s32 %v963, %v965
          %v967 = vrot.slane %v953, %v966
          %v968 = vcombine.high %v960, %v960
          %v969 = vcombine.high %v967, %v967
          %v970 = vcombine.high %v604, %v604
          %v972 = vunpack.c.l.s4 1983009808
          %v973 = vunpack.c.0.s8 %v972
          %v974 = vlaneseq
          %v975 = vshrl.u32 %v974, 7
          %v976 = vsub.s32 %v973, %v975
          %v977 = vrot.slane %v604, %v976
          %v979 = vunpack.c.l.s4 1983009808
          %v980 = vunpack.c.0.s8 %v979
          %v981 = vlaneseq
          %v982 = vshrl.u32 %v981, 7
          %v983 = vsub.s32 %v980, %v982
          %v984 = vrot.slane %v970, %v983
          %v985 = vcombine.high %v977, %v977
          %v986 = vcombine.high %v984, %v984
          %v987 = vcombine.high %v607, %v607
          %v989 = vunpack.c.l.s4 1983009808
          %v990 = vunpack.c.0.s8 %v989
          %v991 = vlaneseq
          %v992 = vshrl.u32 %v991, 7
          %v993 = vsub.s32 %v990, %v992
          %v994 = vrot.slane %v607, %v993
          %v996 = vunpack.c.l.s4 1983009808
          %v997 = vunpack.c.0.s8 %v996
          %v998 = vlaneseq
          %v999 = vshrl.u32 %v998, 7
          %v1000 = vsub.s32 %v997, %v999
          %v1001 = vrot.slane %v987, %v1000
          %v1002 = vcombine.high %v994, %v994
          %v1003 = vcombine.high %v1001, %v1001
          %v1004 = vcombine.high %v612, %v612
          %v1006 = vunpack.c.l.s4 1983009808
          %v1007 = vunpack.c.0.s8 %v1006
          %v1008 = vlaneseq
          %v1009 = vshrl.u32 %v1008, 7
          %v1010 = vsub.s32 %v1007, %v1009
          %v1011 = vrot.slane %v612, %v1010
          %v1013 = vunpack.c.l.s4 1983009808
          %v1014 = vunpack.c.0.s8 %v1013
          %v1015 = vlaneseq
          %v1016 = vshrl.u32 %v1015, 7
          %v1017 = vsub.s32 %v1014, %v1016
          %v1018 = vrot.slane %v1004, %v1017
          %v1019 = vcombine.high %v1011, %v1011
          %v1020 = vcombine.high %v1018, %v1018
          %v1021 = vcombine.high %v615, %v615
          %v1023 = vunpack.c.l.s4 1983009808
          %v1024 = vunpack.c.0.s8 %v1023
          %v1025 = vlaneseq
          %v1026 = vshrl.u32 %v1025, 7
          %v1027 = vsub.s32 %v1024, %v1026
          %v1028 = vrot.slane %v615, %v1027
          %v1030 = vunpack.c.l.s4 1983009808
          %v1031 = vunpack.c.0.s8 %v1030
          %v1032 = vlaneseq
          %v1033 = vshrl.u32 %v1032, 7
          %v1034 = vsub.s32 %v1031, %v1033
          %v1035 = vrot.slane %v1021, %v1034
          %v1036 = vcombine.high %v1028, %v1028
          %v1037 = vcombine.high %v1035, %v1035
          %v1038 = vcombine.high %v620, %v620
          %v1040 = vunpack.c.l.s4 1983009808
          %v1041 = vunpack.c.0.s8 %v1040
          %v1042 = vlaneseq
          %v1043 = vshrl.u32 %v1042, 7
          %v1044 = vsub.s32 %v1041, %v1043
          %v1045 = vrot.slane %v620, %v1044
          %v1047 = vunpack.c.l.s4 1983009808
          %v1048 = vunpack.c.0.s8 %v1047
          %v1049 = vlaneseq
          %v1050 = vshrl.u32 %v1049, 7
          %v1051 = vsub.s32 %v1048, %v1050
          %v1052 = vrot.slane %v1038, %v1051
          %v1053 = vcombine.high %v1045, %v1045
          %v1054 = vcombine.high %v1052, %v1052
          %v1055 = vcombine.high %v623, %v623
          %v1057 = vunpack.c.l.s4 1983009808
          %v1058 = vunpack.c.0.s8 %v1057
          %v1059 = vlaneseq
          %v1060 = vshrl.u32 %v1059, 7
          %v1061 = vsub.s32 %v1058, %v1060
          %v1062 = vrot.slane %v623, %v1061
          %v1064 = vunpack.c.l.s4 1983009808
          %v1065 = vunpack.c.0.s8 %v1064
          %v1066 = vlaneseq
          %v1067 = vshrl.u32 %v1066, 7
          %v1068 = vsub.s32 %v1065, %v1067
          %v1069 = vrot.slane %v1055, %v1068
          %v1070 = vcombine.high %v1062, %v1062
          %v1071 = vcombine.high %v1069, %v1069
          %v1072 = vcombine.high %v628, %v628
          %v1074 = vunpack.c.l.s4 1983009808
          %v1075 = vunpack.c.0.s8 %v1074
          %v1076 = vlaneseq
          %v1077 = vshrl.u32 %v1076, 7
          %v1078 = vsub.s32 %v1075, %v1077
          %v1079 = vrot.slane %v628, %v1078
          %v1081 = vunpack.c.l.s4 1983009808
          %v1082 = vunpack.c.0.s8 %v1081
          %v1083 = vlaneseq
          %v1084 = vshrl.u32 %v1083, 7
          %v1085 = vsub.s32 %v1082, %v1084
          %v1086 = vrot.slane %v1072, %v1085
          %v1087 = vcombine.high %v1079, %v1079
          %v1088 = vcombine.high %v1086, %v1086
          %v1089 = vcombine.high %v631, %v631
          %v1091 = vunpack.c.l.s4 1983009808
          %v1092 = vunpack.c.0.s8 %v1091
          %v1093 = vlaneseq
          %v1094 = vshrl.u32 %v1093, 7
          %v1095 = vsub.s32 %v1092, %v1094
          %v1096 = vrot.slane %v631, %v1095
          %v1098 = vunpack.c.l.s4 1983009808
          %v1099 = vunpack.c.0.s8 %v1098
          %v1100 = vlaneseq
          %v1101 = vshrl.u32 %v1100, 7
          %v1102 = vsub.s32 %v1099, %v1101
          %v1103 = vrot.slane %v1089, %v1102
          %v1104 = vcombine.high %v1096, %v1096
          %v1105 = vcombine.high %v1103, %v1103
          %v1106 = vcombine.high %v636, %v636
          %v1108 = vunpack.c.l.s4 1983009808
          %v1109 = vunpack.c.0.s8 %v1108
          %v1110 = vlaneseq
          %v1111 = vshrl.u32 %v1110, 7
          %v1112 = vsub.s32 %v1109, %v1111
          %v1113 = vrot.slane %v636, %v1112
          %v1115 = vunpack.c.l.s4 1983009808
          %v1116 = vunpack.c.0.s8 %v1115
          %v1117 = vlaneseq
          %v1118 = vshrl.u32 %v1117, 7
          %v1119 = vsub.s32 %v1116, %v1118
          %v1120 = vrot.slane %v1106, %v1119
          %v1121 = vcombine.high %v1113, %v1113
          %v1122 = vcombine.high %v1120, %v1120
          %v1123 = vcombine.high %v639, %v639
          %v1125 = vunpack.c.l.s4 1983009808
          %v1126 = vunpack.c.0.s8 %v1125
          %v1127 = vlaneseq
          %v1128 = vshrl.u32 %v1127, 7
          %v1129 = vsub.s32 %v1126, %v1128
          %v1130 = vrot.slane %v639, %v1129
          %v1132 = vunpack.c.l.s4 1983009808
          %v1133 = vunpack.c.0.s8 %v1132
          %v1134 = vlaneseq
          %v1135 = vshrl.u32 %v1134, 7
          %v1136 = vsub.s32 %v1133, %v1135
          %v1137 = vrot.slane %v1123, %v1136
          %v1138 = vcombine.high %v1130, %v1130
          %v1139 = vcombine.high %v1137, %v1137
          %v1140 = vcombine.high %v644, %v644
          %v1142 = vunpack.c.l.s4 1983009808
          %v1143 = vunpack.c.0.s8 %v1142
          %v1144 = vlaneseq
          %v1145 = vshrl.u32 %v1144, 7
          %v1146 = vsub.s32 %v1143, %v1145
          %v1147 = vrot.slane %v644, %v1146
          %v1149 = vunpack.c.l.s4 1983009808
          %v1150 = vunpack.c.0.s8 %v1149
          %v1151 = vlaneseq
          %v1152 = vshrl.u32 %v1151, 7
          %v1153 = vsub.s32 %v1150, %v1152
          %v1154 = vrot.slane %v1140, %v1153
          %v1155 = vcombine.high %v1147, %v1147
          %v1156 = vcombine.high %v1154, %v1154
          %v1157 = vcombine.high %v647, %v647
          %v1159 = vunpack.c.l.s4 1983009808
          %v1160 = vunpack.c.0.s8 %v1159
          %v1161 = vlaneseq
          %v1162 = vshrl.u32 %v1161, 7
          %v1163 = vsub.s32 %v1160, %v1162
          %v1164 = vrot.slane %v647, %v1163
          %v1166 = vunpack.c.l.s4 1983009808
          %v1167 = vunpack.c.0.s8 %v1166
          %v1168 = vlaneseq
          %v1169 = vshrl.u32 %v1168, 7
          %v1170 = vsub.s32 %v1167, %v1169
          %v1171 = vrot.slane %v1157, %v1170
          %v1172 = vcombine.high %v1164, %v1164
          %v1173 = vcombine.high %v1171, %v1171
          %v1174 = vcombine.high %v652, %v652
          %v1176 = vunpack.c.l.s4 1983009808
          %v1177 = vunpack.c.0.s8 %v1176
          %v1178 = vlaneseq
          %v1179 = vshrl.u32 %v1178, 7
          %v1180 = vsub.s32 %v1177, %v1179
          %v1181 = vrot.slane %v652, %v1180
          %v1183 = vunpack.c.l.s4 1983009808
          %v1184 = vunpack.c.0.s8 %v1183
          %v1185 = vlaneseq
          %v1186 = vshrl.u32 %v1185, 7
          %v1187 = vsub.s32 %v1184, %v1186
          %v1188 = vrot.slane %v1174, %v1187
          %v1189 = vcombine.high %v1181, %v1181
          %v1190 = vcombine.high %v1188, %v1188
          %v1191 = vcombine.high %v655, %v655
          %v1193 = vunpack.c.l.s4 1983009808
          %v1194 = vunpack.c.0.s8 %v1193
          %v1195 = vlaneseq
          %v1196 = vshrl.u32 %v1195, 7
          %v1197 = vsub.s32 %v1194, %v1196
          %v1198 = vrot.slane %v655, %v1197
          %v1200 = vunpack.c.l.s4 1983009808
          %v1201 = vunpack.c.0.s8 %v1200
          %v1202 = vlaneseq
          %v1203 = vshrl.u32 %v1202, 7
          %v1204 = vsub.s32 %v1201, %v1203
          %v1205 = vrot.slane %v1191, %v1204
          %v1206 = vcombine.high %v1198, %v1198
          %v1207 = vcombine.high %v1205, %v1205
          %v1208 = vcombine.high %v660, %v660
          %v1210 = vunpack.c.l.s4 1983009808
          %v1211 = vunpack.c.0.s8 %v1210
          %v1212 = vlaneseq
          %v1213 = vshrl.u32 %v1212, 7
          %v1214 = vsub.s32 %v1211, %v1213
          %v1215 = vrot.slane %v660, %v1214
          %v1217 = vunpack.c.l.s4 1983009808
          %v1218 = vunpack.c.0.s8 %v1217
          %v1219 = vlaneseq
          %v1220 = vshrl.u32 %v1219, 7
          %v1221 = vsub.s32 %v1218, %v1220
          %v1222 = vrot.slane %v1208, %v1221
          %v1223 = vcombine.high %v1215, %v1215
          %v1224 = vcombine.high %v1222, %v1222
          %v1225 = vcombine.high %v663, %v663
          %v1227 = vunpack.c.l.s4 1983009808
          %v1228 = vunpack.c.0.s8 %v1227
          %v1229 = vlaneseq
          %v1230 = vshrl.u32 %v1229, 7
          %v1231 = vsub.s32 %v1228, %v1230
          %v1232 = vrot.slane %v663, %v1231
          %v1234 = vunpack.c.l.s4 1983009808
          %v1235 = vunpack.c.0.s8 %v1234
          %v1236 = vlaneseq
          %v1237 = vshrl.u32 %v1236, 7
          %v1238 = vsub.s32 %v1235, %v1237
          %v1239 = vrot.slane %v1225, %v1238
          %v1240 = vcombine.high %v1232, %v1232
          %v1241 = vcombine.high %v1239, %v1239
          %vm1370 = vcmask 156672
          %v1371 = vsel %vm1370, %v705, -inf
          %v1372 = vrot.slane %v1371, 4
          %v1373 = vmax.f32 %v1371, %v1372
          %v1374 = vrot.slane %v1373, 2
          %v1375 = vmax.f32 %v1373, %v1374
          %v1376 = vrot.slane %v1375, 1
          %v1377 = vmax.f32 %v1375, %v1376
          %v1378 = vsel %vm1370, %v713, -inf
          %v1379 = vrot.slane %v1378, 4
          %v1380 = vmax.f32 %v1378, %v1379
          %v1381 = vrot.slane %v1380, 2
          %v1382 = vmax.f32 %v1380, %v1381
          %v1383 = vrot.slane %v1382, 1
          %v1384 = vmax.f32 %v1382, %v1383
          %v1385 = vsel %vm1370, %v712, -inf
          %v1386 = vrot.slane %v1385, 4
          %v1387 = vmax.f32 %v1385, %v1386
          %v1388 = vrot.slane %v1387, 2
          %v1389 = vmax.f32 %v1387, %v1388
          %v1390 = vrot.slane %v1389, 1
          %v1391 = vmax.f32 %v1389, %v1390
          %v1392 = vsel %vm1370, %v714, -inf
          %v1393 = vrot.slane %v1392, 4
          %v1394 = vmax.f32 %v1392, %v1393
          %v1395 = vrot.slane %v1394, 2
          %v1396 = vmax.f32 %v1394, %v1395
          %v1397 = vrot.slane %v1396, 1
          %v1398 = vmax.f32 %v1396, %v1397
          %v1399 = vsel %vm1370, %v722, -inf
          %v1400 = vrot.slane %v1399, 4
          %v1401 = vmax.f32 %v1399, %v1400
          %v1402 = vrot.slane %v1401, 2
          %v1403 = vmax.f32 %v1401, %v1402
          %v1404 = vrot.slane %v1403, 1
          %v1405 = vmax.f32 %v1403, %v1404
          %v1406 = vsel %vm1370, %v730, -inf
          %v1407 = vrot.slane %v1406, 4
          %v1408 = vmax.f32 %v1406, %v1407
          %v1409 = vrot.slane %v1408, 2
          %v1410 = vmax.f32 %v1408, %v1409
          %v1411 = vrot.slane %v1410, 1
          %v1412 = vmax.f32 %v1410, %v1411
          %v1413 = vsel %vm1370, %v729, -inf
          %v1414 = vrot.slane %v1413, 4
          %v1415 = vmax.f32 %v1413, %v1414
          %v1416 = vrot.slane %v1415, 2
          %v1417 = vmax.f32 %v1415, %v1416
          %v1418 = vrot.slane %v1417, 1
          %v1419 = vmax.f32 %v1417, %v1418
          %v1420 = vsel %vm1370, %v731, -inf
          %v1421 = vrot.slane %v1420, 4
          %v1422 = vmax.f32 %v1420, %v1421
          %v1423 = vrot.slane %v1422, 2
          %v1424 = vmax.f32 %v1422, %v1423
          %v1425 = vrot.slane %v1424, 1
          %v1426 = vmax.f32 %v1424, %v1425
          %v1427 = vsel %vm1370, %v739, -inf
          %v1428 = vrot.slane %v1427, 4
          %v1429 = vmax.f32 %v1427, %v1428
          %v1430 = vrot.slane %v1429, 2
          %v1431 = vmax.f32 %v1429, %v1430
          %v1432 = vrot.slane %v1431, 1
          %v1433 = vmax.f32 %v1431, %v1432
          %v1434 = vsel %vm1370, %v747, -inf
          %v1435 = vrot.slane %v1434, 4
          %v1436 = vmax.f32 %v1434, %v1435
          %v1437 = vrot.slane %v1436, 2
          %v1438 = vmax.f32 %v1436, %v1437
          %v1439 = vrot.slane %v1438, 1
          %v1440 = vmax.f32 %v1438, %v1439
          %v1441 = vsel %vm1370, %v746, -inf
          %v1442 = vrot.slane %v1441, 4
          %v1443 = vmax.f32 %v1441, %v1442
          %v1444 = vrot.slane %v1443, 2
          %v1445 = vmax.f32 %v1443, %v1444
          %v1446 = vrot.slane %v1445, 1
          %v1447 = vmax.f32 %v1445, %v1446
          %v1448 = vsel %vm1370, %v748, -inf
          %v1449 = vrot.slane %v1448, 4
          %v1450 = vmax.f32 %v1448, %v1449
          %v1451 = vrot.slane %v1450, 2
          %v1452 = vmax.f32 %v1450, %v1451
          %v1453 = vrot.slane %v1452, 1
          %v1454 = vmax.f32 %v1452, %v1453
          %v1455 = vsel %vm1370, %v756, -inf
          %v1456 = vrot.slane %v1455, 4
          %v1457 = vmax.f32 %v1455, %v1456
          %v1458 = vrot.slane %v1457, 2
          %v1459 = vmax.f32 %v1457, %v1458
          %v1460 = vrot.slane %v1459, 1
          %v1461 = vmax.f32 %v1459, %v1460
          %v1462 = vsel %vm1370, %v764, -inf
          %v1463 = vrot.slane %v1462, 4
          %v1464 = vmax.f32 %v1462, %v1463
          %v1465 = vrot.slane %v1464, 2
          %v1466 = vmax.f32 %v1464, %v1465
          %v1467 = vrot.slane %v1466, 1
          %v1468 = vmax.f32 %v1466, %v1467
          %v1469 = vsel %vm1370, %v763, -inf
          %v1470 = vrot.slane %v1469, 4
          %v1471 = vmax.f32 %v1469, %v1470
          %v1472 = vrot.slane %v1471, 2
          %v1473 = vmax.f32 %v1471, %v1472
          %v1474 = vrot.slane %v1473, 1
          %v1475 = vmax.f32 %v1473, %v1474
          %v1476 = vsel %vm1370, %v765, -inf
          %v1477 = vrot.slane %v1476, 4
          %v1478 = vmax.f32 %v1476, %v1477
          %v1479 = vrot.slane %v1478, 2
          %v1480 = vmax.f32 %v1478, %v1479
          %v1481 = vrot.slane %v1480, 1
          %v1482 = vmax.f32 %v1480, %v1481
          %v1483 = vsel %vm1370, %v773, -inf
          %v1484 = vrot.slane %v1483, 4
          %v1485 = vmax.f32 %v1483, %v1484
          %v1486 = vrot.slane %v1485, 2
          %v1487 = vmax.f32 %v1485, %v1486
          %v1488 = vrot.slane %v1487, 1
          %v1489 = vmax.f32 %v1487, %v1488
          %v1490 = vsel %vm1370, %v781, -inf
          %v1491 = vrot.slane %v1490, 4
          %v1492 = vmax.f32 %v1490, %v1491
          %v1493 = vrot.slane %v1492, 2
          %v1494 = vmax.f32 %v1492, %v1493
          %v1495 = vrot.slane %v1494, 1
          %v1496 = vmax.f32 %v1494, %v1495
          %v1497 = vsel %vm1370, %v780, -inf
          %v1498 = vrot.slane %v1497, 4
          %v1499 = vmax.f32 %v1497, %v1498
          %v1500 = vrot.slane %v1499, 2
          %v1501 = vmax.f32 %v1499, %v1500
          %v1502 = vrot.slane %v1501, 1
          %v1503 = vmax.f32 %v1501, %v1502
          %v1504 = vsel %vm1370, %v782, -inf
          %v1505 = vrot.slane %v1504, 4
          %v1506 = vmax.f32 %v1504, %v1505
          %v1507 = vrot.slane %v1506, 2
          %v1508 = vmax.f32 %v1506, %v1507
          %v1509 = vrot.slane %v1508, 1
          %v1510 = vmax.f32 %v1508, %v1509
          %v1511 = vsel %vm1370, %v790, -inf
          %v1512 = vrot.slane %v1511, 4
          %v1513 = vmax.f32 %v1511, %v1512
          %v1514 = vrot.slane %v1513, 2
          %v1515 = vmax.f32 %v1513, %v1514
          %v1516 = vrot.slane %v1515, 1
          %v1517 = vmax.f32 %v1515, %v1516
          %v1518 = vsel %vm1370, %v798, -inf
          %v1519 = vrot.slane %v1518, 4
          %v1520 = vmax.f32 %v1518, %v1519
          %v1521 = vrot.slane %v1520, 2
          %v1522 = vmax.f32 %v1520, %v1521
          %v1523 = vrot.slane %v1522, 1
          %v1524 = vmax.f32 %v1522, %v1523
          %v1525 = vsel %vm1370, %v797, -inf
          %v1526 = vrot.slane %v1525, 4
          %v1527 = vmax.f32 %v1525, %v1526
          %v1528 = vrot.slane %v1527, 2
          %v1529 = vmax.f32 %v1527, %v1528
          %v1530 = vrot.slane %v1529, 1
          %v1531 = vmax.f32 %v1529, %v1530
          %v1532 = vsel %vm1370, %v799, -inf
          %v1533 = vrot.slane %v1532, 4
          %v1534 = vmax.f32 %v1532, %v1533
          %v1535 = vrot.slane %v1534, 2
          %v1536 = vmax.f32 %v1534, %v1535
          %v1537 = vrot.slane %v1536, 1
          %v1538 = vmax.f32 %v1536, %v1537
          %v1539 = vsel %vm1370, %v807, -inf
          %v1540 = vrot.slane %v1539, 4
          %v1541 = vmax.f32 %v1539, %v1540
          %v1542 = vrot.slane %v1541, 2
          %v1543 = vmax.f32 %v1541, %v1542
          %v1544 = vrot.slane %v1543, 1
          %v1545 = vmax.f32 %v1543, %v1544
          %v1546 = vsel %vm1370, %v815, -inf
          %v1547 = vrot.slane %v1546, 4
          %v1548 = vmax.f32 %v1546, %v1547
          %v1549 = vrot.slane %v1548, 2
          %v1550 = vmax.f32 %v1548, %v1549
          %v1551 = vrot.slane %v1550, 1
          %v1552 = vmax.f32 %v1550, %v1551
          %v1553 = vsel %vm1370, %v814, -inf
          %v1554 = vrot.slane %v1553, 4
          %v1555 = vmax.f32 %v1553, %v1554
          %v1556 = vrot.slane %v1555, 2
          %v1557 = vmax.f32 %v1555, %v1556
          %v1558 = vrot.slane %v1557, 1
          %v1559 = vmax.f32 %v1557, %v1558
          %v1560 = vsel %vm1370, %v816, -inf
          %v1561 = vrot.slane %v1560, 4
          %v1562 = vmax.f32 %v1560, %v1561
          %v1563 = vrot.slane %v1562, 2
          %v1564 = vmax.f32 %v1562, %v1563
          %v1565 = vrot.slane %v1564, 1
          %v1566 = vmax.f32 %v1564, %v1565
          %v1567 = vsel %vm1370, %v824, -inf
          %v1568 = vrot.slane %v1567, 4
          %v1569 = vmax.f32 %v1567, %v1568
          %v1570 = vrot.slane %v1569, 2
          %v1571 = vmax.f32 %v1569, %v1570
          %v1572 = vrot.slane %v1571, 1
          %v1573 = vmax.f32 %v1571, %v1572
          %v1574 = vsel %vm1370, %v832, -inf
          %v1575 = vrot.slane %v1574, 4
          %v1576 = vmax.f32 %v1574, %v1575
          %v1577 = vrot.slane %v1576, 2
          %v1578 = vmax.f32 %v1576, %v1577
          %v1579 = vrot.slane %v1578, 1
          %v1580 = vmax.f32 %v1578, %v1579
          %v1581 = vsel %vm1370, %v831, -inf
          %v1582 = vrot.slane %v1581, 4
          %v1583 = vmax.f32 %v1581, %v1582
          %v1584 = vrot.slane %v1583, 2
          %v1585 = vmax.f32 %v1583, %v1584
          %v1586 = vrot.slane %v1585, 1
          %v1587 = vmax.f32 %v1585, %v1586
          %v1588 = vsel %vm1370, %v833, -inf
          %v1589 = vrot.slane %v1588, 4
          %v1590 = vmax.f32 %v1588, %v1589
          %v1591 = vrot.slane %v1590, 2
          %v1592 = vmax.f32 %v1590, %v1591
          %v1593 = vrot.slane %v1592, 1
          %v1594 = vmax.f32 %v1592, %v1593
          %v1595 = vsel %vm1370, %v841, -inf
          %v1596 = vrot.slane %v1595, 4
          %v1597 = vmax.f32 %v1595, %v1596
          %v1598 = vrot.slane %v1597, 2
          %v1599 = vmax.f32 %v1597, %v1598
          %v1600 = vrot.slane %v1599, 1
          %v1601 = vmax.f32 %v1599, %v1600
          %v1602 = vsel %vm1370, %v849, -inf
          %v1603 = vrot.slane %v1602, 4
          %v1604 = vmax.f32 %v1602, %v1603
          %v1605 = vrot.slane %v1604, 2
          %v1606 = vmax.f32 %v1604, %v1605
          %v1607 = vrot.slane %v1606, 1
          %v1608 = vmax.f32 %v1606, %v1607
          %v1609 = vsel %vm1370, %v848, -inf
          %v1610 = vrot.slane %v1609, 4
          %v1611 = vmax.f32 %v1609, %v1610
          %v1612 = vrot.slane %v1611, 2
          %v1613 = vmax.f32 %v1611, %v1612
          %v1614 = vrot.slane %v1613, 1
          %v1615 = vmax.f32 %v1613, %v1614
          %v1616 = vsel %vm1370, %v850, -inf
          %v1617 = vrot.slane %v1616, 4
          %v1618 = vmax.f32 %v1616, %v1617
          %v1619 = vrot.slane %v1618, 2
          %v1620 = vmax.f32 %v1618, %v1619
          %v1621 = vrot.slane %v1620, 1
          %v1622 = vmax.f32 %v1620, %v1621
          %v1623 = vsel %vm1370, %v858, -inf
          %v1624 = vrot.slane %v1623, 4
          %v1625 = vmax.f32 %v1623, %v1624
          %v1626 = vrot.slane %v1625, 2
          %v1627 = vmax.f32 %v1625, %v1626
          %v1628 = vrot.slane %v1627, 1
          %v1629 = vmax.f32 %v1627, %v1628
          %v1630 = vsel %vm1370, %v866, -inf
          %v1631 = vrot.slane %v1630, 4
          %v1632 = vmax.f32 %v1630, %v1631
          %v1633 = vrot.slane %v1632, 2
          %v1634 = vmax.f32 %v1632, %v1633
          %v1635 = vrot.slane %v1634, 1
          %v1636 = vmax.f32 %v1634, %v1635
          %v1637 = vsel %vm1370, %v865, -inf
          %v1638 = vrot.slane %v1637, 4
          %v1639 = vmax.f32 %v1637, %v1638
          %v1640 = vrot.slane %v1639, 2
          %v1641 = vmax.f32 %v1639, %v1640
          %v1642 = vrot.slane %v1641, 1
          %v1643 = vmax.f32 %v1641, %v1642
          %v1644 = vsel %vm1370, %v867, -inf
          %v1645 = vrot.slane %v1644, 4
          %v1646 = vmax.f32 %v1644, %v1645
          %v1647 = vrot.slane %v1646, 2
          %v1648 = vmax.f32 %v1646, %v1647
          %v1649 = vrot.slane %v1648, 1
          %v1650 = vmax.f32 %v1648, %v1649
          %v1651 = vsel %vm1370, %v875, -inf
          %v1652 = vrot.slane %v1651, 4
          %v1653 = vmax.f32 %v1651, %v1652
          %v1654 = vrot.slane %v1653, 2
          %v1655 = vmax.f32 %v1653, %v1654
          %v1656 = vrot.slane %v1655, 1
          %v1657 = vmax.f32 %v1655, %v1656
          %v1658 = vsel %vm1370, %v883, -inf
          %v1659 = vrot.slane %v1658, 4
          %v1660 = vmax.f32 %v1658, %v1659
          %v1661 = vrot.slane %v1660, 2
          %v1662 = vmax.f32 %v1660, %v1661
          %v1663 = vrot.slane %v1662, 1
          %v1664 = vmax.f32 %v1662, %v1663
          %v1665 = vsel %vm1370, %v882, -inf
          %v1666 = vrot.slane %v1665, 4
          %v1667 = vmax.f32 %v1665, %v1666
          %v1668 = vrot.slane %v1667, 2
          %v1669 = vmax.f32 %v1667, %v1668
          %v1670 = vrot.slane %v1669, 1
          %v1671 = vmax.f32 %v1669, %v1670
          %v1672 = vsel %vm1370, %v884, -inf
          %v1673 = vrot.slane %v1672, 4
          %v1674 = vmax.f32 %v1672, %v1673
          %v1675 = vrot.slane %v1674, 2
          %v1676 = vmax.f32 %v1674, %v1675
          %v1677 = vrot.slane %v1676, 1
          %v1678 = vmax.f32 %v1676, %v1677
          %v1679 = vsel %vm1370, %v892, -inf
          %v1680 = vrot.slane %v1679, 4
          %v1681 = vmax.f32 %v1679, %v1680
          %v1682 = vrot.slane %v1681, 2
          %v1683 = vmax.f32 %v1681, %v1682
          %v1684 = vrot.slane %v1683, 1
          %v1685 = vmax.f32 %v1683, %v1684
          %v1686 = vsel %vm1370, %v900, -inf
          %v1687 = vrot.slane %v1686, 4
          %v1688 = vmax.f32 %v1686, %v1687
          %v1689 = vrot.slane %v1688, 2
          %v1690 = vmax.f32 %v1688, %v1689
          %v1691 = vrot.slane %v1690, 1
          %v1692 = vmax.f32 %v1690, %v1691
          %v1693 = vsel %vm1370, %v899, -inf
          %v1694 = vrot.slane %v1693, 4
          %v1695 = vmax.f32 %v1693, %v1694
          %v1696 = vrot.slane %v1695, 2
          %v1697 = vmax.f32 %v1695, %v1696
          %v1698 = vrot.slane %v1697, 1
          %v1699 = vmax.f32 %v1697, %v1698
          %v1700 = vsel %vm1370, %v901, -inf
          %v1701 = vrot.slane %v1700, 4
          %v1702 = vmax.f32 %v1700, %v1701
          %v1703 = vrot.slane %v1702, 2
          %v1704 = vmax.f32 %v1702, %v1703
          %v1705 = vrot.slane %v1704, 1
          %v1706 = vmax.f32 %v1704, %v1705
          %v1707 = vsel %vm1370, %v909, -inf
          %v1708 = vrot.slane %v1707, 4
          %v1709 = vmax.f32 %v1707, %v1708
          %v1710 = vrot.slane %v1709, 2
          %v1711 = vmax.f32 %v1709, %v1710
          %v1712 = vrot.slane %v1711, 1
          %v1713 = vmax.f32 %v1711, %v1712
          %v1714 = vsel %vm1370, %v917, -inf
          %v1715 = vrot.slane %v1714, 4
          %v1716 = vmax.f32 %v1714, %v1715
          %v1717 = vrot.slane %v1716, 2
          %v1718 = vmax.f32 %v1716, %v1717
          %v1719 = vrot.slane %v1718, 1
          %v1720 = vmax.f32 %v1718, %v1719
          %v1721 = vsel %vm1370, %v916, -inf
          %v1722 = vrot.slane %v1721, 4
          %v1723 = vmax.f32 %v1721, %v1722
          %v1724 = vrot.slane %v1723, 2
          %v1725 = vmax.f32 %v1723, %v1724
          %v1726 = vrot.slane %v1725, 1
          %v1727 = vmax.f32 %v1725, %v1726
          %v1728 = vsel %vm1370, %v918, -inf
          %v1729 = vrot.slane %v1728, 4
          %v1730 = vmax.f32 %v1728, %v1729
          %v1731 = vrot.slane %v1730, 2
          %v1732 = vmax.f32 %v1730, %v1731
          %v1733 = vrot.slane %v1732, 1
          %v1734 = vmax.f32 %v1732, %v1733
          %v1735 = vsel %vm1370, %v926, -inf
          %v1736 = vrot.slane %v1735, 4
          %v1737 = vmax.f32 %v1735, %v1736
          %v1738 = vrot.slane %v1737, 2
          %v1739 = vmax.f32 %v1737, %v1738
          %v1740 = vrot.slane %v1739, 1
          %v1741 = vmax.f32 %v1739, %v1740
          %v1742 = vsel %vm1370, %v934, -inf
          %v1743 = vrot.slane %v1742, 4
          %v1744 = vmax.f32 %v1742, %v1743
          %v1745 = vrot.slane %v1744, 2
          %v1746 = vmax.f32 %v1744, %v1745
          %v1747 = vrot.slane %v1746, 1
          %v1748 = vmax.f32 %v1746, %v1747
          %v1749 = vsel %vm1370, %v933, -inf
          %v1750 = vrot.slane %v1749, 4
          %v1751 = vmax.f32 %v1749, %v1750
          %v1752 = vrot.slane %v1751, 2
          %v1753 = vmax.f32 %v1751, %v1752
          %v1754 = vrot.slane %v1753, 1
          %v1755 = vmax.f32 %v1753, %v1754
          %v1756 = vsel %vm1370, %v935, -inf
          %v1757 = vrot.slane %v1756, 4
          %v1758 = vmax.f32 %v1756, %v1757
          %v1759 = vrot.slane %v1758, 2
          %v1760 = vmax.f32 %v1758, %v1759
          %v1761 = vrot.slane %v1760, 1
          %v1762 = vmax.f32 %v1760, %v1761
          %v1763 = vsel %vm1370, %v943, -inf
          %v1764 = vrot.slane %v1763, 4
          %v1765 = vmax.f32 %v1763, %v1764
          %v1766 = vrot.slane %v1765, 2
          %v1767 = vmax.f32 %v1765, %v1766
          %v1768 = vrot.slane %v1767, 1
          %v1769 = vmax.f32 %v1767, %v1768
          %v1770 = vsel %vm1370, %v951, -inf
          %v1771 = vrot.slane %v1770, 4
          %v1772 = vmax.f32 %v1770, %v1771
          %v1773 = vrot.slane %v1772, 2
          %v1774 = vmax.f32 %v1772, %v1773
          %v1775 = vrot.slane %v1774, 1
          %v1776 = vmax.f32 %v1774, %v1775
          %v1777 = vsel %vm1370, %v950, -inf
          %v1778 = vrot.slane %v1777, 4
          %v1779 = vmax.f32 %v1777, %v1778
          %v1780 = vrot.slane %v1779, 2
          %v1781 = vmax.f32 %v1779, %v1780
          %v1782 = vrot.slane %v1781, 1
          %v1783 = vmax.f32 %v1781, %v1782
          %v1784 = vsel %vm1370, %v952, -inf
          %v1785 = vrot.slane %v1784, 4
          %v1786 = vmax.f32 %v1784, %v1785
          %v1787 = vrot.slane %v1786, 2
          %v1788 = vmax.f32 %v1786, %v1787
          %v1789 = vrot.slane %v1788, 1
          %v1790 = vmax.f32 %v1788, %v1789
          %v1791 = vsel %vm1370, %v960, -inf
          %v1792 = vrot.slane %v1791, 4
          %v1793 = vmax.f32 %v1791, %v1792
          %v1794 = vrot.slane %v1793, 2
          %v1795 = vmax.f32 %v1793, %v1794
          %v1796 = vrot.slane %v1795, 1
          %v1797 = vmax.f32 %v1795, %v1796
          %v1798 = vsel %vm1370, %v968, -inf
          %v1799 = vrot.slane %v1798, 4
          %v1800 = vmax.f32 %v1798, %v1799
          %v1801 = vrot.slane %v1800, 2
          %v1802 = vmax.f32 %v1800, %v1801
          %v1803 = vrot.slane %v1802, 1
          %v1804 = vmax.f32 %v1802, %v1803
          %v1805 = vsel %vm1370, %v967, -inf
          %v1806 = vrot.slane %v1805, 4
          %v1807 = vmax.f32 %v1805, %v1806
          %v1808 = vrot.slane %v1807, 2
          %v1809 = vmax.f32 %v1807, %v1808
          %v1810 = vrot.slane %v1809, 1
          %v1811 = vmax.f32 %v1809, %v1810
          %v1812 = vsel %vm1370, %v969, -inf
          %v1813 = vrot.slane %v1812, 4
          %v1814 = vmax.f32 %v1812, %v1813
          %v1815 = vrot.slane %v1814, 2
          %v1816 = vmax.f32 %v1814, %v1815
          %v1817 = vrot.slane %v1816, 1
          %v1818 = vmax.f32 %v1816, %v1817
          %v1819 = vsel %vm1370, %v977, -inf
          %v1820 = vrot.slane %v1819, 4
          %v1821 = vmax.f32 %v1819, %v1820
          %v1822 = vrot.slane %v1821, 2
          %v1823 = vmax.f32 %v1821, %v1822
          %v1824 = vrot.slane %v1823, 1
          %v1825 = vmax.f32 %v1823, %v1824
          %v1826 = vsel %vm1370, %v985, -inf
          %v1827 = vrot.slane %v1826, 4
          %v1828 = vmax.f32 %v1826, %v1827
          %v1829 = vrot.slane %v1828, 2
          %v1830 = vmax.f32 %v1828, %v1829
          %v1831 = vrot.slane %v1830, 1
          %v1832 = vmax.f32 %v1830, %v1831
          %v1833 = vsel %vm1370, %v984, -inf
          %v1834 = vrot.slane %v1833, 4
          %v1835 = vmax.f32 %v1833, %v1834
          %v1836 = vrot.slane %v1835, 2
          %v1837 = vmax.f32 %v1835, %v1836
          %v1838 = vrot.slane %v1837, 1
          %v1839 = vmax.f32 %v1837, %v1838
          %v1840 = vsel %vm1370, %v986, -inf
          %v1841 = vrot.slane %v1840, 4
          %v1842 = vmax.f32 %v1840, %v1841
          %v1843 = vrot.slane %v1842, 2
          %v1844 = vmax.f32 %v1842, %v1843
          %v1845 = vrot.slane %v1844, 1
          %v1846 = vmax.f32 %v1844, %v1845
          %v1847 = vsel %vm1370, %v994, -inf
          %v1848 = vrot.slane %v1847, 4
          %v1849 = vmax.f32 %v1847, %v1848
          %v1850 = vrot.slane %v1849, 2
          %v1851 = vmax.f32 %v1849, %v1850
          %v1852 = vrot.slane %v1851, 1
          %v1853 = vmax.f32 %v1851, %v1852
          %v1854 = vsel %vm1370, %v1002, -inf
          %v1855 = vrot.slane %v1854, 4
          %v1856 = vmax.f32 %v1854, %v1855
          %v1857 = vrot.slane %v1856, 2
          %v1858 = vmax.f32 %v1856, %v1857
          %v1859 = vrot.slane %v1858, 1
          %v1860 = vmax.f32 %v1858, %v1859
          %v1861 = vsel %vm1370, %v1001, -inf
          %v1862 = vrot.slane %v1861, 4
          %v1863 = vmax.f32 %v1861, %v1862
          %v1864 = vrot.slane %v1863, 2
          %v1865 = vmax.f32 %v1863, %v1864
          %v1866 = vrot.slane %v1865, 1
          %v1867 = vmax.f32 %v1865, %v1866
          %v1868 = vsel %vm1370, %v1003, -inf
          %v1869 = vrot.slane %v1868, 4
          %v1870 = vmax.f32 %v1868, %v1869
          %v1871 = vrot.slane %v1870, 2
          %v1872 = vmax.f32 %v1870, %v1871
          %v1873 = vrot.slane %v1872, 1
          %v1874 = vmax.f32 %v1872, %v1873
          %v1875 = vsel %vm1370, %v1011, -inf
          %v1876 = vrot.slane %v1875, 4
          %v1877 = vmax.f32 %v1875, %v1876
          %v1878 = vrot.slane %v1877, 2
          %v1879 = vmax.f32 %v1877, %v1878
          %v1880 = vrot.slane %v1879, 1
          %v1881 = vmax.f32 %v1879, %v1880
          %v1882 = vsel %vm1370, %v1019, -inf
          %v1883 = vrot.slane %v1882, 4
          %v1884 = vmax.f32 %v1882, %v1883
          %v1885 = vrot.slane %v1884, 2
          %v1886 = vmax.f32 %v1884, %v1885
          %v1887 = vrot.slane %v1886, 1
          %v1888 = vmax.f32 %v1886, %v1887
          %v1889 = vsel %vm1370, %v1018, -inf
          %v1890 = vrot.slane %v1889, 4
          %v1891 = vmax.f32 %v1889, %v1890
          %v1892 = vrot.slane %v1891, 2
          %v1893 = vmax.f32 %v1891, %v1892
          %v1894 = vrot.slane %v1893, 1
          %v1895 = vmax.f32 %v1893, %v1894
          %v1896 = vsel %vm1370, %v1020, -inf
          %v1897 = vrot.slane %v1896, 4
          %v1898 = vmax.f32 %v1896, %v1897
          %v1899 = vrot.slane %v1898, 2
          %v1900 = vmax.f32 %v1898, %v1899
          %v1901 = vrot.slane %v1900, 1
          %v1902 = vmax.f32 %v1900, %v1901
          %v1903 = vsel %vm1370, %v1028, -inf
          %v1904 = vrot.slane %v1903, 4
          %v1905 = vmax.f32 %v1903, %v1904
          %v1906 = vrot.slane %v1905, 2
          %v1907 = vmax.f32 %v1905, %v1906
          %v1908 = vrot.slane %v1907, 1
          %v1909 = vmax.f32 %v1907, %v1908
          %v1910 = vsel %vm1370, %v1036, -inf
          %v1911 = vrot.slane %v1910, 4
          %v1912 = vmax.f32 %v1910, %v1911
          %v1913 = vrot.slane %v1912, 2
          %v1914 = vmax.f32 %v1912, %v1913
          %v1915 = vrot.slane %v1914, 1
          %v1916 = vmax.f32 %v1914, %v1915
          %v1917 = vsel %vm1370, %v1035, -inf
          %v1918 = vrot.slane %v1917, 4
          %v1919 = vmax.f32 %v1917, %v1918
          %v1920 = vrot.slane %v1919, 2
          %v1921 = vmax.f32 %v1919, %v1920
          %v1922 = vrot.slane %v1921, 1
          %v1923 = vmax.f32 %v1921, %v1922
          %v1924 = vsel %vm1370, %v1037, -inf
          %v1925 = vrot.slane %v1924, 4
          %v1926 = vmax.f32 %v1924, %v1925
          %v1927 = vrot.slane %v1926, 2
          %v1928 = vmax.f32 %v1926, %v1927
          %v1929 = vrot.slane %v1928, 1
          %v1930 = vmax.f32 %v1928, %v1929
          %v1931 = vsel %vm1370, %v1045, -inf
          %v1932 = vrot.slane %v1931, 4
          %v1933 = vmax.f32 %v1931, %v1932
          %v1934 = vrot.slane %v1933, 2
          %v1935 = vmax.f32 %v1933, %v1934
          %v1936 = vrot.slane %v1935, 1
          %v1937 = vmax.f32 %v1935, %v1936
          %v1938 = vsel %vm1370, %v1053, -inf
          %v1939 = vrot.slane %v1938, 4
          %v1940 = vmax.f32 %v1938, %v1939
          %v1941 = vrot.slane %v1940, 2
          %v1942 = vmax.f32 %v1940, %v1941
          %v1943 = vrot.slane %v1942, 1
          %v1944 = vmax.f32 %v1942, %v1943
          %v1945 = vsel %vm1370, %v1052, -inf
          %v1946 = vrot.slane %v1945, 4
          %v1947 = vmax.f32 %v1945, %v1946
          %v1948 = vrot.slane %v1947, 2
          %v1949 = vmax.f32 %v1947, %v1948
          %v1950 = vrot.slane %v1949, 1
          %v1951 = vmax.f32 %v1949, %v1950
          %v1952 = vsel %vm1370, %v1054, -inf
          %v1953 = vrot.slane %v1952, 4
          %v1954 = vmax.f32 %v1952, %v1953
          %v1955 = vrot.slane %v1954, 2
          %v1956 = vmax.f32 %v1954, %v1955
          %v1957 = vrot.slane %v1956, 1
          %v1958 = vmax.f32 %v1956, %v1957
          %v1959 = vsel %vm1370, %v1062, -inf
          %v1960 = vrot.slane %v1959, 4
          %v1961 = vmax.f32 %v1959, %v1960
          %v1962 = vrot.slane %v1961, 2
          %v1963 = vmax.f32 %v1961, %v1962
          %v1964 = vrot.slane %v1963, 1
          %v1965 = vmax.f32 %v1963, %v1964
          %v1966 = vsel %vm1370, %v1070, -inf
          %v1967 = vrot.slane %v1966, 4
          %v1968 = vmax.f32 %v1966, %v1967
          %v1969 = vrot.slane %v1968, 2
          %v1970 = vmax.f32 %v1968, %v1969
          %v1971 = vrot.slane %v1970, 1
          %v1972 = vmax.f32 %v1970, %v1971
          %v1973 = vsel %vm1370, %v1069, -inf
          %v1974 = vrot.slane %v1973, 4
          %v1975 = vmax.f32 %v1973, %v1974
          %v1976 = vrot.slane %v1975, 2
          %v1977 = vmax.f32 %v1975, %v1976
          %v1978 = vrot.slane %v1977, 1
          %v1979 = vmax.f32 %v1977, %v1978
          %v1980 = vsel %vm1370, %v1071, -inf
          %v1981 = vrot.slane %v1980, 4
          %v1982 = vmax.f32 %v1980, %v1981
          %v1983 = vrot.slane %v1982, 2
          %v1984 = vmax.f32 %v1982, %v1983
          %v1985 = vrot.slane %v1984, 1
          %v1986 = vmax.f32 %v1984, %v1985
          %v1987 = vsel %vm1370, %v1079, -inf
          %v1988 = vrot.slane %v1987, 4
          %v1989 = vmax.f32 %v1987, %v1988
          %v1990 = vrot.slane %v1989, 2
          %v1991 = vmax.f32 %v1989, %v1990
          %v1992 = vrot.slane %v1991, 1
          %v1993 = vmax.f32 %v1991, %v1992
          %v1994 = vsel %vm1370, %v1087, -inf
          %v1995 = vrot.slane %v1994, 4
          %v1996 = vmax.f32 %v1994, %v1995
          %v1997 = vrot.slane %v1996, 2
          %v1998 = vmax.f32 %v1996, %v1997
          %v1999 = vrot.slane %v1998, 1
          %v2000 = vmax.f32 %v1998, %v1999
          %v2001 = vsel %vm1370, %v1086, -inf
          %v2002 = vrot.slane %v2001, 4
          %v2003 = vmax.f32 %v2001, %v2002
          %v2004 = vrot.slane %v2003, 2
          %v2005 = vmax.f32 %v2003, %v2004
          %v2006 = vrot.slane %v2005, 1
          %v2007 = vmax.f32 %v2005, %v2006
          %v2008 = vsel %vm1370, %v1088, -inf
          %v2009 = vrot.slane %v2008, 4
          %v2010 = vmax.f32 %v2008, %v2009
          %v2011 = vrot.slane %v2010, 2
          %v2012 = vmax.f32 %v2010, %v2011
          %v2013 = vrot.slane %v2012, 1
          %v2014 = vmax.f32 %v2012, %v2013
          %v2015 = vsel %vm1370, %v1096, -inf
          %v2016 = vrot.slane %v2015, 4
          %v2017 = vmax.f32 %v2015, %v2016
          %v2018 = vrot.slane %v2017, 2
          %v2019 = vmax.f32 %v2017, %v2018
          %v2020 = vrot.slane %v2019, 1
          %v2021 = vmax.f32 %v2019, %v2020
          %v2022 = vsel %vm1370, %v1104, -inf
          %v2023 = vrot.slane %v2022, 4
          %v2024 = vmax.f32 %v2022, %v2023
          %v2025 = vrot.slane %v2024, 2
          %v2026 = vmax.f32 %v2024, %v2025
          %v2027 = vrot.slane %v2026, 1
          %v2028 = vmax.f32 %v2026, %v2027
          %v2029 = vsel %vm1370, %v1103, -inf
          %v2030 = vrot.slane %v2029, 4
          %v2031 = vmax.f32 %v2029, %v2030
          %v2032 = vrot.slane %v2031, 2
          %v2033 = vmax.f32 %v2031, %v2032
          %v2034 = vrot.slane %v2033, 1
          %v2035 = vmax.f32 %v2033, %v2034
          %v2036 = vsel %vm1370, %v1105, -inf
          %v2037 = vrot.slane %v2036, 4
          %v2038 = vmax.f32 %v2036, %v2037
          %v2039 = vrot.slane %v2038, 2
          %v2040 = vmax.f32 %v2038, %v2039
          %v2041 = vrot.slane %v2040, 1
          %v2042 = vmax.f32 %v2040, %v2041
          %v2043 = vsel %vm1370, %v1113, -inf
          %v2044 = vrot.slane %v2043, 4
          %v2045 = vmax.f32 %v2043, %v2044
          %v2046 = vrot.slane %v2045, 2
          %v2047 = vmax.f32 %v2045, %v2046
          %v2048 = vrot.slane %v2047, 1
          %v2049 = vmax.f32 %v2047, %v2048
          %v2050 = vsel %vm1370, %v1121, -inf
          %v2051 = vrot.slane %v2050, 4
          %v2052 = vmax.f32 %v2050, %v2051
          %v2053 = vrot.slane %v2052, 2
          %v2054 = vmax.f32 %v2052, %v2053
          %v2055 = vrot.slane %v2054, 1
          %v2056 = vmax.f32 %v2054, %v2055
          %v2057 = vsel %vm1370, %v1120, -inf
          %v2058 = vrot.slane %v2057, 4
          %v2059 = vmax.f32 %v2057, %v2058
          %v2060 = vrot.slane %v2059, 2
          %v2061 = vmax.f32 %v2059, %v2060
          %v2062 = vrot.slane %v2061, 1
          %v2063 = vmax.f32 %v2061, %v2062
          %v2064 = vsel %vm1370, %v1122, -inf
          %v2065 = vrot.slane %v2064, 4
          %v2066 = vmax.f32 %v2064, %v2065
          %v2067 = vrot.slane %v2066, 2
          %v2068 = vmax.f32 %v2066, %v2067
          %v2069 = vrot.slane %v2068, 1
          %v2070 = vmax.f32 %v2068, %v2069
          %v2071 = vsel %vm1370, %v1130, -inf
          %v2072 = vrot.slane %v2071, 4
          %v2073 = vmax.f32 %v2071, %v2072
          %v2074 = vrot.slane %v2073, 2
          %v2075 = vmax.f32 %v2073, %v2074
          %v2076 = vrot.slane %v2075, 1
          %v2077 = vmax.f32 %v2075, %v2076
          %v2078 = vsel %vm1370, %v1138, -inf
          %v2079 = vrot.slane %v2078, 4
          %v2080 = vmax.f32 %v2078, %v2079
          %v2081 = vrot.slane %v2080, 2
          %v2082 = vmax.f32 %v2080, %v2081
          %v2083 = vrot.slane %v2082, 1
          %v2084 = vmax.f32 %v2082, %v2083
          %v2085 = vsel %vm1370, %v1137, -inf
          %v2086 = vrot.slane %v2085, 4
          %v2087 = vmax.f32 %v2085, %v2086
          %v2088 = vrot.slane %v2087, 2
          %v2089 = vmax.f32 %v2087, %v2088
          %v2090 = vrot.slane %v2089, 1
          %v2091 = vmax.f32 %v2089, %v2090
          %v2092 = vsel %vm1370, %v1139, -inf
          %v2093 = vrot.slane %v2092, 4
          %v2094 = vmax.f32 %v2092, %v2093
          %v2095 = vrot.slane %v2094, 2
          %v2096 = vmax.f32 %v2094, %v2095
          %v2097 = vrot.slane %v2096, 1
          %v2098 = vmax.f32 %v2096, %v2097
          %v2099 = vsel %vm1370, %v1147, -inf
          %v2100 = vrot.slane %v2099, 4
          %v2101 = vmax.f32 %v2099, %v2100
          %v2102 = vrot.slane %v2101, 2
          %v2103 = vmax.f32 %v2101, %v2102
          %v2104 = vrot.slane %v2103, 1
          %v2105 = vmax.f32 %v2103, %v2104
          %v2106 = vsel %vm1370, %v1155, -inf
          %v2107 = vrot.slane %v2106, 4
          %v2108 = vmax.f32 %v2106, %v2107
          %v2109 = vrot.slane %v2108, 2
          %v2110 = vmax.f32 %v2108, %v2109
          %v2111 = vrot.slane %v2110, 1
          %v2112 = vmax.f32 %v2110, %v2111
          %v2113 = vsel %vm1370, %v1154, -inf
          %v2114 = vrot.slane %v2113, 4
          %v2115 = vmax.f32 %v2113, %v2114
          %v2116 = vrot.slane %v2115, 2
          %v2117 = vmax.f32 %v2115, %v2116
          %v2118 = vrot.slane %v2117, 1
          %v2119 = vmax.f32 %v2117, %v2118
          %v2120 = vsel %vm1370, %v1156, -inf
          %v2121 = vrot.slane %v2120, 4
          %v2122 = vmax.f32 %v2120, %v2121
          %v2123 = vrot.slane %v2122, 2
          %v2124 = vmax.f32 %v2122, %v2123
          %v2125 = vrot.slane %v2124, 1
          %v2126 = vmax.f32 %v2124, %v2125
          %v2127 = vsel %vm1370, %v1164, -inf
          %v2128 = vrot.slane %v2127, 4
          %v2129 = vmax.f32 %v2127, %v2128
          %v2130 = vrot.slane %v2129, 2
          %v2131 = vmax.f32 %v2129, %v2130
          %v2132 = vrot.slane %v2131, 1
          %v2133 = vmax.f32 %v2131, %v2132
          %v2134 = vsel %vm1370, %v1172, -inf
          %v2135 = vrot.slane %v2134, 4
          %v2136 = vmax.f32 %v2134, %v2135
          %v2137 = vrot.slane %v2136, 2
          %v2138 = vmax.f32 %v2136, %v2137
          %v2139 = vrot.slane %v2138, 1
          %v2140 = vmax.f32 %v2138, %v2139
          %v2141 = vsel %vm1370, %v1171, -inf
          %v2142 = vrot.slane %v2141, 4
          %v2143 = vmax.f32 %v2141, %v2142
          %v2144 = vrot.slane %v2143, 2
          %v2145 = vmax.f32 %v2143, %v2144
          %v2146 = vrot.slane %v2145, 1
          %v2147 = vmax.f32 %v2145, %v2146
          %v2148 = vsel %vm1370, %v1173, -inf
          %v2149 = vrot.slane %v2148, 4
          %v2150 = vmax.f32 %v2148, %v2149
          %v2151 = vrot.slane %v2150, 2
          %v2152 = vmax.f32 %v2150, %v2151
          %v2153 = vrot.slane %v2152, 1
          %v2154 = vmax.f32 %v2152, %v2153
          %v2155 = vsel %vm1370, %v1181, -inf
          %v2156 = vrot.slane %v2155, 4
          %v2157 = vmax.f32 %v2155, %v2156
          %v2158 = vrot.slane %v2157, 2
          %v2159 = vmax.f32 %v2157, %v2158
          %v2160 = vrot.slane %v2159, 1
          %v2161 = vmax.f32 %v2159, %v2160
          %v2162 = vsel %vm1370, %v1189, -inf
          %v2163 = vrot.slane %v2162, 4
          %v2164 = vmax.f32 %v2162, %v2163
          %v2165 = vrot.slane %v2164, 2
          %v2166 = vmax.f32 %v2164, %v2165
          %v2167 = vrot.slane %v2166, 1
          %v2168 = vmax.f32 %v2166, %v2167
          %v2169 = vsel %vm1370, %v1188, -inf
          %v2170 = vrot.slane %v2169, 4
          %v2171 = vmax.f32 %v2169, %v2170
          %v2172 = vrot.slane %v2171, 2
          %v2173 = vmax.f32 %v2171, %v2172
          %v2174 = vrot.slane %v2173, 1
          %v2175 = vmax.f32 %v2173, %v2174
          %v2176 = vsel %vm1370, %v1190, -inf
          %v2177 = vrot.slane %v2176, 4
          %v2178 = vmax.f32 %v2176, %v2177
          %v2179 = vrot.slane %v2178, 2
          %v2180 = vmax.f32 %v2178, %v2179
          %v2181 = vrot.slane %v2180, 1
          %v2182 = vmax.f32 %v2180, %v2181
          %v2183 = vsel %vm1370, %v1198, -inf
          %v2184 = vrot.slane %v2183, 4
          %v2185 = vmax.f32 %v2183, %v2184
          %v2186 = vrot.slane %v2185, 2
          %v2187 = vmax.f32 %v2185, %v2186
          %v2188 = vrot.slane %v2187, 1
          %v2189 = vmax.f32 %v2187, %v2188
          %v2190 = vsel %vm1370, %v1206, -inf
          %v2191 = vrot.slane %v2190, 4
          %v2192 = vmax.f32 %v2190, %v2191
          %v2193 = vrot.slane %v2192, 2
          %v2194 = vmax.f32 %v2192, %v2193
          %v2195 = vrot.slane %v2194, 1
          %v2196 = vmax.f32 %v2194, %v2195
          %v2197 = vsel %vm1370, %v1205, -inf
          %v2198 = vrot.slane %v2197, 4
          %v2199 = vmax.f32 %v2197, %v2198
          %v2200 = vrot.slane %v2199, 2
          %v2201 = vmax.f32 %v2199, %v2200
          %v2202 = vrot.slane %v2201, 1
          %v2203 = vmax.f32 %v2201, %v2202
          %v2204 = vsel %vm1370, %v1207, -inf
          %v2205 = vrot.slane %v2204, 4
          %v2206 = vmax.f32 %v2204, %v2205
          %v2207 = vrot.slane %v2206, 2
          %v2208 = vmax.f32 %v2206, %v2207
          %v2209 = vrot.slane %v2208, 1
          %v2210 = vmax.f32 %v2208, %v2209
          %v2211 = vsel %vm1370, %v1215, -inf
          %v2212 = vrot.slane %v2211, 4
          %v2213 = vmax.f32 %v2211, %v2212
          %v2214 = vrot.slane %v2213, 2
          %v2215 = vmax.f32 %v2213, %v2214
          %v2216 = vrot.slane %v2215, 1
          %v2217 = vmax.f32 %v2215, %v2216
          %v2218 = vsel %vm1370, %v1223, -inf
          %v2219 = vrot.slane %v2218, 4
          %v2220 = vmax.f32 %v2218, %v2219
          %v2221 = vrot.slane %v2220, 2
          %v2222 = vmax.f32 %v2220, %v2221
          %v2223 = vrot.slane %v2222, 1
          %v2224 = vmax.f32 %v2222, %v2223
          %v2225 = vsel %vm1370, %v1222, -inf
          %v2226 = vrot.slane %v2225, 4
          %v2227 = vmax.f32 %v2225, %v2226
          %v2228 = vrot.slane %v2227, 2
          %v2229 = vmax.f32 %v2227, %v2228
          %v2230 = vrot.slane %v2229, 1
          %v2231 = vmax.f32 %v2229, %v2230
          %v2232 = vsel %vm1370, %v1224, -inf
          %v2233 = vrot.slane %v2232, 4
          %v2234 = vmax.f32 %v2232, %v2233
          %v2235 = vrot.slane %v2234, 2
          %v2236 = vmax.f32 %v2234, %v2235
          %v2237 = vrot.slane %v2236, 1
          %v2238 = vmax.f32 %v2236, %v2237
          %v2239 = vsel %vm1370, %v1232, -inf
          %v2240 = vrot.slane %v2239, 4
          %v2241 = vmax.f32 %v2239, %v2240
          %v2242 = vrot.slane %v2241, 2
          %v2243 = vmax.f32 %v2241, %v2242
          %v2244 = vrot.slane %v2243, 1
          %v2245 = vmax.f32 %v2243, %v2244
          %v2246 = vsel %vm1370, %v1240, -inf
          %v2247 = vrot.slane %v2246, 4
          %v2248 = vmax.f32 %v2246, %v2247
          %v2249 = vrot.slane %v2248, 2
          %v2250 = vmax.f32 %v2248, %v2249
          %v2251 = vrot.slane %v2250, 1
          %v2252 = vmax.f32 %v2250, %v2251
          %v2253 = vsel %vm1370, %v1239, -inf
          %v2254 = vrot.slane %v2253, 4
          %v2255 = vmax.f32 %v2253, %v2254
          %v2256 = vrot.slane %v2255, 2
          %v2257 = vmax.f32 %v2255, %v2256
          %v2258 = vrot.slane %v2257, 1
          %v2259 = vmax.f32 %v2257, %v2258
          %v2260 = vsel %vm1370, %v1241, -inf
          %v2261 = vrot.slane %v2260, 4
          %v2262 = vmax.f32 %v2260, %v2261
          %v2263 = vrot.slane %v2262, 2
          %v2264 = vmax.f32 %v2262, %v2263
          %v2265 = vrot.slane %v2264, 1
          %v2266 = vmax.f32 %v2264, %v2265
          %vm2267 = vcmask 162816
          %v2268 = vsel %vm2267, %v1377, -inf
          %v2269 = vsel %vm2267, %v1433, -inf
          %v2270 = vmax.f32 %v2268, %v2269
          %v2271 = vsel %vm2267, %v1384, -inf
          %v2272 = vsel %vm2267, %v1440, -inf
          %v2273 = vmax.f32 %v2271, %v2272
          %v2274 = vsel %vm2267, %v1391, -inf
          %v2275 = vsel %vm2267, %v1447, -inf
          %v2276 = vmax.f32 %v2274, %v2275
          %v2277 = vsel %vm2267, %v1398, -inf
          %v2278 = vsel %vm2267, %v1454, -inf
          %v2279 = vmax.f32 %v2277, %v2278
          %v2280 = vsel %vm2267, %v1405, -inf
          %v2281 = vsel %vm2267, %v1461, -inf
          %v2282 = vmax.f32 %v2280, %v2281
          %v2283 = vsel %vm2267, %v1412, -inf
          %v2284 = vsel %vm2267, %v1468, -inf
          %v2285 = vmax.f32 %v2283, %v2284
          %v2286 = vsel %vm2267, %v1419, -inf
          %v2287 = vsel %vm2267, %v1475, -inf
          %v2288 = vmax.f32 %v2286, %v2287
          %v2289 = vsel %vm2267, %v1426, -inf
          %v2290 = vsel %vm2267, %v1482, -inf
          %v2291 = vmax.f32 %v2289, %v2290
          %v2292 = vsel %vm2267, %v1489, -inf
          %v2293 = vsel %vm2267, %v1545, -inf
          %v2294 = vmax.f32 %v2292, %v2293
          %v2295 = vsel %vm2267, %v1496, -inf
          %v2296 = vsel %vm2267, %v1552, -inf
          %v2297 = vmax.f32 %v2295, %v2296
          %v2298 = vsel %vm2267, %v1503, -inf
          %v2299 = vsel %vm2267, %v1559, -inf
          %v2300 = vmax.f32 %v2298, %v2299
          %v2301 = vsel %vm2267, %v1510, -inf
          %v2302 = vsel %vm2267, %v1566, -inf
          %v2303 = vmax.f32 %v2301, %v2302
          %v2304 = vsel %vm2267, %v1517, -inf
          %v2305 = vsel %vm2267, %v1573, -inf
          %v2306 = vmax.f32 %v2304, %v2305
          %v2307 = vsel %vm2267, %v1524, -inf
          %v2308 = vsel %vm2267, %v1580, -inf
          %v2309 = vmax.f32 %v2307, %v2308
          %v2310 = vsel %vm2267, %v1531, -inf
          %v2311 = vsel %vm2267, %v1587, -inf
          %v2312 = vmax.f32 %v2310, %v2311
          %v2313 = vsel %vm2267, %v1538, -inf
          %v2314 = vsel %vm2267, %v1594, -inf
          %v2315 = vmax.f32 %v2313, %v2314
          %v2316 = vsel %vm2267, %v1601, -inf
          %v2317 = vsel %vm2267, %v1657, -inf
          %v2318 = vmax.f32 %v2316, %v2317
          %v2319 = vsel %vm2267, %v1608, -inf
          %v2320 = vsel %vm2267, %v1664, -inf
          %v2321 = vmax.f32 %v2319, %v2320
          %v2322 = vsel %vm2267, %v1615, -inf
          %v2323 = vsel %vm2267, %v1671, -inf
          %v2324 = vmax.f32 %v2322, %v2323
          %v2325 = vsel %vm2267, %v1622, -inf
          %v2326 = vsel %vm2267, %v1678, -inf
          %v2327 = vmax.f32 %v2325, %v2326
          %v2328 = vsel %vm2267, %v1629, -inf
          %v2329 = vsel %vm2267, %v1685, -inf
          %v2330 = vmax.f32 %v2328, %v2329
          %v2331 = vsel %vm2267, %v1636, -inf
          %v2332 = vsel %vm2267, %v1692, -inf
          %v2333 = vmax.f32 %v2331, %v2332
          %v2334 = vsel %vm2267, %v1643, -inf
          %v2335 = vsel %vm2267, %v1699, -inf
          %v2336 = vmax.f32 %v2334, %v2335
          %v2337 = vsel %vm2267, %v1650, -inf
          %v2338 = vsel %vm2267, %v1706, -inf
          %v2339 = vmax.f32 %v2337, %v2338
          %v2340 = vsel %vm2267, %v1713, -inf
          %v2341 = vsel %vm2267, %v1769, -inf
          %v2342 = vmax.f32 %v2340, %v2341
          %v2343 = vsel %vm2267, %v1720, -inf
          %v2344 = vsel %vm2267, %v1776, -inf
          %v2345 = vmax.f32 %v2343, %v2344
          %v2346 = vsel %vm2267, %v1727, -inf
          %v2347 = vsel %vm2267, %v1783, -inf
          %v2348 = vmax.f32 %v2346, %v2347
          %v2349 = vsel %vm2267, %v1734, -inf
          %v2350 = vsel %vm2267, %v1790, -inf
          %v2351 = vmax.f32 %v2349, %v2350
          %v2352 = vsel %vm2267, %v1741, -inf
          %v2353 = vsel %vm2267, %v1797, -inf
          %v2354 = vmax.f32 %v2352, %v2353
          %v2355 = vsel %vm2267, %v1748, -inf
          %v2356 = vsel %vm2267, %v1804, -inf
          %v2357 = vmax.f32 %v2355, %v2356
          %v2358 = vsel %vm2267, %v1755, -inf
          %v2359 = vsel %vm2267, %v1811, -inf
          %v2360 = vmax.f32 %v2358, %v2359
          %v2361 = vsel %vm2267, %v1762, -inf
          %v2362 = vsel %vm2267, %v1818, -inf
          %v2363 = vmax.f32 %v2361, %v2362
          %v2364 = vsel %vm2267, %v1825, -inf
          %v2365 = vsel %vm2267, %v1881, -inf
          %v2366 = vmax.f32 %v2364, %v2365
          %v2367 = vsel %vm2267, %v1832, -inf
          %v2368 = vsel %vm2267, %v1888, -inf
          %v2369 = vmax.f32 %v2367, %v2368
          %v2370 = vsel %vm2267, %v1839, -inf
          %v2371 = vsel %vm2267, %v1895, -inf
          %v2372 = vmax.f32 %v2370, %v2371
          %v2373 = vsel %vm2267, %v1846, -inf
          %v2374 = vsel %vm2267, %v1902, -inf
          %v2375 = vmax.f32 %v2373, %v2374
          %v2376 = vsel %vm2267, %v1853, -inf
          %v2377 = vsel %vm2267, %v1909, -inf
          %v2378 = vmax.f32 %v2376, %v2377
          %v2379 = vsel %vm2267, %v1860, -inf
          %v2380 = vsel %vm2267, %v1916, -inf
          %v2381 = vmax.f32 %v2379, %v2380
          %v2382 = vsel %vm2267, %v1867, -inf
          %v2383 = vsel %vm2267, %v1923, -inf
          %v2384 = vmax.f32 %v2382, %v2383
          %v2385 = vsel %vm2267, %v1874, -inf
          %v2386 = vsel %vm2267, %v1930, -inf
          %v2387 = vmax.f32 %v2385, %v2386
          %v2388 = vsel %vm2267, %v1937, -inf
          %v2389 = vsel %vm2267, %v1993, -inf
          %v2390 = vmax.f32 %v2388, %v2389
          %v2391 = vsel %vm2267, %v1944, -inf
          %v2392 = vsel %vm2267, %v2000, -inf
          %v2393 = vmax.f32 %v2391, %v2392
          %v2394 = vsel %vm2267, %v1951, -inf
          %v2395 = vsel %vm2267, %v2007, -inf
          %v2396 = vmax.f32 %v2394, %v2395
          %v2397 = vsel %vm2267, %v1958, -inf
          %v2398 = vsel %vm2267, %v2014, -inf
          %v2399 = vmax.f32 %v2397, %v2398
          %v2400 = vsel %vm2267, %v1965, -inf
          %v2401 = vsel %vm2267, %v2021, -inf
          %v2402 = vmax.f32 %v2400, %v2401
          %v2403 = vsel %vm2267, %v1972, -inf
          %v2404 = vsel %vm2267, %v2028, -inf
          %v2405 = vmax.f32 %v2403, %v2404
          %v2406 = vsel %vm2267, %v1979, -inf
          %v2407 = vsel %vm2267, %v2035, -inf
          %v2408 = vmax.f32 %v2406, %v2407
          %v2409 = vsel %vm2267, %v1986, -inf
          %v2410 = vsel %vm2267, %v2042, -inf
          %v2411 = vmax.f32 %v2409, %v2410
          %v2412 = vsel %vm2267, %v2049, -inf
          %v2413 = vsel %vm2267, %v2105, -inf
          %v2414 = vmax.f32 %v2412, %v2413
          %v2415 = vsel %vm2267, %v2056, -inf
          %v2416 = vsel %vm2267, %v2112, -inf
          %v2417 = vmax.f32 %v2415, %v2416
          %v2418 = vsel %vm2267, %v2063, -inf
          %v2419 = vsel %vm2267, %v2119, -inf
          %v2420 = vmax.f32 %v2418, %v2419
          %v2421 = vsel %vm2267, %v2070, -inf
          %v2422 = vsel %vm2267, %v2126, -inf
          %v2423 = vmax.f32 %v2421, %v2422
          %v2424 = vsel %vm2267, %v2077, -inf
          %v2425 = vsel %vm2267, %v2133, -inf
          %v2426 = vmax.f32 %v2424, %v2425
          %v2427 = vsel %vm2267, %v2084, -inf
          %v2428 = vsel %vm2267, %v2140, -inf
          %v2429 = vmax.f32 %v2427, %v2428
          %v2430 = vsel %vm2267, %v2091, -inf
          %v2431 = vsel %vm2267, %v2147, -inf
          %v2432 = vmax.f32 %v2430, %v2431
          %v2433 = vsel %vm2267, %v2098, -inf
          %v2434 = vsel %vm2267, %v2154, -inf
          %v2435 = vmax.f32 %v2433, %v2434
          %v2436 = vsel %vm2267, %v2161, -inf
          %v2437 = vsel %vm2267, %v2217, -inf
          %v2438 = vmax.f32 %v2436, %v2437
          %v2439 = vsel %vm2267, %v2168, -inf
          %v2440 = vsel %vm2267, %v2224, -inf
          %v2441 = vmax.f32 %v2439, %v2440
          %v2442 = vsel %vm2267, %v2175, -inf
          %v2443 = vsel %vm2267, %v2231, -inf
          %v2444 = vmax.f32 %v2442, %v2443
          %v2445 = vsel %vm2267, %v2182, -inf
          %v2446 = vsel %vm2267, %v2238, -inf
          %v2447 = vmax.f32 %v2445, %v2446
          %v2448 = vsel %vm2267, %v2189, -inf
          %v2449 = vsel %vm2267, %v2245, -inf
          %v2450 = vmax.f32 %v2448, %v2449
          %v2451 = vsel %vm2267, %v2196, -inf
          %v2452 = vsel %vm2267, %v2252, -inf
          %v2453 = vmax.f32 %v2451, %v2452
          %v2454 = vsel %vm2267, %v2203, -inf
          %v2455 = vsel %vm2267, %v2259, -inf
          %v2456 = vmax.f32 %v2454, %v2455
          %v2457 = vsel %vm2267, %v2210, -inf
          %v2458 = vsel %vm2267, %v2266, -inf
          %v2459 = vmax.f32 %v2457, %v2458
          %vm2524 = vcmask 1041409
          %v2525 = vsel %vm2524, %v2273, %v2270
          %vm2526 = vcmask 1042434
          %v2527 = vsel %vm2526, %v2276, %v2525
          %vm2528 = vcmask 1043459
          %v2529 = vsel %vm2528, %v2279, %v2527
          %vm2530 = vcmask 1044484
          %v2531 = vsel %vm2530, %v2282, %v2529
          %vm2532 = vcmask 1045509
          %v2533 = vsel %vm2532, %v2285, %v2531
          %vm2534 = vcmask 1046534
          %v2535 = vsel %vm2534, %v2288, %v2533
          %vm2536 = vcmask 1047559
          %v2537 = vsel %vm2536, %v2291, %v2535
          %v2538 = vsel %vm2524, %v2297, %v2294
          %v2539 = vsel %vm2526, %v2300, %v2538
          %v2540 = vsel %vm2528, %v2303, %v2539
          %v2541 = vsel %vm2530, %v2306, %v2540
          %v2542 = vsel %vm2532, %v2309, %v2541
          %v2543 = vsel %vm2534, %v2312, %v2542
          %v2544 = vsel %vm2536, %v2315, %v2543
          %v2545 = vsel %vm2524, %v2321, %v2318
          %v2546 = vsel %vm2526, %v2324, %v2545
          %v2547 = vsel %vm2528, %v2327, %v2546
          %v2548 = vsel %vm2530, %v2330, %v2547
          %v2549 = vsel %vm2532, %v2333, %v2548
          %v2550 = vsel %vm2534, %v2336, %v2549
          %v2551 = vsel %vm2536, %v2339, %v2550
          %v2552 = vsel %vm2524, %v2345, %v2342
          %v2553 = vsel %vm2526, %v2348, %v2552
          %v2554 = vsel %vm2528, %v2351, %v2553
          %v2555 = vsel %vm2530, %v2354, %v2554
          %v2556 = vsel %vm2532, %v2357, %v2555
          %v2557 = vsel %vm2534, %v2360, %v2556
          %v2558 = vsel %vm2536, %v2363, %v2557
          %v2559 = vsel %vm2524, %v2369, %v2366
          %v2560 = vsel %vm2526, %v2372, %v2559
          %v2561 = vsel %vm2528, %v2375, %v2560
          %v2562 = vsel %vm2530, %v2378, %v2561
          %v2563 = vsel %vm2532, %v2381, %v2562
          %v2564 = vsel %vm2534, %v2384, %v2563
          %v2565 = vsel %vm2536, %v2387, %v2564
          %v2566 = vsel %vm2524, %v2393, %v2390
          %v2567 = vsel %vm2526, %v2396, %v2566
          %v2568 = vsel %vm2528, %v2399, %v2567
          %v2569 = vsel %vm2530, %v2402, %v2568
          %v2570 = vsel %vm2532, %v2405, %v2569
          %v2571 = vsel %vm2534, %v2408, %v2570
          %v2572 = vsel %vm2536, %v2411, %v2571
          %v2573 = vsel %vm2524, %v2417, %v2414
          %v2574 = vsel %vm2526, %v2420, %v2573
          %v2575 = vsel %vm2528, %v2423, %v2574
          %v2576 = vsel %vm2530, %v2426, %v2575
          %v2577 = vsel %vm2532, %v2429, %v2576
          %v2578 = vsel %vm2534, %v2432, %v2577
          %v2579 = vsel %vm2536, %v2435, %v2578
          %v2580 = vsel %vm2524, %v2441, %v2438
          %v2581 = vsel %vm2526, %v2444, %v2580
          %v2582 = vsel %vm2528, %v2447, %v2581
          %v2583 = vsel %vm2530, %v2450, %v2582
          %v2584 = vsel %vm2532, %v2453, %v2583
          %v2585 = vsel %vm2534, %v2456, %v2584
          %v2586 = vsel %vm2536, %v2459, %v2585
          %2595 = vxpose.xlu0.b32.start [1/16] %v2537, 128
          %2596 = vxpose.xlu0.b32.cont [2/16] %v2544, 128
          %2597 = vxpose.xlu0.b32.cont [3/16] %v2551, 128
          %2598 = vxpose.xlu0.b32.cont [4/16] %v2558, 128
          %2599 = vxpose.xlu0.b32.cont [5/16] %v2565, 128
          %2600 = vxpose.xlu0.b32.cont [6/16] %v2572, 128
          %2601 = vxpose.xlu0.b32.cont [7/16] %v2579, 128
          %2602 = vxpose.xlu0.b32.cont [8/16] %v2586, 128
          %2603 = vxpose.xlu0.b32.cont [9/16] 0.0, 128
          %2604 = vxpose.xlu0.b32.cont [10/16] 0.0, 128
          %2605 = vxpose.xlu0.b32.cont [11/16] 0.0, 128
          %2606 = vxpose.xlu0.b32.cont [12/16] 0.0, 128
          %2607 = vxpose.xlu0.b32.cont [13/16] 0.0, 128
          %2608 = vxpose.xlu0.b32.cont [14/16] 0.0, 128
          %2609 = vxpose.xlu0.b32.cont [15/16] 0.0, 128
          %2610 = vxpose.xlu0.b32.end [16/16] 0.0, 128
          %v2611 = vpop.trf.xlu0
          %v2612 = vpop.trf.xlu0
          %v2613 = vpop.trf.xlu0
          %v2614 = vpop.trf.xlu0
          %v2615 = vpop.trf.xlu0
          %v2616 = vpop.trf.xlu0
          %v2617 = vpop.trf.xlu0
          %v2618 = vpop.trf.xlu0
          %v2619 = vpop.trf.xlu0
          %v2620 = vpop.trf.xlu0
          %v2621 = vpop.trf.xlu0
          %v2622 = vpop.trf.xlu0
          %v2623 = vpop.trf.xlu0
          %v2624 = vpop.trf.xlu0
          %v2625 = vpop.trf.xlu0
          %v2626 = vpop.trf.xlu0
          %v2627 = vpack.c.bf16 %v2611, %v2611
          %vm2628 = vcmask 517120
          %2629 = vst.msk [vmem:[#allocation2] sm:$0x3] %vm2628, %v2627
          %v2630 = vpack.c.bf16 %v2270, %v2270
          %v2631 = vpack.c.bf16 %v2273, %v2273
          %v2632 = vpack.c.bf16 %v2276, %v2276
          %v2633 = vpack.c.bf16 %v2279, %v2279
          %v2634 = vpack.c.bf16 %v2282, %v2282
          %v2635 = vpack.c.bf16 %v2285, %v2285
          %v2636 = vpack.c.bf16 %v2288, %v2288
          %v2637 = vpack.c.bf16 %v2291, %v2291
          %v2638 = vpack.c.bf16 %v2294, %v2294
          %v2639 = vpack.c.bf16 %v2297, %v2297
          %v2640 = vpack.c.bf16 %v2300, %v2300
          %v2641 = vpack.c.bf16 %v2303, %v2303
          %v2642 = vpack.c.bf16 %v2306, %v2306
          %v2643 = vpack.c.bf16 %v2309, %v2309
          %v2644 = vpack.c.bf16 %v2312, %v2312
          %v2645 = vpack.c.bf16 %v2315, %v2315
          %v2646 = vpack.c.bf16 %v2318, %v2318
          %v2647 = vpack.c.bf16 %v2321, %v2321
          %v2648 = vpack.c.bf16 %v2324, %v2324
          %v2649 = vpack.c.bf16 %v2327, %v2327
          %v2650 = vpack.c.bf16 %v2330, %v2330
          %v2651 = vpack.c.bf16 %v2333, %v2333
          %v2652 = vpack.c.bf16 %v2336, %v2336
          %v2653 = vpack.c.bf16 %v2339, %v2339
          %v2654 = vpack.c.bf16 %v2342, %v2342
          %v2655 = vpack.c.bf16 %v2345, %v2345
          %v2656 = vpack.c.bf16 %v2348, %v2348
          %v2657 = vpack.c.bf16 %v2351, %v2351
          %v2658 = vpack.c.bf16 %v2354, %v2354
          %v2659 = vpack.c.bf16 %v2357, %v2357
          %v2660 = vpack.c.bf16 %v2360, %v2360
          %v2661 = vpack.c.bf16 %v2363, %v2363
          %v2662 = vpack.c.bf16 %v2366, %v2366
          %v2663 = vpack.c.bf16 %v2369, %v2369
          %v2664 = vpack.c.bf16 %v2372, %v2372
          %v2665 = vpack.c.bf16 %v2375, %v2375
          %v2666 = vpack.c.bf16 %v2378, %v2378
          %v2667 = vpack.c.bf16 %v2381, %v2381
          %v2668 = vpack.c.bf16 %v2384, %v2384
          %v2669 = vpack.c.bf16 %v2387, %v2387
          %v2670 = vpack.c.bf16 %v2390, %v2390
          %v2671 = vpack.c.bf16 %v2393, %v2393
          %v2672 = vpack.c.bf16 %v2396, %v2396
          %v2673 = vpack.c.bf16 %v2399, %v2399
          %v2674 = vpack.c.bf16 %v2402, %v2402
          %v2675 = vpack.c.bf16 %v2405, %v2405
          %v2676 = vpack.c.bf16 %v2408, %v2408
          %v2677 = vpack.c.bf16 %v2411, %v2411
          %v2678 = vpack.c.bf16 %v2414, %v2414
          %v2679 = vpack.c.bf16 %v2417, %v2417
          %v2680 = vpack.c.bf16 %v2420, %v2420
          %v2681 = vpack.c.bf16 %v2423, %v2423
          %v2682 = vpack.c.bf16 %v2426, %v2426
          %v2683 = vpack.c.bf16 %v2429, %v2429
          %v2684 = vpack.c.bf16 %v2432, %v2432
          %v2685 = vpack.c.bf16 %v2435, %v2435
          %v2686 = vpack.c.bf16 %v2438, %v2438
          %v2687 = vpack.c.bf16 %v2441, %v2441
          %v2688 = vpack.c.bf16 %v2444, %v2444
          %v2689 = vpack.c.bf16 %v2447, %v2447
          %v2690 = vpack.c.bf16 %v2450, %v2450
          %v2691 = vpack.c.bf16 %v2453, %v2453
          %v2692 = vpack.c.bf16 %v2456, %v2456
          %v2693 = vpack.c.bf16 %v2459, %v2459
          %v2758 = vunpack.c.l.b16 %v2630
          %v2759 = vunpack.c.l.b16 %v2631
          %v2760 = vunpack.c.l.b16 %v2632
          %v2761 = vunpack.c.l.b16 %v2633
          %v2762 = vunpack.c.l.b16 %v2634
          %v2763 = vunpack.c.l.b16 %v2635
          %v2764 = vunpack.c.l.b16 %v2636
          %v2765 = vunpack.c.l.b16 %v2637
          %v2766 = vunpack.c.l.b16 %v2638
          %v2767 = vunpack.c.l.b16 %v2639
          %v2768 = vunpack.c.l.b16 %v2640
          %v2769 = vunpack.c.l.b16 %v2641
          %v2770 = vunpack.c.l.b16 %v2642
          %v2771 = vunpack.c.l.b16 %v2643
          %v2772 = vunpack.c.l.b16 %v2644
          %v2773 = vunpack.c.l.b16 %v2645
          %v2774 = vunpack.c.l.b16 %v2646
          %v2775 = vunpack.c.l.b16 %v2647
          %v2776 = vunpack.c.l.b16 %v2648
          %v2777 = vunpack.c.l.b16 %v2649
          %v2778 = vunpack.c.l.b16 %v2650
          %v2779 = vunpack.c.l.b16 %v2651
          %v2780 = vunpack.c.l.b16 %v2652
          %v2781 = vunpack.c.l.b16 %v2653
          %v2782 = vunpack.c.l.b16 %v2654
          %v2783 = vunpack.c.l.b16 %v2655
          %v2784 = vunpack.c.l.b16 %v2656
          %v2785 = vunpack.c.l.b16 %v2657
          %v2786 = vunpack.c.l.b16 %v2658
          %v2787 = vunpack.c.l.b16 %v2659
          %v2788 = vunpack.c.l.b16 %v2660
          %v2789 = vunpack.c.l.b16 %v2661
          %v2790 = vunpack.c.l.b16 %v2662
          %v2791 = vunpack.c.l.b16 %v2663
          %v2792 = vunpack.c.l.b16 %v2664
          %v2793 = vunpack.c.l.b16 %v2665
          %v2794 = vunpack.c.l.b16 %v2666
          %v2795 = vunpack.c.l.b16 %v2667
          %v2796 = vunpack.c.l.b16 %v2668
          %v2797 = vunpack.c.l.b16 %v2669
          %v2798 = vunpack.c.l.b16 %v2670
          %v2799 = vunpack.c.l.b16 %v2671
          %v2800 = vunpack.c.l.b16 %v2672
          %v2801 = vunpack.c.l.b16 %v2673
          %v2802 = vunpack.c.l.b16 %v2674
          %v2803 = vunpack.c.l.b16 %v2675
          %v2804 = vunpack.c.l.b16 %v2676
          %v2805 = vunpack.c.l.b16 %v2677
          %v2806 = vunpack.c.l.b16 %v2678
          %v2807 = vunpack.c.l.b16 %v2679
          %v2808 = vunpack.c.l.b16 %v2680
          %v2809 = vunpack.c.l.b16 %v2681
          %v2810 = vunpack.c.l.b16 %v2682
          %v2811 = vunpack.c.l.b16 %v2683
          %v2812 = vunpack.c.l.b16 %v2684
          %v2813 = vunpack.c.l.b16 %v2685
          %v2814 = vunpack.c.l.b16 %v2686
          %v2815 = vunpack.c.l.b16 %v2687
          %v2816 = vunpack.c.l.b16 %v2688
          %v2817 = vunpack.c.l.b16 %v2689
          %v2818 = vunpack.c.l.b16 %v2690
          %v2819 = vunpack.c.l.b16 %v2691
          %v2820 = vunpack.c.l.b16 %v2692
          %v2821 = vunpack.c.l.b16 %v2693
          %v2822 = vsel %vm2524, %v2759, %v2758
          %v2823 = vsel %vm2526, %v2760, %v2822
          %v2824 = vsel %vm2528, %v2761, %v2823
          %v2825 = vsel %vm2530, %v2762, %v2824
          %v2826 = vsel %vm2532, %v2763, %v2825
          %v2827 = vsel %vm2534, %v2764, %v2826
          %v2828 = vsel %vm2536, %v2765, %v2827
          %v2829 = vsel %vm2524, %v2767, %v2766
          %v2830 = vsel %vm2526, %v2768, %v2829
          %v2831 = vsel %vm2528, %v2769, %v2830
          %v2832 = vsel %vm2530, %v2770, %v2831
          %v2833 = vsel %vm2532, %v2771, %v2832
          %v2834 = vsel %vm2534, %v2772, %v2833
          %v2835 = vsel %vm2536, %v2773, %v2834
          %v2836 = vsel %vm2524, %v2775, %v2774
          %v2837 = vsel %vm2526, %v2776, %v2836
          %v2838 = vsel %vm2528, %v2777, %v2837
          %v2839 = vsel %vm2530, %v2778, %v2838
          %v2840 = vsel %vm2532, %v2779, %v2839
          %v2841 = vsel %vm2534, %v2780, %v2840
          %v2842 = vsel %vm2536, %v2781, %v2841
          %v2843 = vsel %vm2524, %v2783, %v2782
          %v2844 = vsel %vm2526, %v2784, %v2843
          %v2845 = vsel %vm2528, %v2785, %v2844
          %v2846 = vsel %vm2530, %v2786, %v2845
          %v2847 = vsel %vm2532, %v2787, %v2846
          %v2848 = vsel %vm2534, %v2788, %v2847
          %v2849 = vsel %vm2536, %v2789, %v2848
          %v2850 = vsel %vm2524, %v2791, %v2790
          %v2851 = vsel %vm2526, %v2792, %v2850
          %v2852 = vsel %vm2528, %v2793, %v2851
          %v2853 = vsel %vm2530, %v2794, %v2852
          %v2854 = vsel %vm2532, %v2795, %v2853
          %v2855 = vsel %vm2534, %v2796, %v2854
          %v2856 = vsel %vm2536, %v2797, %v2855
          %v2857 = vsel %vm2524, %v2799, %v2798
          %v2858 = vsel %vm2526, %v2800, %v2857
          %v2859 = vsel %vm2528, %v2801, %v2858
          %v2860 = vsel %vm2530, %v2802, %v2859
          %v2861 = vsel %vm2532, %v2803, %v2860
          %v2862 = vsel %vm2534, %v2804, %v2861
          %v2863 = vsel %vm2536, %v2805, %v2862
          %v2864 = vsel %vm2524, %v2807, %v2806
          %v2865 = vsel %vm2526, %v2808, %v2864
          %v2866 = vsel %vm2528, %v2809, %v2865
          %v2867 = vsel %vm2530, %v2810, %v2866
          %v2868 = vsel %vm2532, %v2811, %v2867
          %v2869 = vsel %vm2534, %v2812, %v2868
          %v2870 = vsel %vm2536, %v2813, %v2869
          %v2871 = vsel %vm2524, %v2815, %v2814
          %v2872 = vsel %vm2526, %v2816, %v2871
          %v2873 = vsel %vm2528, %v2817, %v2872
          %v2874 = vsel %vm2530, %v2818, %v2873
          %v2875 = vsel %vm2532, %v2819, %v2874
          %v2876 = vsel %vm2534, %v2820, %v2875
          %v2877 = vsel %vm2536, %v2821, %v2876
          %v2878 = vpack.c.b16 %v2835, %v2828
          %v2879 = vpack.c.b16 %v2849, %v2842
          %v2880 = vpack.c.b16 %v2863, %v2856
          %v2881 = vpack.c.b16 %v2877, %v2870
          %2882 = vrot.lane.b32.xlu0 %v2878, 124
          %v2883 = vpop.permute.xlu0 %2882
          %2884 = vrot.lane.b32.xlu0 %v2879, 124
          %v2885 = vpop.permute.xlu0 %2884
          %2886 = vrot.lane.b32.xlu0 %v2880, 124
          %v2887 = vpop.permute.xlu0 %2886
          %2888 = vrot.lane.b32.xlu0 %v2881, 124
          %v2889 = vpop.permute.xlu0 %2888
          %vm2894 = vcmask 130048
          %2895 = vst.msk [vmem:[#allocation3] sm:$0xff] %vm2894, %v2883
          %2896 = vst.msk [vmem:[#allocation3 + $0x8] sm:$0xff] %vm2894, %v2885
          %2897 = vst.msk [vmem:[#allocation3 + $0x10] sm:$0xff] %vm2894, %v2887
          %2898 = vst.msk [vmem:[#allocation3 + $0x18] sm:$0xff] %vm2894, %v2889
        $region60: #{tpu_custom_call.1} parent=51 // pred_fallthru
          _
        %s2899 = smul.u32 %s31, 256
        %s2900 = sshra.s32 %s2899, 7
        %s2901 = sand.u32 %s2899, 127
        %s2902 = smul.addr %s2900, 8
        %s2903 = scalar_lea.vmem %s306, %s2902 [#allocation5]
        %v2904 = vld [vmem:[%s2903] sm:$0xff]
        %v2905 = vld [vmem:[%s2903 + $0x8] sm:$0xff]
        %v2906 = vld [vmem:[%s2903 + $0x10] sm:$0xff]
        %v2907 = vld [vmem:[%s2903 + $0x18] sm:$0xff]
        %v2908 = vld [vmem:[%s2903 + $0x20] sm:$0xff]
        %v2909 = vld [vmem:[%s2903 + $0x28] sm:$0xff]
        %v2910 = vld [vmem:[%s2903 + $0x30] sm:$0xff]
        %v2911 = vld [vmem:[%s2903 + $0x38] sm:$0xff]
        %2912 = vxpose.xlu0.b32.start [1/16] %v2904, 128
        %2913 = vxpose.xlu0.b32.cont [2/16] %v2906, 128
        %2914 = vxpose.xlu0.b32.cont [3/16] %v2908, 128
        %2915 = vxpose.xlu0.b32.cont [4/16] %v2910, 128
        %2916 = vxpose.xlu0.b32.cont [5/16] 0.0, 128
        %2917 = vxpose.xlu0.b32.cont [6/16] 0.0, 128
        %2918 = vxpose.xlu0.b32.cont [7/16] 0.0, 128
        %2919 = vxpose.xlu0.b32.cont [8/16] 0.0, 128
        %2920 = vxpose.xlu0.b32.cont [9/16] 0.0, 128
        %2921 = vxpose.xlu0.b32.cont [10/16] 0.0, 128
        %2922 = vxpose.xlu0.b32.cont [11/16] 0.0, 128
        %2923 = vxpose.xlu0.b32.cont [12/16] 0.0, 128
        %2924 = vxpose.xlu0.b32.cont [13/16] 0.0, 128
        %2925 = vxpose.xlu0.b32.cont [14/16] 0.0, 128
        %2926 = vxpose.xlu0.b32.cont [15/16] 0.0, 128
        %2927 = vxpose.xlu0.b32.end [16/16] 0.0, 128
        %v2928 = vpop.trf.xlu0
        %v2929 = vpop.trf.xlu0
        %v2930 = vpop.trf.xlu0
        %v2931 = vpop.trf.xlu0
        %v2932 = vpop.trf.xlu0
        %v2933 = vpop.trf.xlu0
        %v2934 = vpop.trf.xlu0
        %v2935 = vpop.trf.xlu0
        %v2936 = vpop.trf.xlu0
        %v2937 = vpop.trf.xlu0
        %v2938 = vpop.trf.xlu0
        %v2939 = vpop.trf.xlu0
        %v2940 = vpop.trf.xlu0
        %v2941 = vpop.trf.xlu0
        %v2942 = vpop.trf.xlu0
        %v2943 = vpop.trf.xlu0
        %2944 = vxpose.xlu0.b32.start [1/16] %v2905, 128
        %2945 = vxpose.xlu0.b32.cont [2/16] %v2907, 128
        %2946 = vxpose.xlu0.b32.cont [3/16] %v2909, 128
        %2947 = vxpose.xlu0.b32.cont [4/16] %v2911, 128
        %2948 = vxpose.xlu0.b32.cont [5/16] 0.0, 128
        %2949 = vxpose.xlu0.b32.cont [6/16] 0.0, 128
        %2950 = vxpose.xlu0.b32.cont [7/16] 0.0, 128
        %2951 = vxpose.xlu0.b32.cont [8/16] 0.0, 128
        %2952 = vxpose.xlu0.b32.cont [9/16] 0.0, 128
        %2953 = vxpose.xlu0.b32.cont [10/16] 0.0, 128
        %2954 = vxpose.xlu0.b32.cont [11/16] 0.0, 128
        %2955 = vxpose.xlu0.b32.cont [12/16] 0.0, 128
        %2956 = vxpose.xlu0.b32.cont [13/16] 0.0, 128
        %2957 = vxpose.xlu0.b32.cont [14/16] 0.0, 128
        %2958 = vxpose.xlu0.b32.cont [15/16] 0.0, 128
        %2959 = vxpose.xlu0.b32.end [16/16] 0.0, 128
        %v2960 = vpop.trf.xlu0
        %v2961 = vpop.trf.xlu0
        %v2962 = vpop.trf.xlu0
        %v2963 = vpop.trf.xlu0
        %v2964 = vpop.trf.xlu0
        %v2965 = vpop.trf.xlu0
        %v2966 = vpop.trf.xlu0
        %v2967 = vpop.trf.xlu0
        %v2968 = vpop.trf.xlu0
        %v2969 = vpop.trf.xlu0
        %v2970 = vpop.trf.xlu0
        %v2971 = vpop.trf.xlu0
        %v2972 = vpop.trf.xlu0
        %v2973 = vpop.trf.xlu0
        %v2974 = vpop.trf.xlu0
        %v2975 = vpop.trf.xlu0
        %v2976 = vpack.c.bf16 %v2929, %v2928
        %v2977 = vpack.c.bf16 %v2931, %v2930
        %v2978 = vpack.c.bf16 %v2933, %v2932
        %v2979 = vpack.c.bf16 %v2935, %v2934
        %v2980 = vpack.c.bf16 %v2937, %v2936
        %v2981 = vpack.c.bf16 %v2939, %v2938
        %v2982 = vpack.c.bf16 %v2941, %v2940
        %v2983 = vpack.c.bf16 %v2943, %v2942
        %v2984 = vpack.c.bf16 %v2961, %v2960
        %v2985 = vpack.c.bf16 %v2963, %v2962
        %v2986 = vpack.c.bf16 %v2965, %v2964
        %v2987 = vpack.c.bf16 %v2967, %v2966
        %v2988 = vpack.c.bf16 %v2969, %v2968
        %v2989 = vpack.c.bf16 %v2971, %v2970
        %v2990 = vpack.c.bf16 %v2973, %v2972
        %v2991 = vpack.c.bf16 %v2975, %v2974
        %v2992 = vld [vmem:[%s1] sm:$0xf]
        %v2993 = vld [vmem:[%s1 + $0x4] sm:$0xf]
        %v2994 = vld [vmem:[%s1 + $0x8] sm:$0xf]
        %v2995 = vld [vmem:[%s1 + $0xc] sm:$0xf]
        %v2996 = vld [vmem:[%s2] sm:$0x1]
        %v2998 = vlaneseq
        %v2999 = vshrl.u32 %v2998, 7
        %v3000 = vsub.s32 0, %v2999
        %v3001 = vrot.slane %v2996, %v3000
        %v3007 = vunpack.c.l.b16 %v2992
        %v3008 = vunpack.c.l.b16 %v2993
        %v3009 = vunpack.c.l.b16 %v2994
        %v3010 = vunpack.c.l.b16 %v2995
        %v3011 = vpack.c.b16 %v3008, %v3007
        %v3012 = vpack.c.b16 %v3010, %v3009
        %vm3015 = vcmask 261120
        %v3017 = vsel %vm3015, %v2976, 0
        %v3020 = vsel %vm3015, %v2977, 0
        %v3023 = vsel %vm3015, %v2978, 0
        %v3026 = vsel %vm3015, %v2979, 0
        %v3029 = vsel %vm3015, %v2980, 0
        %v3032 = vsel %vm3015, %v2981, 0
        %v3035 = vsel %vm3015, %v2982, 0
        %v3038 = vsel %vm3015, %v2983, 0
        %v3041 = vsel %vm3015, %v2984, 0
        %v3044 = vsel %vm3015, %v2985, 0
        %v3047 = vsel %vm3015, %v2986, 0
        %v3050 = vsel %vm3015, %v2987, 0
        %v3053 = vsel %vm3015, %v2988, 0
        %v3056 = vsel %vm3015, %v2989, 0
        %v3059 = vsel %vm3015, %v2990, 0
        %v3062 = vsel %vm3015, %v2991, 0
        %3064 = vmatprep.subr.bf16.mxu0 0
        %3065 = vmatpush1.bf16.msra.mxu0 %v3011
        %3066 = vmatprep.subr.bf16.mxu0 0
        %3067 = vmatpush1.bf16.msra.mxu0 %v3012
        %3068 = vmatprep.subr.bf16.mxu0 0
        %3069 = vmatpush1.bf16.msra.mxu0 0
        %3070 = vmatprep.subr.bf16.mxu0 0
        %3071 = vmatpush1.bf16.msra.mxu0 0
        %3072 = vmatprep.subr.bf16.mxu0 0
        %3073 = vmatpush1.bf16.msra.mxu0 0
        %3074 = vmatprep.subr.bf16.mxu0 0
        %3075 = vmatpush1.bf16.msra.mxu0 0
        %3076 = vmatprep.subr.bf16.mxu0 0
        %3077 = vmatpush1.bf16.msra.mxu0 0
        %3078 = vmatprep.subr.bf16.mxu0 0
        %3079 = vmatpush1.bf16.msra.mxu0 0
        %3080 = vmatprep.subr.bf16.mxu0 0
        %3081 = vmatpush1.bf16.msra.mxu0 0
        %3082 = vmatprep.subr.bf16.mxu0 0
        %3083 = vmatpush1.bf16.msra.mxu0 0
        %3084 = vmatprep.subr.bf16.mxu0 0
        %3085 = vmatpush1.bf16.msra.mxu0 0
        %3086 = vmatprep.subr.bf16.mxu0 0
        %3087 = vmatpush1.bf16.msra.mxu0 0
        %3088 = vmatprep.subr.bf16.mxu0 0
        %3089 = vmatpush1.bf16.msra.mxu0 0
        %3090 = vmatprep.subr.bf16.mxu0 0
        %3091 = vmatpush1.bf16.msra.mxu0 0
        %3092 = vmatprep.subr.bf16.mxu0 0
        %3093 = vmatpush1.bf16.msra.mxu0 0
        %3094 = vmatprep.subr.bf16.mxu0 0
        %3095 = vmatpush1.bf16.msra.mxu0 0
        %3096 = vmatprep.mubr.bf16.mxu0 0
        %3097 = vmatmul.mubr.bf16.gmra.mrb[0].mxu0 %v3017
        %v3098 = vpop.f32.mrb[0].mxu0
        %v3099 = vadd.f32 %v3001, %v3098
        %v3100 = vpop.f32.mrb[0].mxu0
        %v3101 = vpop.f32.mrb[0].mxu0
        %v3102 = vadd.f32 %v3001, %v3101
        %v3103 = vpop.f32.mrb[0].mxu0
        %3104 = vmatprep.mubr.bf16.mxu0 0
        %3105 = vmatmul.mubr.bf16.gmra.mrb[0].mxu0 %v3020
        %v3106 = vpop.f32.mrb[0].mxu0
        %v3107 = vadd.f32 %v3001, %v3106
        %v3108 = vpop.f32.mrb[0].mxu0
        %v3109 = vpop.f32.mrb[0].mxu0
        %v3110 = vadd.f32 %v3001, %v3109
        %v3111 = vpop.f32.mrb[0].mxu0
        %3112 = vmatprep.mubr.bf16.mxu0 0
        %3113 = vmatmul.mubr.bf16.gmra.mrb[0].mxu0 %v3023
        %v3114 = vpop.f32.mrb[0].mxu0
        %v3115 = vadd.f32 %v3001, %v3114
        %v3116 = vpop.f32.mrb[0].mxu0
        %v3117 = vpop.f32.mrb[0].mxu0
        %v3118 = vadd.f32 %v3001, %v3117
        %v3119 = vpop.f32.mrb[0].mxu0
        %3120 = vmatprep.mubr.bf16.mxu0 0
        %3121 = vmatmul.mubr.bf16.gmra.mrb[0].mxu0 %v3026
        %v3122 = vpop.f32.mrb[0].mxu0
        %v3123 = vadd.f32 %v3001, %v3122
        %v3124 = vpop.f32.mrb[0].mxu0
        %v3125 = vpop.f32.mrb[0].mxu0
        %v3126 = vadd.f32 %v3001, %v3125
        %v3127 = vpop.f32.mrb[0].mxu0
        %3128 = vmatprep.mubr.bf16.mxu0 0
        %3129 = vmatmul.mubr.bf16.gmra.mrb[0].mxu0 %v3029
        %v3130 = vpop.f32.mrb[0].mxu0
        %v3131 = vadd.f32 %v3001, %v3130
        %v3132 = vpop.f32.mrb[0].mxu0
        %v3133 = vpop.f32.mrb[0].mxu0
        %v3134 = vadd.f32 %v3001, %v3133
        %v3135 = vpop.f32.mrb[0].mxu0
        %3136 = vmatprep.mubr.bf16.mxu0 0
        %3137 = vmatmul.mubr.bf16.gmra.mrb[0].mxu0 %v3032
        %v3138 = vpop.f32.mrb[0].mxu0
        %v3139 = vadd.f32 %v3001, %v3138
        %v3140 = vpop.f32.mrb[0].mxu0
        %v3141 = vpop.f32.mrb[0].mxu0
        %v3142 = vadd.f32 %v3001, %v3141
        %v3143 = vpop.f32.mrb[0].mxu0
        %3144 = vmatprep.mubr.bf16.mxu0 0
        %3145 = vmatmul.mubr.bf16.gmra.mrb[0].mxu0 %v3035
        %v3146 = vpop.f32.mrb[0].mxu0
        %v3147 = vadd.f32 %v3001, %v3146
        %v3148 = vpop.f32.mrb[0].mxu0
        %v3149 = vpop.f32.mrb[0].mxu0
        %v3150 = vadd.f32 %v3001, %v3149
        %v3151 = vpop.f32.mrb[0].mxu0
        %3152 = vmatprep.mubr.bf16.mxu0 0
        %3153 = vmatmul.mubr.bf16.gmra.mrb[0].mxu0 %v3038
        %v3154 = vpop.f32.mrb[0].mxu0
        %v3155 = vadd.f32 %v3001, %v3154
        %v3156 = vpop.f32.mrb[0].mxu0
        %v3157 = vpop.f32.mrb[0].mxu0
        %v3158 = vadd.f32 %v3001, %v3157
        %v3159 = vpop.f32.mrb[0].mxu0
        %3160 = vmatprep.mubr.bf16.mxu0 0
        %3161 = vmatmul.mubr.bf16.gmra.mrb[0].mxu0 %v3041
        %v3162 = vpop.f32.mrb[0].mxu0
        %v3163 = vadd.f32 %v3001, %v3162
        %v3164 = vpop.f32.mrb[0].mxu0
        %v3165 = vpop.f32.mrb[0].mxu0
        %v3166 = vadd.f32 %v3001, %v3165
        %v3167 = vpop.f32.mrb[0].mxu0
        %3168 = vmatprep.mubr.bf16.mxu0 0
        %3169 = vmatmul.mubr.bf16.gmra.mrb[0].mxu0 %v3044
        %v3170 = vpop.f32.mrb[0].mxu0
        %v3171 = vadd.f32 %v3001, %v3170
        %v3172 = vpop.f32.mrb[0].mxu0
        %v3173 = vpop.f32.mrb[0].mxu0
        %v3174 = vadd.f32 %v3001, %v3173
        %v3175 = vpop.f32.mrb[0].mxu0
        %3176 = vmatprep.mubr.bf16.mxu0 0
        %3177 = vmatmul.mubr.bf16.gmra.mrb[0].mxu0 %v3047
        %v3178 = vpop.f32.mrb[0].mxu0
        %v3179 = vadd.f32 %v3001, %v3178
        %v3180 = vpop.f32.mrb[0].mxu0
        %v3181 = vpop.f32.mrb[0].mxu0
        %v3182 = vadd.f32 %v3001, %v3181
        %v3183 = vpop.f32.mrb[0].mxu0
        %3184 = vmatprep.mubr.bf16.mxu0 0
        %3185 = vmatmul.mubr.bf16.gmra.mrb[0].mxu0 %v3050
        %v3186 = vpop.f32.mrb[0].mxu0
        %v3187 = vadd.f32 %v3001, %v3186
        %v3188 = vpop.f32.mrb[0].mxu0
        %v3189 = vpop.f32.mrb[0].mxu0
        %v3190 = vadd.f32 %v3001, %v3189
        %v3191 = vpop.f32.mrb[0].mxu0
        %3192 = vmatprep.mubr.bf16.mxu0 0
        %3193 = vmatmul.mubr.bf16.gmra.mrb[0].mxu0 %v3053
        %v3194 = vpop.f32.mrb[0].mxu0
        %v3195 = vadd.f32 %v3001, %v3194
        %v3196 = vpop.f32.mrb[0].mxu0
        %v3197 = vpop.f32.mrb[0].mxu0
        %v3198 = vadd.f32 %v3001, %v3197
        %v3199 = vpop.f32.mrb[0].mxu0
        %3200 = vmatprep.mubr.bf16.mxu0 0
        %3201 = vmatmul.mubr.bf16.gmra.mrb[0].mxu0 %v3056
        %v3202 = vpop.f32.mrb[0].mxu0
        %v3203 = vadd.f32 %v3001, %v3202
        %v3204 = vpop.f32.mrb[0].mxu0
        %v3205 = vpop.f32.mrb[0].mxu0
        %v3206 = vadd.f32 %v3001, %v3205
        %v3207 = vpop.f32.mrb[0].mxu0
        %3208 = vmatprep.mubr.bf16.mxu0 0
        %3209 = vmatmul.mubr.bf16.gmra.mrb[0].mxu0 %v3059
        %v3210 = vpop.f32.mrb[0].mxu0
        %v3211 = vadd.f32 %v3001, %v3210
        %v3212 = vpop.f32.mrb[0].mxu0
        %v3213 = vpop.f32.mrb[0].mxu0
        %v3214 = vadd.f32 %v3001, %v3213
        %v3215 = vpop.f32.mrb[0].mxu0
        %3216 = vmatprep.mubr.bf16.mxu0 0
        %3217 = vmatmul.mubr.bf16.gmra.mrb[0].mxu0 %v3062
        %v3218 = vpop.f32.mrb[0].mxu0
        %v3219 = vadd.f32 %v3001, %v3218
        %v3220 = vpop.f32.mrb[0].mxu0
        %v3221 = vpop.f32.mrb[0].mxu0
        %v3222 = vadd.f32 %v3001, %v3221
        %v3223 = vpop.f32.mrb[0].mxu0
        %3224 = vdwg.mxu0
        %v3225 = vpack.c.bf16 %v3102, %v3099
        %v3226 = vpack.c.bf16 %v3110, %v3107
        %v3227 = vpack.c.bf16 %v3118, %v3115
        %v3228 = vpack.c.bf16 %v3126, %v3123
        %v3229 = vpack.c.bf16 %v3134, %v3131
        %v3230 = vpack.c.bf16 %v3142, %v3139
        %v3231 = vpack.c.bf16 %v3150, %v3147
        %v3232 = vpack.c.bf16 %v3158, %v3155
        %v3233 = vpack.c.bf16 %v3166, %v3163
        %v3234 = vpack.c.bf16 %v3174, %v3171
        %v3235 = vpack.c.bf16 %v3182, %v3179
        %v3236 = vpack.c.bf16 %v3190, %v3187
        %v3237 = vpack.c.bf16 %v3198, %v3195
        %v3238 = vpack.c.bf16 %v3206, %v3203
        %v3239 = vpack.c.bf16 %v3214, %v3211
        %v3240 = vpack.c.bf16 %v3222, %v3219
        %v3241 = vld [vmem:[#allocation2] sm:$0x3]
        %vm3242 = vcmask 31744
        %v3244 = vsel %vm3242, %v3225, 0
        %v3247 = vsel %vm3242, %v3226, 0
        %v3250 = vsel %vm3242, %v3227, 0
        %v3253 = vsel %vm3242, %v3228, 0
        %v3256 = vsel %vm3242, %v3229, 0
        %v3259 = vsel %vm3242, %v3230, 0
        %v3262 = vsel %vm3242, %v3231, 0
        %v3265 = vsel %vm3242, %v3232, 0
        %v3268 = vsel %vm3242, %v3233, 0
        %v3271 = vsel %vm3242, %v3234, 0
        %v3274 = vsel %vm3242, %v3235, 0
        %v3277 = vsel %vm3242, %v3236, 0
        %v3280 = vsel %vm3242, %v3237, 0
        %v3283 = vsel %vm3242, %v3238, 0
        %v3286 = vsel %vm3242, %v3239, 0
        %v3289 = vsel %vm3242, %v3240, 0
        %vm3291 = vcmask 1041408
        %v3293 = vsel %vm3291, %v3241, 0
        %3295 = vmatprep.subr.bf16.mxu0 0
        %3296 = vmatpush1.bf16.msra.mxu0 %v3293
        %3297 = vmatprep.subr.bf16.mxu0 0
        %3298 = vmatpush1.bf16.msra.mxu0 0
        %3299 = vmatprep.subr.bf16.mxu0 0
        %3300 = vmatpush1.bf16.msra.mxu0 0
        %3301 = vmatprep.subr.bf16.mxu0 0
        %3302 = vmatpush1.bf16.msra.mxu0 0
        %3303 = vmatprep.subr.bf16.mxu0 0
        %3304 = vmatpush1.bf16.msra.mxu0 0
        %3305 = vmatprep.subr.bf16.mxu0 0
        %3306 = vmatpush1.bf16.msra.mxu0 0
        %3307 = vmatprep.subr.bf16.mxu0 0
        %3308 = vmatpush1.bf16.msra.mxu0 0
        %3309 = vmatprep.subr.bf16.mxu0 0
        %3310 = vmatpush1.bf16.msra.mxu0 0
        %3311 = vmatprep.subr.bf16.mxu0 0
        %3312 = vmatpush1.bf16.msra.mxu0 0
        %3313 = vmatprep.subr.bf16.mxu0 0
        %3314 = vmatpush1.bf16.msra.mxu0 0
        %3315 = vmatprep.subr.bf16.mxu0 0
        %3316 = vmatpush1.bf16.msra.mxu0 0
        %3317 = vmatprep.subr.bf16.mxu0 0
        %3318 = vmatpush1.bf16.msra.mxu0 0
        %3319 = vmatprep.subr.bf16.mxu0 0
        %3320 = vmatpush1.bf16.msra.mxu0 0
        %3321 = vmatprep.subr.bf16.mxu0 0
        %3322 = vmatpush1.bf16.msra.mxu0 0
        %3323 = vmatprep.subr.bf16.mxu0 0
        %3324 = vmatpush1.bf16.msra.mxu0 0
        %3325 = vmatprep.subr.bf16.mxu0 0
        %3326 = vmatpush1.bf16.msra.mxu0 0
        %3327 = vmatprep.mubr.bf16.mxu0 0
        %3328 = vmatmul.mubr.bf16.gmra.mrb[0].mxu0 %v3244
        %v3329 = vpop.f32.mrb[0].mxu0
        %v3330 = vadd.f32 0.0, %v3329
        %v3331 = vpop.f32.mrb[0].mxu0
        %v3332 = vpop.f32.mrb[0].mxu0
        %v3333 = vadd.f32 0.0, %v3332
        %v3334 = vpop.f32.mrb[0].mxu0
        %3335 = vmatprep.mubr.bf16.mxu0 0
        %3336 = vmatmul.mubr.bf16.gmra.mrb[0].mxu0 %v3247
        %v3337 = vpop.f32.mrb[0].mxu0
        %v3338 = vadd.f32 0.0, %v3337
        %v3339 = vpop.f32.mrb[0].mxu0
        %v3340 = vpop.f32.mrb[0].mxu0
        %v3341 = vadd.f32 0.0, %v3340
        %v3342 = vpop.f32.mrb[0].mxu0
        %3343 = vmatprep.mubr.bf16.mxu0 0
        %3344 = vmatmul.mubr.bf16.gmra.mrb[0].mxu0 %v3250
        %v3345 = vpop.f32.mrb[0].mxu0
        %v3346 = vadd.f32 0.0, %v3345
        %v3347 = vpop.f32.mrb[0].mxu0
        %v3348 = vpop.f32.mrb[0].mxu0
        %v3349 = vadd.f32 0.0, %v3348
        %v3350 = vpop.f32.mrb[0].mxu0
        %3351 = vmatprep.mubr.bf16.mxu0 0
        %3352 = vmatmul.mubr.bf16.gmra.mrb[0].mxu0 %v3253
        %v3353 = vpop.f32.mrb[0].mxu0
        %v3354 = vadd.f32 0.0, %v3353
        %v3355 = vpop.f32.mrb[0].mxu0
        %v3356 = vpop.f32.mrb[0].mxu0
        %v3357 = vadd.f32 0.0, %v3356
        %v3358 = vpop.f32.mrb[0].mxu0
        %3359 = vmatprep.mubr.bf16.mxu0 0
        %3360 = vmatmul.mubr.bf16.gmra.mrb[0].mxu0 %v3256
        %v3361 = vpop.f32.mrb[0].mxu0
        %v3362 = vadd.f32 0.0, %v3361
        %v3363 = vpop.f32.mrb[0].mxu0
        %v3364 = vpop.f32.mrb[0].mxu0
        %v3365 = vadd.f32 0.0, %v3364
        %v3366 = vpop.f32.mrb[0].mxu0
        %3367 = vmatprep.mubr.bf16.mxu0 0
        %3368 = vmatmul.mubr.bf16.gmra.mrb[0].mxu0 %v3259
        %v3369 = vpop.f32.mrb[0].mxu0
        %v3370 = vadd.f32 0.0, %v3369
        %v3371 = vpop.f32.mrb[0].mxu0
        %v3372 = vpop.f32.mrb[0].mxu0
        %v3373 = vadd.f32 0.0, %v3372
        %v3374 = vpop.f32.mrb[0].mxu0
        %3375 = vmatprep.mubr.bf16.mxu0 0
        %3376 = vmatmul.mubr.bf16.gmra.mrb[0].mxu0 %v3262
        %v3377 = vpop.f32.mrb[0].mxu0
        %v3378 = vadd.f32 0.0, %v3377
        %v3379 = vpop.f32.mrb[0].mxu0
        %v3380 = vpop.f32.mrb[0].mxu0
        %v3381 = vadd.f32 0.0, %v3380
        %v3382 = vpop.f32.mrb[0].mxu0
        %3383 = vmatprep.mubr.bf16.mxu0 0
        %3384 = vmatmul.mubr.bf16.gmra.mrb[0].mxu0 %v3265
        %v3385 = vpop.f32.mrb[0].mxu0
        %v3386 = vadd.f32 0.0, %v3385
        %v3387 = vpop.f32.mrb[0].mxu0
        %v3388 = vpop.f32.mrb[0].mxu0
        %v3389 = vadd.f32 0.0, %v3388
        %v3390 = vpop.f32.mrb[0].mxu0
        %3391 = vmatprep.mubr.bf16.mxu0 0
        %3392 = vmatmul.mubr.bf16.gmra.mrb[0].mxu0 %v3268
        %v3393 = vpop.f32.mrb[0].mxu0
        %v3394 = vadd.f32 0.0, %v3393
        %v3395 = vpop.f32.mrb[0].mxu0
        %v3396 = vpop.f32.mrb[0].mxu0
        %v3397 = vadd.f32 0.0, %v3396
        %v3398 = vpop.f32.mrb[0].mxu0
        %3399 = vmatprep.mubr.bf16.mxu0 0
        %3400 = vmatmul.mubr.bf16.gmra.mrb[0].mxu0 %v3271
        %v3401 = vpop.f32.mrb[0].mxu0
        %v3402 = vadd.f32 0.0, %v3401
        %v3403 = vpop.f32.mrb[0].mxu0
        %v3404 = vpop.f32.mrb[0].mxu0
        %v3405 = vadd.f32 0.0, %v3404
        %v3406 = vpop.f32.mrb[0].mxu0
        %3407 = vmatprep.mubr.bf16.mxu0 0
        %3408 = vmatmul.mubr.bf16.gmra.mrb[0].mxu0 %v3274
        %v3409 = vpop.f32.mrb[0].mxu0
        %v3410 = vadd.f32 0.0, %v3409
        %v3411 = vpop.f32.mrb[0].mxu0
        %v3412 = vpop.f32.mrb[0].mxu0
        %v3413 = vadd.f32 0.0, %v3412
        %v3414 = vpop.f32.mrb[0].mxu0
        %3415 = vmatprep.mubr.bf16.mxu0 0
        %3416 = vmatmul.mubr.bf16.gmra.mrb[0].mxu0 %v3277
        %v3417 = vpop.f32.mrb[0].mxu0
        %v3418 = vadd.f32 0.0, %v3417
        %v3419 = vpop.f32.mrb[0].mxu0
        %v3420 = vpop.f32.mrb[0].mxu0
        %v3421 = vadd.f32 0.0, %v3420
        %v3422 = vpop.f32.mrb[0].mxu0
        %3423 = vmatprep.mubr.bf16.mxu0 0
        %3424 = vmatmul.mubr.bf16.gmra.mrb[0].mxu0 %v3280
        %v3425 = vpop.f32.mrb[0].mxu0
        %v3426 = vadd.f32 0.0, %v3425
        %v3427 = vpop.f32.mrb[0].mxu0
        %v3428 = vpop.f32.mrb[0].mxu0
        %v3429 = vadd.f32 0.0, %v3428
        %v3430 = vpop.f32.mrb[0].mxu0
        %3431 = vmatprep.mubr.bf16.mxu0 0
        %3432 = vmatmul.mubr.bf16.gmra.mrb[0].mxu0 %v3283
        %v3433 = vpop.f32.mrb[0].mxu0
        %v3434 = vadd.f32 0.0, %v3433
        %v3435 = vpop.f32.mrb[0].mxu0
        %v3436 = vpop.f32.mrb[0].mxu0
        %v3437 = vadd.f32 0.0, %v3436
        %v3438 = vpop.f32.mrb[0].mxu0
        %3439 = vmatprep.mubr.bf16.mxu0 0
        %3440 = vmatmul.mubr.bf16.gmra.mrb[0].mxu0 %v3286
        %v3441 = vpop.f32.mrb[0].mxu0
        %v3442 = vadd.f32 0.0, %v3441
        %v3443 = vpop.f32.mrb[0].mxu0
        %v3444 = vpop.f32.mrb[0].mxu0
        %v3445 = vadd.f32 0.0, %v3444
        %v3446 = vpop.f32.mrb[0].mxu0
        %3447 = vmatprep.mubr.bf16.mxu0 0
        %3448 = vmatmul.mubr.bf16.gmra.mrb[0].mxu0 %v3289
        %v3449 = vpop.f32.mrb[0].mxu0
        %v3450 = vadd.f32 0.0, %v3449
        %v3451 = vpop.f32.mrb[0].mxu0
        %v3452 = vpop.f32.mrb[0].mxu0
        %v3453 = vadd.f32 0.0, %v3452
        %v3454 = vpop.f32.mrb[0].mxu0
        %3455 = vdwg.mxu0
        %vm3456 = vcmask 523264
        %v3457 = vsel %vm3456, %v3330, -inf
        %3458 = vmax.xlane.f32.xlu0 %v3457
        %v3459 = vpop.xlane.xlu0 %3458
        %v3460 = vsel %vm3456, %v3333, -inf
        %3461 = vmax.xlane.f32.xlu0 %v3460
        %v3462 = vpop.xlane.xlu0 %3461
        %v3463 = vsel %vm3456, %v3338, -inf
        %3464 = vmax.xlane.f32.xlu0 %v3463
        %v3465 = vpop.xlane.xlu0 %3464
        %v3466 = vsel %vm3456, %v3341, -inf
        %3467 = vmax.xlane.f32.xlu0 %v3466
        %v3468 = vpop.xlane.xlu0 %3467
        %v3469 = vsel %vm3456, %v3346, -inf
        %3470 = vmax.xlane.f32.xlu0 %v3469
        %v3471 = vpop.xlane.xlu0 %3470
        %v3472 = vsel %vm3456, %v3349, -inf
        %3473 = vmax.xlane.f32.xlu0 %v3472
        %v3474 = vpop.xlane.xlu0 %3473
        %v3475 = vsel %vm3456, %v3354, -inf
        %3476 = vmax.xlane.f32.xlu0 %v3475
        %v3477 = vpop.xlane.xlu0 %3476
        %v3478 = vsel %vm3456, %v3357, -inf
        %3479 = vmax.xlane.f32.xlu0 %v3478
        %v3480 = vpop.xlane.xlu0 %3479
        %v3481 = vsel %vm3456, %v3362, -inf
        %3482 = vmax.xlane.f32.xlu0 %v3481
        %v3483 = vpop.xlane.xlu0 %3482
        %v3484 = vsel %vm3456, %v3365, -inf
        %3485 = vmax.xlane.f32.xlu0 %v3484
        %v3486 = vpop.xlane.xlu0 %3485
        %v3487 = vsel %vm3456, %v3370, -inf
        %3488 = vmax.xlane.f32.xlu0 %v3487
        %v3489 = vpop.xlane.xlu0 %3488
        %v3490 = vsel %vm3456, %v3373, -inf
        %3491 = vmax.xlane.f32.xlu0 %v3490
        %v3492 = vpop.xlane.xlu0 %3491
        %v3493 = vsel %vm3456, %v3378, -inf
        %3494 = vmax.xlane.f32.xlu0 %v3493
        %v3495 = vpop.xlane.xlu0 %3494
        %v3496 = vsel %vm3456, %v3381, -inf
        %3497 = vmax.xlane.f32.xlu0 %v3496
        %v3498 = vpop.xlane.xlu0 %3497
        %v3499 = vsel %vm3456, %v3386, -inf
        %3500 = vmax.xlane.f32.xlu0 %v3499
        %v3501 = vpop.xlane.xlu0 %3500
        %v3502 = vsel %vm3456, %v3389, -inf
        %3503 = vmax.xlane.f32.xlu0 %v3502
        %v3504 = vpop.xlane.xlu0 %3503
        %v3505 = vsel %vm3456, %v3394, -inf
        %3506 = vmax.xlane.f32.xlu0 %v3505
        %v3507 = vpop.xlane.xlu0 %3506
        %v3508 = vsel %vm3456, %v3397, -inf
        %3509 = vmax.xlane.f32.xlu0 %v3508
        %v3510 = vpop.xlane.xlu0 %3509
        %v3511 = vsel %vm3456, %v3402, -inf
        %3512 = vmax.xlane.f32.xlu0 %v3511
        %v3513 = vpop.xlane.xlu0 %3512
        %v3514 = vsel %vm3456, %v3405, -inf
        %3515 = vmax.xlane.f32.xlu0 %v3514
        %v3516 = vpop.xlane.xlu0 %3515
        %v3517 = vsel %vm3456, %v3410, -inf
        %3518 = vmax.xlane.f32.xlu0 %v3517
        %v3519 = vpop.xlane.xlu0 %3518
        %v3520 = vsel %vm3456, %v3413, -inf
        %3521 = vmax.xlane.f32.xlu0 %v3520
        %v3522 = vpop.xlane.xlu0 %3521
        %v3523 = vsel %vm3456, %v3418, -inf
        %3524 = vmax.xlane.f32.xlu0 %v3523
        %v3525 = vpop.xlane.xlu0 %3524
        %v3526 = vsel %vm3456, %v3421, -inf
        %3527 = vmax.xlane.f32.xlu0 %v3526
        %v3528 = vpop.xlane.xlu0 %3527
        %v3529 = vsel %vm3456, %v3426, -inf
        %3530 = vmax.xlane.f32.xlu0 %v3529
        %v3531 = vpop.xlane.xlu0 %3530
        %v3532 = vsel %vm3456, %v3429, -inf
        %3533 = vmax.xlane.f32.xlu0 %v3532
        %v3534 = vpop.xlane.xlu0 %3533
        %v3535 = vsel %vm3456, %v3434, -inf
        %3536 = vmax.xlane.f32.xlu0 %v3535
        %v3537 = vpop.xlane.xlu0 %3536
        %v3538 = vsel %vm3456, %v3437, -inf
        %3539 = vmax.xlane.f32.xlu0 %v3538
        %v3540 = vpop.xlane.xlu0 %3539
        %v3541 = vsel %vm3456, %v3442, -inf
        %3542 = vmax.xlane.f32.xlu0 %v3541
        %v3543 = vpop.xlane.xlu0 %3542
        %v3544 = vsel %vm3456, %v3445, -inf
        %3545 = vmax.xlane.f32.xlu0 %v3544
        %v3546 = vpop.xlane.xlu0 %3545
        %v3547 = vsel %vm3456, %v3450, -inf
        %3548 = vmax.xlane.f32.xlu0 %v3547
        %v3549 = vpop.xlane.xlu0 %3548
        %v3550 = vsel %vm3456, %v3453, -inf
        %3551 = vmax.xlane.f32.xlu0 %v3550
        %v3552 = vpop.xlane.xlu0 %3551
        %v3553 = vsub.f32 %v3330, %v3459
        %v3554 = vsub.f32 %v3333, %v3462
        %v3555 = vsub.f32 %v3338, %v3465
        %v3556 = vsub.f32 %v3341, %v3468
        %v3557 = vsub.f32 %v3346, %v3471
        %v3558 = vsub.f32 %v3349, %v3474
        %v3559 = vsub.f32 %v3354, %v3477
        %v3560 = vsub.f32 %v3357, %v3480
        %v3561 = vsub.f32 %v3362, %v3483
        %v3562 = vsub.f32 %v3365, %v3486
        %v3563 = vsub.f32 %v3370, %v3489
        %v3564 = vsub.f32 %v3373, %v3492
        %v3565 = vsub.f32 %v3378, %v3495
        %v3566 = vsub.f32 %v3381, %v3498
        %v3567 = vsub.f32 %v3386, %v3501
        %v3568 = vsub.f32 %v3389, %v3504
        %v3569 = vsub.f32 %v3394, %v3507
        %v3570 = vsub.f32 %v3397, %v3510
        %v3571 = vsub.f32 %v3402, %v3513
        %v3572 = vsub.f32 %v3405, %v3516
        %v3573 = vsub.f32 %v3410, %v3519
        %v3574 = vsub.f32 %v3413, %v3522
        %v3575 = vsub.f32 %v3418, %v3525
        %v3576 = vsub.f32 %v3421, %v3528
        %v3577 = vsub.f32 %v3426, %v3531
        %v3578 = vsub.f32 %v3429, %v3534
        %v3579 = vsub.f32 %v3434, %v3537
        %v3580 = vsub.f32 %v3437, %v3540
        %v3581 = vsub.f32 %v3442, %v3543
        %v3582 = vsub.f32 %v3445, %v3546
        %v3583 = vsub.f32 %v3450, %v3549
        %v3584 = vsub.f32 %v3453, %v3552
        %v3585 = vmul.f32 %v3553, 1.442695
        %v3586 = vpow.pop %v3585
        %v3587 = vmul.f32 %v3554, 1.442695
        %v3588 = vpow.pop %v3587
        %v3589 = vmul.f32 %v3555, 1.442695
        %v3590 = vpow.pop %v3589
        %v3591 = vmul.f32 %v3556, 1.442695
        %v3592 = vpow.pop %v3591
        %v3593 = vmul.f32 %v3557, 1.442695
        %v3594 = vpow.pop %v3593
        %v3595 = vmul.f32 %v3558, 1.442695
        %v3596 = vpow.pop %v3595
        %v3597 = vmul.f32 %v3559, 1.442695
        %v3598 = vpow.pop %v3597
        %v3599 = vmul.f32 %v3560, 1.442695
        %v3600 = vpow.pop %v3599
        %v3601 = vmul.f32 %v3561, 1.442695
        %v3602 = vpow.pop %v3601
        %v3603 = vmul.f32 %v3562, 1.442695
        %v3604 = vpow.pop %v3603
        %v3605 = vmul.f32 %v3563, 1.442695
        %v3606 = vpow.pop %v3605
        %v3607 = vmul.f32 %v3564, 1.442695
        %v3608 = vpow.pop %v3607
        %v3609 = vmul.f32 %v3565, 1.442695
        %v3610 = vpow.pop %v3609
        %v3611 = vmul.f32 %v3566, 1.442695
        %v3612 = vpow.pop %v3611
        %v3613 = vmul.f32 %v3567, 1.442695
        %v3614 = vpow.pop %v3613
        %v3615 = vmul.f32 %v3568, 1.442695
        %v3616 = vpow.pop %v3615
        %v3617 = vmul.f32 %v3569, 1.442695
        %v3618 = vpow.pop %v3617
        %v3619 = vmul.f32 %v3570, 1.442695
        %v3620 = vpow.pop %v3619
        %v3621 = vmul.f32 %v3571, 1.442695
        %v3622 = vpow.pop %v3621
        %v3623 = vmul.f32 %v3572, 1.442695
        %v3624 = vpow.pop %v3623
        %v3625 = vmul.f32 %v3573, 1.442695
        %v3626 = vpow.pop %v3625
        %v3627 = vmul.f32 %v3574, 1.442695
        %v3628 = vpow.pop %v3627
        %v3629 = vmul.f32 %v3575, 1.442695
        %v3630 = vpow.pop %v3629
        %v3631 = vmul.f32 %v3576, 1.442695
        %v3632 = vpow.pop %v3631
        %v3633 = vmul.f32 %v3577, 1.442695
        %v3634 = vpow.pop %v3633
        %v3635 = vmul.f32 %v3578, 1.442695
        %v3636 = vpow.pop %v3635
        %v3637 = vmul.f32 %v3579, 1.442695
        %v3638 = vpow.pop %v3637
        %v3639 = vmul.f32 %v3580, 1.442695
        %v3640 = vpow.pop %v3639
        %v3641 = vmul.f32 %v3581, 1.442695
        %v3642 = vpow.pop %v3641
        %v3643 = vmul.f32 %v3582, 1.442695
        %v3644 = vpow.pop %v3643
        %v3645 = vmul.f32 %v3583, 1.442695
        %v3646 = vpow.pop %v3645
        %v3647 = vmul.f32 %v3584, 1.442695
        %v3648 = vpow.pop %v3647
        %v3649 = vsel %vm3456, %v3586, 0.0
        %3650 = vadd.xlane.f32.xlu0 %v3649
        %v3651 = vpop.xlane.xlu0 %3650
        %v3652 = vsel %vm3456, %v3588, 0.0
        %3653 = vadd.xlane.f32.xlu0 %v3652
        %v3654 = vpop.xlane.xlu0 %3653
        %v3655 = vsel %vm3456, %v3590, 0.0
        %3656 = vadd.xlane.f32.xlu0 %v3655
        %v3657 = vpop.xlane.xlu0 %3656
        %v3658 = vsel %vm3456, %v3592, 0.0
        %3659 = vadd.xlane.f32.xlu0 %v3658
        %v3660 = vpop.xlane.xlu0 %3659
        %v3661 = vsel %vm3456, %v3594, 0.0
        %3662 = vadd.xlane.f32.xlu0 %v3661
        %v3663 = vpop.xlane.xlu0 %3662
        %v3664 = vsel %vm3456, %v3596, 0.0
        %3665 = vadd.xlane.f32.xlu0 %v3664
        %v3666 = vpop.xlane.xlu0 %3665
        %v3667 = vsel %vm3456, %v3598, 0.0
        %3668 = vadd.xlane.f32.xlu0 %v3667
        %v3669 = vpop.xlane.xlu0 %3668
        %v3670 = vsel %vm3456, %v3600, 0.0
        %3671 = vadd.xlane.f32.xlu0 %v3670
        %v3672 = vpop.xlane.xlu0 %3671
        %v3673 = vsel %vm3456, %v3602, 0.0
        %3674 = vadd.xlane.f32.xlu0 %v3673
        %v3675 = vpop.xlane.xlu0 %3674
        %v3676 = vsel %vm3456, %v3604, 0.0
        %3677 = vadd.xlane.f32.xlu0 %v3676
        %v3678 = vpop.xlane.xlu0 %3677
        %v3679 = vsel %vm3456, %v3606, 0.0
        %3680 = vadd.xlane.f32.xlu0 %v3679
        %v3681 = vpop.xlane.xlu0 %3680
        %v3682 = vsel %vm3456, %v3608, 0.0
        %3683 = vadd.xlane.f32.xlu0 %v3682
        %v3684 = vpop.xlane.xlu0 %3683
        %v3685 = vsel %vm3456, %v3610, 0.0
        %3686 = vadd.xlane.f32.xlu0 %v3685
        %v3687 = vpop.xlane.xlu0 %3686
        %v3688 = vsel %vm3456, %v3612, 0.0
        %3689 = vadd.xlane.f32.xlu0 %v3688
        %v3690 = vpop.xlane.xlu0 %3689
        %v3691 = vsel %vm3456, %v3614, 0.0
        %3692 = vadd.xlane.f32.xlu0 %v3691
        %v3693 = vpop.xlane.xlu0 %3692
        %v3694 = vsel %vm3456, %v3616, 0.0
        %3695 = vadd.xlane.f32.xlu0 %v3694
        %v3696 = vpop.xlane.xlu0 %3695
        %v3697 = vsel %vm3456, %v3618, 0.0
        %3698 = vadd.xlane.f32.xlu0 %v3697
        %v3699 = vpop.xlane.xlu0 %3698
        %v3700 = vsel %vm3456, %v3620, 0.0
        %3701 = vadd.xlane.f32.xlu0 %v3700
        %v3702 = vpop.xlane.xlu0 %3701
        %v3703 = vsel %vm3456, %v3622, 0.0
        %3704 = vadd.xlane.f32.xlu0 %v3703
        %v3705 = vpop.xlane.xlu0 %3704
        %v3706 = vsel %vm3456, %v3624, 0.0
        %3707 = vadd.xlane.f32.xlu0 %v3706
        %v3708 = vpop.xlane.xlu0 %3707
        %v3709 = vsel %vm3456, %v3626, 0.0
        %3710 = vadd.xlane.f32.xlu0 %v3709
        %v3711 = vpop.xlane.xlu0 %3710
        %v3712 = vsel %vm3456, %v3628, 0.0
        %3713 = vadd.xlane.f32.xlu0 %v3712
        %v3714 = vpop.xlane.xlu0 %3713
        %v3715 = vsel %vm3456, %v3630, 0.0
        %3716 = vadd.xlane.f32.xlu0 %v3715
        %v3717 = vpop.xlane.xlu0 %3716
        %v3718 = vsel %vm3456, %v3632, 0.0
        %3719 = vadd.xlane.f32.xlu0 %v3718
        %v3720 = vpop.xlane.xlu0 %3719
        %v3721 = vsel %vm3456, %v3634, 0.0
        %3722 = vadd.xlane.f32.xlu0 %v3721
        %v3723 = vpop.xlane.xlu0 %3722
        %v3724 = vsel %vm3456, %v3636, 0.0
        %3725 = vadd.xlane.f32.xlu0 %v3724
        %v3726 = vpop.xlane.xlu0 %3725
        %v3727 = vsel %vm3456, %v3638, 0.0
        %3728 = vadd.xlane.f32.xlu0 %v3727
        %v3729 = vpop.xlane.xlu0 %3728
        %v3730 = vsel %vm3456, %v3640, 0.0
        %3731 = vadd.xlane.f32.xlu0 %v3730
        %v3732 = vpop.xlane.xlu0 %3731
        %v3733 = vsel %vm3456, %v3642, 0.0
        %3734 = vadd.xlane.f32.xlu0 %v3733
        %v3735 = vpop.xlane.xlu0 %3734
        %v3736 = vsel %vm3456, %v3644, 0.0
        %3737 = vadd.xlane.f32.xlu0 %v3736
        %v3738 = vpop.xlane.xlu0 %3737
        %v3739 = vsel %vm3456, %v3646, 0.0
        %3740 = vadd.xlane.f32.xlu0 %v3739
        %v3741 = vpop.xlane.xlu0 %3740
        %v3742 = vsel %vm3456, %v3648, 0.0
        %3743 = vadd.xlane.f32.xlu0 %v3742
        %v3744 = vpop.xlane.xlu0 %3743
        %v3745 = vrcp.pop %v3651
        %v3746 = vrcp.pop %v3654
        %v3747 = vrcp.pop %v3657
        %v3748 = vrcp.pop %v3660
        %v3749 = vrcp.pop %v3663
        %v3750 = vrcp.pop %v3666
        %v3751 = vrcp.pop %v3669
        %v3752 = vrcp.pop %v3672
        %v3753 = vrcp.pop %v3675
        %v3754 = vrcp.pop %v3678
        %v3755 = vrcp.pop %v3681
        %v3756 = vrcp.pop %v3684
        %v3757 = vrcp.pop %v3687
        %v3758 = vrcp.pop %v3690
        %v3759 = vrcp.pop %v3693
        %v3760 = vrcp.pop %v3696
        %v3761 = vrcp.pop %v3699
        %v3762 = vrcp.pop %v3702
        %v3763 = vrcp.pop %v3705
        %v3764 = vrcp.pop %v3708
        %v3765 = vrcp.pop %v3711
        %v3766 = vrcp.pop %v3714
        %v3767 = vrcp.pop %v3717
        %v3768 = vrcp.pop %v3720
        %v3769 = vrcp.pop %v3723
        %v3770 = vrcp.pop %v3726
        %v3771 = vrcp.pop %v3729
        %v3772 = vrcp.pop %v3732
        %v3773 = vrcp.pop %v3735
        %v3774 = vrcp.pop %v3738
        %v3775 = vrcp.pop %v3741
        %v3776 = vrcp.pop %v3744
        %v3777 = vmul.f32 %v3586, %v3745
        %v3778 = vmul.f32 %v3588, %v3746
        %v3779 = vmul.f32 %v3590, %v3747
        %v3780 = vmul.f32 %v3592, %v3748
        %v3781 = vmul.f32 %v3594, %v3749
        %v3782 = vmul.f32 %v3596, %v3750
        %v3783 = vmul.f32 %v3598, %v3751
        %v3784 = vmul.f32 %v3600, %v3752
        %v3785 = vmul.f32 %v3602, %v3753
        %v3786 = vmul.f32 %v3604, %v3754
        %v3787 = vmul.f32 %v3606, %v3755
        %v3788 = vmul.f32 %v3608, %v3756
        %v3789 = vmul.f32 %v3610, %v3757
        %v3790 = vmul.f32 %v3612, %v3758
        %v3791 = vmul.f32 %v3614, %v3759
        %v3792 = vmul.f32 %v3616, %v3760
        %v3793 = vmul.f32 %v3618, %v3761
        %v3794 = vmul.f32 %v3620, %v3762
        %v3795 = vmul.f32 %v3622, %v3763
        %v3796 = vmul.f32 %v3624, %v3764
        %v3797 = vmul.f32 %v3626, %v3765
        %v3798 = vmul.f32 %v3628, %v3766
        %v3799 = vmul.f32 %v3630, %v3767
        %v3800 = vmul.f32 %v3632, %v3768
        %v3801 = vmul.f32 %v3634, %v3769
        %v3802 = vmul.f32 %v3636, %v3770
        %v3803 = vmul.f32 %v3638, %v3771
        %v3804 = vmul.f32 %v3640, %v3772
        %v3805 = vmul.f32 %v3642, %v3773
        %v3806 = vmul.f32 %v3644, %v3774
        %v3807 = vmul.f32 %v3646, %v3775
        %v3808 = vmul.f32 %v3648, %v3776
        %v3809 = vpack.c.bf16 %v3778, %v3777
        %v3810 = vpack.c.bf16 %v3780, %v3779
        %v3811 = vpack.c.bf16 %v3782, %v3781
        %v3812 = vpack.c.bf16 %v3784, %v3783
        %v3813 = vpack.c.bf16 %v3786, %v3785
        %v3814 = vpack.c.bf16 %v3788, %v3787
        %v3815 = vpack.c.bf16 %v3790, %v3789
        %v3816 = vpack.c.bf16 %v3792, %v3791
        %v3817 = vpack.c.bf16 %v3794, %v3793
        %v3818 = vpack.c.bf16 %v3796, %v3795
        %v3819 = vpack.c.bf16 %v3798, %v3797
        %v3820 = vpack.c.bf16 %v3800, %v3799
        %v3821 = vpack.c.bf16 %v3802, %v3801
        %v3822 = vpack.c.bf16 %v3804, %v3803
        %v3823 = vpack.c.bf16 %v3806, %v3805
        %v3824 = vpack.c.bf16 %v3808, %v3807
        %v3825 = vld [vmem:[#allocation3] sm:$0xff]
        %v3826 = vld [vmem:[#allocation3 + $0x8] sm:$0xff]
        %v3827 = vld [vmem:[#allocation3 + $0x10] sm:$0xff]
        %v3828 = vld [vmem:[#allocation3 + $0x18] sm:$0xff]
        %v3830 = vsel %vm3456, %v3809, 0
        %v3833 = vsel %vm3456, %v3810, 0
        %v3836 = vsel %vm3456, %v3811, 0
        %v3839 = vsel %vm3456, %v3812, 0
        %v3842 = vsel %vm3456, %v3813, 0
        %v3845 = vsel %vm3456, %v3814, 0
        %v3848 = vsel %vm3456, %v3815, 0
        %v3851 = vsel %vm3456, %v3816, 0
        %v3854 = vsel %vm3456, %v3817, 0
        %v3857 = vsel %vm3456, %v3818, 0
        %v3860 = vsel %vm3456, %v3819, 0
        %v3863 = vsel %vm3456, %v3820, 0
        %v3866 = vsel %vm3456, %v3821, 0
        %v3869 = vsel %vm3456, %v3822, 0
        %v3872 = vsel %vm3456, %v3823, 0
        %v3875 = vsel %vm3456, %v3824, 0
        %3877 = vmatprep.subr.bf16.mxu0 0
        %3878 = vmatpush1.bf16.msra.mxu0 %v3825
        %3879 = vmatprep.subr.bf16.mxu0 0
        %3880 = vmatpush1.bf16.msra.mxu0 %v3826
        %3881 = vmatprep.subr.bf16.mxu0 0
        %3882 = vmatpush1.bf16.msra.mxu0 %v3827
        %3883 = vmatprep.subr.bf16.mxu0 0
        %3884 = vmatpush1.bf16.msra.mxu0 %v3828
        %3885 = vmatprep.subr.bf16.mxu0 0
        %3886 = vmatpush1.bf16.msra.mxu0 0
        %3887 = vmatprep.subr.bf16.mxu0 0
        %3888 = vmatpush1.bf16.msra.mxu0 0
        %3889 = vmatprep.subr.bf16.mxu0 0
        %3890 = vmatpush1.bf16.msra.mxu0 0
        %3891 = vmatprep.subr.bf16.mxu0 0
        %3892 = vmatpush1.bf16.msra.mxu0 0
        %3893 = vmatprep.subr.bf16.mxu0 0
        %3894 = vmatpush1.bf16.msra.mxu0 0
        %3895 = vmatprep.subr.bf16.mxu0 0
        %3896 = vmatpush1.bf16.msra.mxu0 0
        %3897 = vmatprep.subr.bf16.mxu0 0
        %3898 = vmatpush1.bf16.msra.mxu0 0
        %3899 = vmatprep.subr.bf16.mxu0 0
        %3900 = vmatpush1.bf16.msra.mxu0 0
        %3901 = vmatprep.subr.bf16.mxu0 0
        %3902 = vmatpush1.bf16.msra.mxu0 0
        %3903 = vmatprep.subr.bf16.mxu0 0
        %3904 = vmatpush1.bf16.msra.mxu0 0
        %3905 = vmatprep.subr.bf16.mxu0 0
        %3906 = vmatpush1.bf16.msra.mxu0 0
        %3907 = vmatprep.subr.bf16.mxu0 0
        %3908 = vmatpush1.bf16.msra.mxu0 0
        %3909 = vmatprep.mubr.bf16.mxu0 0
        %3910 = vmatmul.mubr.bf16.gmra.mrb[0].mxu0 %v3830
        %v3911 = vpop.f32.mrb[0].mxu0
        %v3912 = vadd.f32 0.0, %v3911
        %v3913 = vpop.f32.mrb[0].mxu0
        %v3914 = vpop.f32.mrb[0].mxu0
        %v3915 = vadd.f32 0.0, %v3914
        %v3916 = vpop.f32.mrb[0].mxu0
        %3917 = vmatprep.mubr.bf16.mxu0 0
        %3918 = vmatmul.mubr.bf16.gmra.mrb[0].mxu0 %v3833
        %v3919 = vpop.f32.mrb[0].mxu0
        %v3920 = vadd.f32 0.0, %v3919
        %v3921 = vpop.f32.mrb[0].mxu0
        %v3922 = vpop.f32.mrb[0].mxu0
        %v3923 = vadd.f32 0.0, %v3922
        %v3924 = vpop.f32.mrb[0].mxu0
        %3925 = vmatprep.mubr.bf16.mxu0 0
        %3926 = vmatmul.mubr.bf16.gmra.mrb[0].mxu0 %v3836
        %v3927 = vpop.f32.mrb[0].mxu0
        %v3928 = vadd.f32 0.0, %v3927
        %v3929 = vpop.f32.mrb[0].mxu0
        %v3930 = vpop.f32.mrb[0].mxu0
        %v3931 = vadd.f32 0.0, %v3930
        %v3932 = vpop.f32.mrb[0].mxu0
        %3933 = vmatprep.mubr.bf16.mxu0 0
        %3934 = vmatmul.mubr.bf16.gmra.mrb[0].mxu0 %v3839
        %v3935 = vpop.f32.mrb[0].mxu0
        %v3936 = vadd.f32 0.0, %v3935
        %v3937 = vpop.f32.mrb[0].mxu0
        %v3938 = vpop.f32.mrb[0].mxu0
        %v3939 = vadd.f32 0.0, %v3938
        %v3940 = vpop.f32.mrb[0].mxu0
        %3941 = vmatprep.mubr.bf16.mxu0 0
        %3942 = vmatmul.mubr.bf16.gmra.mrb[0].mxu0 %v3842
        %v3943 = vpop.f32.mrb[0].mxu0
        %v3944 = vadd.f32 0.0, %v3943
        %v3945 = vpop.f32.mrb[0].mxu0
        %v3946 = vpop.f32.mrb[0].mxu0
        %v3947 = vadd.f32 0.0, %v3946
        %v3948 = vpop.f32.mrb[0].mxu0
        %3949 = vmatprep.mubr.bf16.mxu0 0
        %3950 = vmatmul.mubr.bf16.gmra.mrb[0].mxu0 %v3845
        %v3951 = vpop.f32.mrb[0].mxu0
        %v3952 = vadd.f32 0.0, %v3951
        %v3953 = vpop.f32.mrb[0].mxu0
        %v3954 = vpop.f32.mrb[0].mxu0
        %v3955 = vadd.f32 0.0, %v3954
        %v3956 = vpop.f32.mrb[0].mxu0
        %3957 = vmatprep.mubr.bf16.mxu0 0
        %3958 = vmatmul.mubr.bf16.gmra.mrb[0].mxu0 %v3848
        %v3959 = vpop.f32.mrb[0].mxu0
        %v3960 = vadd.f32 0.0, %v3959
        %v3961 = vpop.f32.mrb[0].mxu0
        %v3962 = vpop.f32.mrb[0].mxu0
        %v3963 = vadd.f32 0.0, %v3962
        %v3964 = vpop.f32.mrb[0].mxu0
        %3965 = vmatprep.mubr.bf16.mxu0 0
        %3966 = vmatmul.mubr.bf16.gmra.mrb[0].mxu0 %v3851
        %v3967 = vpop.f32.mrb[0].mxu0
        %v3968 = vadd.f32 0.0, %v3967
        %v3969 = vpop.f32.mrb[0].mxu0
        %v3970 = vpop.f32.mrb[0].mxu0
        %v3971 = vadd.f32 0.0, %v3970
        %v3972 = vpop.f32.mrb[0].mxu0
        %3973 = vmatprep.mubr.bf16.mxu0 0
        %3974 = vmatmul.mubr.bf16.gmra.mrb[0].mxu0 %v3854
        %v3975 = vpop.f32.mrb[0].mxu0
        %v3976 = vadd.f32 0.0, %v3975
        %v3977 = vpop.f32.mrb[0].mxu0
        %v3978 = vpop.f32.mrb[0].mxu0
        %v3979 = vadd.f32 0.0, %v3978
        %v3980 = vpop.f32.mrb[0].mxu0
        %3981 = vmatprep.mubr.bf16.mxu0 0
        %3982 = vmatmul.mubr.bf16.gmra.mrb[0].mxu0 %v3857
        %v3983 = vpop.f32.mrb[0].mxu0
        %v3984 = vadd.f32 0.0, %v3983
        %v3985 = vpop.f32.mrb[0].mxu0
        %v3986 = vpop.f32.mrb[0].mxu0
        %v3987 = vadd.f32 0.0, %v3986
        %v3988 = vpop.f32.mrb[0].mxu0
        %3989 = vmatprep.mubr.bf16.mxu0 0
        %3990 = vmatmul.mubr.bf16.gmra.mrb[0].mxu0 %v3860
        %v3991 = vpop.f32.mrb[0].mxu0
        %v3992 = vadd.f32 0.0, %v3991
        %v3993 = vpop.f32.mrb[0].mxu0
        %v3994 = vpop.f32.mrb[0].mxu0
        %v3995 = vadd.f32 0.0, %v3994
        %v3996 = vpop.f32.mrb[0].mxu0
        %3997 = vmatprep.mubr.bf16.mxu0 0
        %3998 = vmatmul.mubr.bf16.gmra.mrb[0].mxu0 %v3863
        %v3999 = vpop.f32.mrb[0].mxu0
        %v4000 = vadd.f32 0.0, %v3999
        %v4001 = vpop.f32.mrb[0].mxu0
        %v4002 = vpop.f32.mrb[0].mxu0
        %v4003 = vadd.f32 0.0, %v4002
        %v4004 = vpop.f32.mrb[0].mxu0
        %4005 = vmatprep.mubr.bf16.mxu0 0
        %4006 = vmatmul.mubr.bf16.gmra.mrb[0].mxu0 %v3866
        %v4007 = vpop.f32.mrb[0].mxu0
        %v4008 = vadd.f32 0.0, %v4007
        %v4009 = vpop.f32.mrb[0].mxu0
        %v4010 = vpop.f32.mrb[0].mxu0
        %v4011 = vadd.f32 0.0, %v4010
        %v4012 = vpop.f32.mrb[0].mxu0
        %4013 = vmatprep.mubr.bf16.mxu0 0
        %4014 = vmatmul.mubr.bf16.gmra.mrb[0].mxu0 %v3869
        %v4015 = vpop.f32.mrb[0].mxu0
        %v4016 = vadd.f32 0.0, %v4015
        %v4017 = vpop.f32.mrb[0].mxu0
        %v4018 = vpop.f32.mrb[0].mxu0
        %v4019 = vadd.f32 0.0, %v4018
        %v4020 = vpop.f32.mrb[0].mxu0
        %4021 = vmatprep.mubr.bf16.mxu0 0
        %4022 = vmatmul.mubr.bf16.gmra.mrb[0].mxu0 %v3872
        %v4023 = vpop.f32.mrb[0].mxu0
        %v4024 = vadd.f32 0.0, %v4023
        %v4025 = vpop.f32.mrb[0].mxu0
        %v4026 = vpop.f32.mrb[0].mxu0
        %v4027 = vadd.f32 0.0, %v4026
        %v4028 = vpop.f32.mrb[0].mxu0
        %4029 = vmatprep.mubr.bf16.mxu0 0
        %4030 = vmatmul.mubr.bf16.gmra.mrb[0].mxu0 %v3875
        %v4031 = vpop.f32.mrb[0].mxu0
        %v4032 = vadd.f32 0.0, %v4031
        %v4033 = vpop.f32.mrb[0].mxu0
        %v4034 = vpop.f32.mrb[0].mxu0
        %v4035 = vadd.f32 0.0, %v4034
        %v4036 = vpop.f32.mrb[0].mxu0
        %4037 = vdwg.mxu0
        %v4038 = vpack.c.bf16 %v3915, %v3912
        %v4039 = vpack.c.bf16 %v3923, %v3920
        %v4040 = vpack.c.bf16 %v3931, %v3928
        %v4041 = vpack.c.bf16 %v3939, %v3936
        %v4042 = vpack.c.bf16 %v3947, %v3944
        %v4043 = vpack.c.bf16 %v3955, %v3952
        %v4044 = vpack.c.bf16 %v3963, %v3960
        %v4045 = vpack.c.bf16 %v3971, %v3968
        %v4046 = vpack.c.bf16 %v3979, %v3976
        %v4047 = vpack.c.bf16 %v3987, %v3984
        %v4048 = vpack.c.bf16 %v3995, %v3992
        %v4049 = vpack.c.bf16 %v4003, %v4000
        %v4050 = vpack.c.bf16 %v4011, %v4008
        %v4051 = vpack.c.bf16 %v4019, %v4016
        %v4052 = vpack.c.bf16 %v4027, %v4024
        %v4053 = vpack.c.bf16 %v4035, %v4032
        %v4054 = vld [vmem:[%s5] sm:$0xf]
        %v4055 = vld [vmem:[%s5 + $0x4] sm:$0xf]
        %v4056 = vld [vmem:[%s6] sm:$0x1]
        %v4058 = vlaneseq
        %v4059 = vshrl.u32 %v4058, 7
        %v4060 = vsub.s32 0, %v4059
        %v4061 = vrot.slane %v4056, %v4060
        %v4065 = vunpack.c.l.b16 %v4054
        %v4066 = vunpack.c.l.b16 %v4055
        %v4067 = vpack.c.b16 %v4066, %v4065
        %vm4069 = vcmask 130048
        %v4071 = vsel %vm4069, %v4038, 0
        %v4074 = vsel %vm4069, %v4039, 0
        %v4077 = vsel %vm4069, %v4040, 0
        %v4080 = vsel %vm4069, %v4041, 0
        %v4083 = vsel %vm4069, %v4042, 0
        %v4086 = vsel %vm4069, %v4043, 0
        %v4089 = vsel %vm4069, %v4044, 0
        %v4092 = vsel %vm4069, %v4045, 0
        %v4095 = vsel %vm4069, %v4046, 0
        %v4098 = vsel %vm4069, %v4047, 0
        %v4101 = vsel %vm4069, %v4048, 0
        %v4104 = vsel %vm4069, %v4049, 0
        %v4107 = vsel %vm4069, %v4050, 0
        %v4110 = vsel %vm4069, %v4051, 0
        %v4113 = vsel %vm4069, %v4052, 0
        %v4116 = vsel %vm4069, %v4053, 0
        %4118 = vmatprep.subr.bf16.mxu0 0
        %4119 = vmatpush1.bf16.msra.mxu0 %v4067
        %4120 = vmatprep.subr.bf16.mxu0 0
        %4121 = vmatpush1.bf16.msra.mxu0 0
        %4122 = vmatprep.subr.bf16.mxu0 0
        %4123 = vmatpush1.bf16.msra.mxu0 0
        %4124 = vmatprep.subr.bf16.mxu0 0
        %4125 = vmatpush1.bf16.msra.mxu0 0
        %4126 = vmatprep.subr.bf16.mxu0 0
        %4127 = vmatpush1.bf16.msra.mxu0 0
        %4128 = vmatprep.subr.bf16.mxu0 0
        %4129 = vmatpush1.bf16.msra.mxu0 0
        %4130 = vmatprep.subr.bf16.mxu0 0
        %4131 = vmatpush1.bf16.msra.mxu0 0
        %4132 = vmatprep.subr.bf16.mxu0 0
        %4133 = vmatpush1.bf16.msra.mxu0 0
        %4134 = vmatprep.subr.bf16.mxu0 0
        %4135 = vmatpush1.bf16.msra.mxu0 0
        %4136 = vmatprep.subr.bf16.mxu0 0
        %4137 = vmatpush1.bf16.msra.mxu0 0
        %4138 = vmatprep.subr.bf16.mxu0 0
        %4139 = vmatpush1.bf16.msra.mxu0 0
        %4140 = vmatprep.subr.bf16.mxu0 0
        %4141 = vmatpush1.bf16.msra.mxu0 0
        %4142 = vmatprep.subr.bf16.mxu0 0
        %4143 = vmatpush1.bf16.msra.mxu0 0
        %4144 = vmatprep.subr.bf16.mxu0 0
        %4145 = vmatpush1.bf16.msra.mxu0 0
        %4146 = vmatprep.subr.bf16.mxu0 0
        %4147 = vmatpush1.bf16.msra.mxu0 0
        %4148 = vmatprep.subr.bf16.mxu0 0
        %4149 = vmatpush1.bf16.msra.mxu0 0
        %4150 = vmatprep.mubr.bf16.mxu0 0
        %4151 = vmatmul.mubr.bf16.gmra.mrb[0].mxu0 %v4071
        %v4152 = vpop.f32.mrb[0].mxu0
        %v4153 = vadd.f32 %v4061, %v4152
        %v4154 = vpop.f32.mrb[0].mxu0
        %v4155 = vpop.f32.mrb[0].mxu0
        %v4156 = vadd.f32 %v4061, %v4155
        %v4157 = vpop.f32.mrb[0].mxu0
        %4158 = vmatprep.mubr.bf16.mxu0 0
        %4159 = vmatmul.mubr.bf16.gmra.mrb[0].mxu0 %v4074
        %v4160 = vpop.f32.mrb[0].mxu0
        %v4161 = vadd.f32 %v4061, %v4160
        %v4162 = vpop.f32.mrb[0].mxu0
        %v4163 = vpop.f32.mrb[0].mxu0
        %v4164 = vadd.f32 %v4061, %v4163
        %v4165 = vpop.f32.mrb[0].mxu0
        %4166 = vmatprep.mubr.bf16.mxu0 0
        %4167 = vmatmul.mubr.bf16.gmra.mrb[0].mxu0 %v4077
        %v4168 = vpop.f32.mrb[0].mxu0
        %v4169 = vadd.f32 %v4061, %v4168
        %v4170 = vpop.f32.mrb[0].mxu0
        %v4171 = vpop.f32.mrb[0].mxu0
        %v4172 = vadd.f32 %v4061, %v4171
        %v4173 = vpop.f32.mrb[0].mxu0
        %4174 = vmatprep.mubr.bf16.mxu0 0
        %4175 = vmatmul.mubr.bf16.gmra.mrb[0].mxu0 %v4080
        %v4176 = vpop.f32.mrb[0].mxu0
        %v4177 = vadd.f32 %v4061, %v4176
        %v4178 = vpop.f32.mrb[0].mxu0
        %v4179 = vpop.f32.mrb[0].mxu0
        %v4180 = vadd.f32 %v4061, %v4179
        %v4181 = vpop.f32.mrb[0].mxu0
        %4182 = vmatprep.mubr.bf16.mxu0 0
        %4183 = vmatmul.mubr.bf16.gmra.mrb[0].mxu0 %v4083
        %v4184 = vpop.f32.mrb[0].mxu0
        %v4185 = vadd.f32 %v4061, %v4184
        %v4186 = vpop.f32.mrb[0].mxu0
        %v4187 = vpop.f32.mrb[0].mxu0
        %v4188 = vadd.f32 %v4061, %v4187
        %v4189 = vpop.f32.mrb[0].mxu0
        %4190 = vmatprep.mubr.bf16.mxu0 0
        %4191 = vmatmul.mubr.bf16.gmra.mrb[0].mxu0 %v4086
        %v4192 = vpop.f32.mrb[0].mxu0
        %v4193 = vadd.f32 %v4061, %v4192
        %v4194 = vpop.f32.mrb[0].mxu0
        %v4195 = vpop.f32.mrb[0].mxu0
        %v4196 = vadd.f32 %v4061, %v4195
        %v4197 = vpop.f32.mrb[0].mxu0
        %4198 = vmatprep.mubr.bf16.mxu0 0
        %4199 = vmatmul.mubr.bf16.gmra.mrb[0].mxu0 %v4089
        %v4200 = vpop.f32.mrb[0].mxu0
        %v4201 = vadd.f32 %v4061, %v4200
        %v4202 = vpop.f32.mrb[0].mxu0
        %v4203 = vpop.f32.mrb[0].mxu0
        %v4204 = vadd.f32 %v4061, %v4203
        %v4205 = vpop.f32.mrb[0].mxu0
        %4206 = vmatprep.mubr.bf16.mxu0 0
        %4207 = vmatmul.mubr.bf16.gmra.mrb[0].mxu0 %v4092
        %v4208 = vpop.f32.mrb[0].mxu0
        %v4209 = vadd.f32 %v4061, %v4208
        %v4210 = vpop.f32.mrb[0].mxu0
        %v4211 = vpop.f32.mrb[0].mxu0
        %v4212 = vadd.f32 %v4061, %v4211
        %v4213 = vpop.f32.mrb[0].mxu0
        %4214 = vmatprep.mubr.bf16.mxu0 0
        %4215 = vmatmul.mubr.bf16.gmra.mrb[0].mxu0 %v4095
        %v4216 = vpop.f32.mrb[0].mxu0
        %v4217 = vadd.f32 %v4061, %v4216
        %v4218 = vpop.f32.mrb[0].mxu0
        %v4219 = vpop.f32.mrb[0].mxu0
        %v4220 = vadd.f32 %v4061, %v4219
        %v4221 = vpop.f32.mrb[0].mxu0
        %4222 = vmatprep.mubr.bf16.mxu0 0
        %4223 = vmatmul.mubr.bf16.gmra.mrb[0].mxu0 %v4098
        %v4224 = vpop.f32.mrb[0].mxu0
        %v4225 = vadd.f32 %v4061, %v4224
        %v4226 = vpop.f32.mrb[0].mxu0
        %v4227 = vpop.f32.mrb[0].mxu0
        %v4228 = vadd.f32 %v4061, %v4227
        %v4229 = vpop.f32.mrb[0].mxu0
        %4230 = vmatprep.mubr.bf16.mxu0 0
        %4231 = vmatmul.mubr.bf16.gmra.mrb[0].mxu0 %v4101
        %v4232 = vpop.f32.mrb[0].mxu0
        %v4233 = vadd.f32 %v4061, %v4232
        %v4234 = vpop.f32.mrb[0].mxu0
        %v4235 = vpop.f32.mrb[0].mxu0
        %v4236 = vadd.f32 %v4061, %v4235
        %v4237 = vpop.f32.mrb[0].mxu0
        %4238 = vmatprep.mubr.bf16.mxu0 0
        %4239 = vmatmul.mubr.bf16.gmra.mrb[0].mxu0 %v4104
        %v4240 = vpop.f32.mrb[0].mxu0
        %v4241 = vadd.f32 %v4061, %v4240
        %v4242 = vpop.f32.mrb[0].mxu0
        %v4243 = vpop.f32.mrb[0].mxu0
        %v4244 = vadd.f32 %v4061, %v4243
        %v4245 = vpop.f32.mrb[0].mxu0
        %4246 = vmatprep.mubr.bf16.mxu0 0
        %4247 = vmatmul.mubr.bf16.gmra.mrb[0].mxu0 %v4107
        %v4248 = vpop.f32.mrb[0].mxu0
        %v4249 = vadd.f32 %v4061, %v4248
        %v4250 = vpop.f32.mrb[0].mxu0
        %v4251 = vpop.f32.mrb[0].mxu0
        %v4252 = vadd.f32 %v4061, %v4251
        %v4253 = vpop.f32.mrb[0].mxu0
        %4254 = vmatprep.mubr.bf16.mxu0 0
        %4255 = vmatmul.mubr.bf16.gmra.mrb[0].mxu0 %v4110
        %v4256 = vpop.f32.mrb[0].mxu0
        %v4257 = vadd.f32 %v4061, %v4256
        %v4258 = vpop.f32.mrb[0].mxu0
        %v4259 = vpop.f32.mrb[0].mxu0
        %v4260 = vadd.f32 %v4061, %v4259
        %v4261 = vpop.f32.mrb[0].mxu0
        %4262 = vmatprep.mubr.bf16.mxu0 0
        %4263 = vmatmul.mubr.bf16.gmra.mrb[0].mxu0 %v4113
        %v4264 = vpop.f32.mrb[0].mxu0
        %v4265 = vadd.f32 %v4061, %v4264
        %v4266 = vpop.f32.mrb[0].mxu0
        %v4267 = vpop.f32.mrb[0].mxu0
        %v4268 = vadd.f32 %v4061, %v4267
        %v4269 = vpop.f32.mrb[0].mxu0
        %4270 = vmatprep.mubr.bf16.mxu0 0
        %4271 = vmatmul.mubr.bf16.gmra.mrb[0].mxu0 %v4116
        %v4272 = vpop.f32.mrb[0].mxu0
        %v4273 = vadd.f32 %v4061, %v4272
        %v4274 = vpop.f32.mrb[0].mxu0
        %v4275 = vpop.f32.mrb[0].mxu0
        %v4276 = vadd.f32 %v4061, %v4275
        %v4277 = vpop.f32.mrb[0].mxu0
        %4278 = vdwg.mxu0
        %s4279 = sld [smem:[#allocation4]]
        %4280 = vxpose.xlu0.b32.start [1/16] %v4153, 128
        %4281 = vxpose.xlu0.b32.cont [2/16] %v4156, 128
        %4282 = vxpose.xlu0.b32.cont [3/16] %v4161, 128
        %4283 = vxpose.xlu0.b32.cont [4/16] %v4164, 128
        %4284 = vxpose.xlu0.b32.cont [5/16] %v4169, 128
        %4285 = vxpose.xlu0.b32.cont [6/16] %v4172, 128
        %4286 = vxpose.xlu0.b32.cont [7/16] %v4177, 128
        %4287 = vxpose.xlu0.b32.cont [8/16] %v4180, 128
        %4288 = vxpose.xlu0.b32.cont [9/16] %v4185, 128
        %4289 = vxpose.xlu0.b32.cont [10/16] %v4188, 128
        %4290 = vxpose.xlu0.b32.cont [11/16] %v4193, 128
        %4291 = vxpose.xlu0.b32.cont [12/16] %v4196, 128
        %4292 = vxpose.xlu0.b32.cont [13/16] %v4201, 128
        %4293 = vxpose.xlu0.b32.cont [14/16] %v4204, 128
        %4294 = vxpose.xlu0.b32.cont [15/16] %v4209, 128
        %4295 = vxpose.xlu0.b32.end [16/16] %v4212, 128
        %v4296 = vpop.trf.xlu0
        %v4297 = vpop.trf.xlu0
        %v4298 = vpop.trf.xlu0
        %v4299 = vpop.trf.xlu0
        %v4300 = vpop.trf.xlu0
        %v4301 = vpop.trf.xlu0
        %v4302 = vpop.trf.xlu0
        %v4303 = vpop.trf.xlu0
        %v4304 = vpop.trf.xlu0
        %v4305 = vpop.trf.xlu0
        %v4306 = vpop.trf.xlu0
        %v4307 = vpop.trf.xlu0
        %v4308 = vpop.trf.xlu0
        %v4309 = vpop.trf.xlu0
        %v4310 = vpop.trf.xlu0
        %v4311 = vpop.trf.xlu0
        %4312 = vxpose.xlu0.b32.start [1/16] %v4217, 128
        %4313 = vxpose.xlu0.b32.cont [2/16] %v4220, 128
        %4314 = vxpose.xlu0.b32.cont [3/16] %v4225, 128
        %4315 = vxpose.xlu0.b32.cont [4/16] %v4228, 128
        %4316 = vxpose.xlu0.b32.cont [5/16] %v4233, 128
        %4317 = vxpose.xlu0.b32.cont [6/16] %v4236, 128
        %4318 = vxpose.xlu0.b32.cont [7/16] %v4241, 128
        %4319 = vxpose.xlu0.b32.cont [8/16] %v4244, 128
        %4320 = vxpose.xlu0.b32.cont [9/16] %v4249, 128
        %4321 = vxpose.xlu0.b32.cont [10/16] %v4252, 128
        %4322 = vxpose.xlu0.b32.cont [11/16] %v4257, 128
        %4323 = vxpose.xlu0.b32.cont [12/16] %v4260, 128
        %4324 = vxpose.xlu0.b32.cont [13/16] %v4265, 128
        %4325 = vxpose.xlu0.b32.cont [14/16] %v4268, 128
        %4326 = vxpose.xlu0.b32.cont [15/16] %v4273, 128
        %4327 = vxpose.xlu0.b32.end [16/16] %v4276, 128
        %v4328 = vpop.trf.xlu0
        %v4329 = vpop.trf.xlu0
        %v4330 = vpop.trf.xlu0
        %v4331 = vpop.trf.xlu0
        %v4332 = vpop.trf.xlu0
        %v4333 = vpop.trf.xlu0
        %v4334 = vpop.trf.xlu0
        %v4335 = vpop.trf.xlu0
        %v4336 = vpop.trf.xlu0
        %v4337 = vpop.trf.xlu0
        %v4338 = vpop.trf.xlu0
        %v4339 = vpop.trf.xlu0
        %v4340 = vpop.trf.xlu0
        %v4341 = vpop.trf.xlu0
        %v4342 = vpop.trf.xlu0
        %v4343 = vpop.trf.xlu0
        %v4344 = vstv %s4279
        %v4345 = vmul.f32 %v4344, %v4296
        %v4346 = vmul.f32 %v4344, %v4328
        %v4347 = vmul.f32 %v4344, %v4297
        %v4348 = vmul.f32 %v4344, %v4329
        %v4349 = vmul.f32 %v4344, %v4298
        %v4350 = vmul.f32 %v4344, %v4330
        %v4351 = vmul.f32 %v4344, %v4299
        %v4352 = vmul.f32 %v4344, %v4331
        %v4353 = vadd.f32 %v4345, %v2904
        %v4354 = vadd.f32 %v4346, %v2905
        %v4355 = vadd.f32 %v4347, %v2906
        %v4356 = vadd.f32 %v4348, %v2907
        %v4357 = vadd.f32 %v4349, %v2908
        %v4358 = vadd.f32 %v4350, %v2909
        %v4359 = vadd.f32 %v4351, %v2910
        %v4360 = vadd.f32 %v4352, %v2911
        %4361 = vst [vmem:[%s338] sm:$0xff] %v4353
        %4362 = vst [vmem:[%s338 + $0x8] sm:$0xff] %v4354
        %4363 = vst [vmem:[%s338 + $0x10] sm:$0xff] %v4355
        %4364 = vst [vmem:[%s338 + $0x18] sm:$0xff] %v4356
        %4365 = vst [vmem:[%s338 + $0x20] sm:$0xff] %v4357
        %4366 = vst [vmem:[%s338 + $0x28] sm:$0xff] %v4358
        %4367 = vst [vmem:[%s338 + $0x30] sm:$0xff] %v4359
        %4368 = vst [vmem:[%s338 + $0x38] sm:$0xff] %v4360
        %s4369 = sand.u32 %s221, 1
        %s4370 = scalar_lea.sflag [#allocation7], %s4369
        %s4371 = sand.u32 %s221, 1
        %s4372 = smul.addr %s4371, 64
        %s4373 = scalar_lea.vmem [#allocation8], %s4372
        // Predicated region
        $region61: #{tpu_custom_call.1} parent=51 // pred_check
          %p4374 = pneg %p231
        $region62: #{tpu_custom_call.1} parent=51 // pred_check_branch
          %4376 = sbr.rel (%p4374) target = $region64
        $region63: #{tpu_custom_call.1} parent=51 // pred_region
          %s4377 = smul.u32 2, %s31
          %s4379 = ssub.s32 1024, 1024
          %4380 = vsyncadd %s4370, %s4379
          %s4381 = smul.addr %s30, 8
          %s4382 = sadd.s32 %s4377, %s4381
          %s4383 = smul.addr %s4382, 128
          %s4384 = scalar_lea.hbm %s8, %s4383
          %s4385 = sshll.u32 %s4373, 4
          %s4386 = int_to_ptr.vmem [resolvable:$true] %s4385
          %4391 = dma.vmem_to_hbm [thread:$0]  %s4386, 1024, %s4384, %s4370, 256, 256, 16
        $region64: #{tpu_custom_call.1} parent=51 // pred_fallthru
          _
      $region52: #{tpu_custom_call.1} parent=5 // pred_fallthru
        _
      %p4392 = scmp.le.s32.totalorder 2, %s21
      // Predicated region
      $region65: #{tpu_custom_call.1} parent=5 // pred_check
        %p4393 = pneg %p4392
      $region66: #{tpu_custom_call.1} parent=5 // pred_check_branch
        %4395 = sbr.rel (%p4393) target = $region68
      $region67: #{tpu_custom_call.1} parent=5 // pred_region
        %s4396 = ssub.s32 %s21, 2
        // Predicated region
        $region69: #{tpu_custom_call.1} parent=67 // pred_check
          %p4397 = pneg %p237
        $region70: #{tpu_custom_call.1} parent=67 // pred_check_branch
          %4399 = sbr.rel (%p4397) target = $region72
        $region71: #{tpu_custom_call.1} parent=67 // pred_region
          %s4400 = sand.u32 %s222, 1
          %s4401 = scalar_lea.sflag [#allocation7], %s4400
          %s4402 = sand.u32 %s222, 1
          %s4403 = smul.addr %s4402, 64
          %s4404 = scalar_lea.vmem [#allocation8], %s4403
          %4405 = dma.done %s4401, 1024
        $region72: #{tpu_custom_call.1} parent=67 // pred_fallthru
          _
      $region68: #{tpu_custom_call.1} parent=5 // pred_fallthru
        _
    $region6: #{tpu_custom_call.1} parent=1 // loop_footer
      %s25 = sadd.s32 1, %s21
    $region7: #{tpu_custom_call.1} parent=1 // loop_footer_branch
      %20 = sbr.rel target = $region3
    $region8: #{tpu_custom_call.1} parent=1 // loop_exit
      _
    %4406 = vsyncpa [#allocation6], 1
    %s4407 = scalar_lea.sflag [#allocation6], 1
    %4408 = vsyncpa %s4407, 1
    %4409 = vsyncpa [#allocation7], 1
    %s4410 = scalar_lea.sflag [#allocation7], 1
    %4411 = vsyncpa %s4410, 1

</llo_original>
